<compile_context>
chip_gen: v7x
topology: tpu7x:2x2x1
jax: 0.10.0
libtpu: 0.0.40
codegen_flags: <defaults>
</compile_context>

<pallas_src>
import functools

import jax
import jax.numpy as jnp
from jax.experimental import pallas as pl
from jax.experimental.pallas import tpu as pltpu

BATCH_NORM_EPSILON = 1e-5
LANE = 128
VMEM_LIMIT = 32 * 1024 * 1024


def _round_up(x, m):
    return (x + m - 1) // m * m


# ----------------------------------------------------------------------------
# Kernel 1: tiled matmul  out = [relu]( x @ w + shift [+ residual] )
#   x: (M, K) bf16, w: (K, N) bf16 (BN scale pre-folded), shift: (1, N) f32
#   grid = (M/TM, N/TN, K/TK).  If K fits one tile: direct dot (no scratch).
# ----------------------------------------------------------------------------
def _make_mm_kernel(has_res, relu, single_k):
    def kernel(*refs):
        if single_k:
            if has_res:
                x_ref, w_ref, b_ref, r_ref, o_ref = refs
            else:
                x_ref, w_ref, b_ref, o_ref = refs
                r_ref = None
            y = jnp.dot(x_ref[...], w_ref[...],
                        preferred_element_type=jnp.float32) + b_ref[...]
            if has_res:
                y = y + r_ref[...].astype(jnp.float32)
            if relu:
                y = jnp.maximum(y, 0.0)
            o_ref[...] = y.astype(o_ref.dtype)
            return

        if has_res:
            x_ref, w_ref, b_ref, r_ref, o_ref, acc_ref = refs
        else:
            x_ref, w_ref, b_ref, o_ref, acc_ref = refs
            r_ref = None

        @pl.when(pl.program_id(2) == 0)
        def _init():
            acc_ref[...] = jnp.zeros_like(acc_ref)

        acc_ref[...] += jnp.dot(x_ref[...], w_ref[...],
                                preferred_element_type=jnp.float32)

        @pl.when(pl.program_id(2) == pl.num_programs(2) - 1)
        def _finalize():
            y = acc_ref[...] + b_ref[...]
            if has_res:
                y = y + r_ref[...].astype(jnp.float32)
            if relu:
                y = jnp.maximum(y, 0.0)
            o_ref[...] = y.astype(o_ref.dtype)

    return kernel


def fused_matmul(x2d, w, shift, residual=None, relu=True, out_dtype=jnp.bfloat16):
    """x2d: (M, K) bf16; w: (K, N) bf16; shift: (N,) f32; residual: (M, N) bf16 or None."""
    M, K = x2d.shape
    Kw, N = w.shape
    assert Kw == K and K % LANE == 0 and N % LANE == 0

    # M tiling: big tiles when M is large (pad M up), single 8-aligned tile otherwise.
    if M >= 512:
        TM = 512
    elif M >= 256:
        TM = 256
    else:
        TM = _round_up(M, 8)
    Mp = _round_up(M, TM)
    if Mp != M:
        x2d = jnp.pad(x2d, ((0, Mp - M), (0, 0)))
        if residual is not None:
            residual = jnp.pad(residual, ((0, Mp - M), (0, 0)))

    TN = 256 if N % 256 == 0 else 128
    if K % 512 == 0:
        TK = 512
    elif K % 256 == 0:
        TK = 256
    else:
        TK = 128

    grid_k = K // TK
    single_k = grid_k == 1
    grid = (Mp // TM, N // TN, grid_k)
    has_res = residual is not None

    in_specs = [
        pl.BlockSpec((TM, TK), lambda i, j, k: (i, k)),
        pl.BlockSpec((TK, TN), lambda i, j, k: (k, j)),
        pl.BlockSpec((1, TN), lambda i, j, k: (0, j)),
    ]
    args = [x2d, w, shift.reshape(1, N)]
    if has_res:
        in_specs.append(pl.BlockSpec((TM, TN), lambda i, j, k: (i, j)))
        args.append(residual)

    scratch = [] if single_k else [pltpu.VMEM((TM, TN), jnp.float32)]

    out = pl.pallas_call(
        _make_mm_kernel(has_res, relu, single_k),
        out_shape=jax.ShapeDtypeStruct((Mp, N), out_dtype),
        grid_spec=pltpu.PrefetchScalarGridSpec(
            num_scalar_prefetch=0,
            grid=grid,
            in_specs=in_specs,
            out_specs=pl.BlockSpec((TM, TN), lambda i, j, k: (i, j)),
            scratch_shapes=scratch,
        ),
        compiler_params=pltpu.CompilerParams(
            dimension_semantics=("parallel", "parallel", "arbitrary"),
            vmem_limit_bytes=VMEM_LIMIT,
        ),
    )(*args)
    if Mp != M:
        out = out[:M]
    return out


# ----------------------------------------------------------------------------
# Kernel 2: 3x3 conv (pad=1, stride s) + BN shift + ReLU, no im2col.
#   Input is phase-decomposed in JAX (one cheap pass):
#     phases[n, p, q, i, j, c] = xpad[n, s*i + p, s*j + q, c]   (flattened to 3-D below)
#   Output position (i, j), tap (dy, dx) reads phase(dy%s, dx%s) at flat row
#   (i*Wq + j) + ((dy//s)*Wq + dx//s)  -- every tap is a contiguous 2-D slab shifted by a
#   static offset, so the kernel is 9 accumulated 2-D matmuls and one full-tile store.
#   The flat output has (Wq-Wo) junk columns per row, dropped in the wrapper.
# ----------------------------------------------------------------------------
def _make_conv3x3_kernel(s, wq, L, relu):
    def kernel(x_ref, w_ref, b_ref, o_ref):
        acc = jnp.zeros((L, o_ref.shape[-1]), jnp.float32)
        for dy in range(3):
            for dx in range(3):
                pq = (dy % s) * s + (dx % s)
                start = (dy // s) * wq + (dx // s)
                slab = x_ref[pq, start:start + L, :]          # (L, Cin) bf16
                acc = acc + jnp.dot(slab, w_ref[dy * 3 + dx],
                                    preferred_element_type=jnp.float32)
        y = acc + b_ref[...]
        if relu:
            y = jnp.maximum(y, 0.0)
        o_ref[0] = y.astype(o_ref.dtype)                      # full-tile (unmasked) store
    return kernel


def conv3x3_bn_relu(x, w9, shift, stride):
    """x: (N,H,W,Cin) bf16; w9: (9, Cin, Cout) bf16 (tap order dy*3+dx, BN scale folded);
    shift: (Cout,) f32.  Returns (N, Ho, Wo, Cout) bf16."""
    n, hh, ww, cin = x.shape
    s = stride
    assert s in (1, 2)
    ho = (hh - 1) // s + 1
    wo = (ww - 1) // s + 1
    rmax = 2 // s
    hq, wq = ho + rmax, wo + rmax
    th, tw = s * hq, s * wq

    # zero-pad spatially (top/left = 1 as in PyTorch), then phase-decompose.
    xp = jnp.pad(x, ((0, 0), (1, max(th - 1 - hh, 0)), (1, max(tw - 1 - ww, 0)), (0, 0)))
    xp = xp[:, :th, :tw, :]
    ph = xp.reshape(n, hq, s, wq, s, cin).transpose(0, 2, 4, 1, 3, 5)   # (n,s,s,hq,wq,c)
    ph = ph.reshape(n * s * s, hq * wq, cin)
    ph = jnp.pad(ph, ((0, 0), (0, rmax), (0, 0)))   # slack rows so every tap slab is full-length
    rows = hq * wq + rmax

    cout = w9.shape[-1]
    assert cin % LANE == 0 and cout % LANE == 0
    L = ho * wq                       # full flattened output rows (junk cols dropped later)
    TC = 256 if cout % 256 == 0 else 128
    grid = (n, cout // TC)

    # TODO(synk): for very large spatial extents, add an output-row grid axis to bound the
    # accumulator; unnecessary for ResNet-scale feature maps (<= ~2 MB here).
    out = pl.pallas_call(
        _make_conv3x3_kernel(s, wq, L, relu=True),
        out_shape=jax.ShapeDtypeStruct((n, L, cout), jnp.bfloat16),
        grid_spec=pltpu.PrefetchScalarGridSpec(
            num_scalar_prefetch=0,
            grid=grid,
            in_specs=[
                pl.BlockSpec((s * s, rows, cin), lambda b, j: (b, 0, 0)),
                pl.BlockSpec((9, cin, TC), lambda b, j: (0, 0, j)),
                pl.BlockSpec((1, TC), lambda b, j: (0, j)),
            ],
            out_specs=pl.BlockSpec((1, L, TC), lambda b, j: (b, 0, j)),
        ),
        compiler_params=pltpu.CompilerParams(
            dimension_semantics=("parallel", "parallel"),
            vmem_limit_bytes=VMEM_LIMIT,
        ),
    )(ph, w9, shift.reshape(1, cout))

    # drop the (wq - wo) junk columns per output row
    out = out.reshape(n, ho, wq, cout)[:, :, :wo, :]
    return out


# ----------------------------------------------------------------------------
# Parameter initialization (deterministic, synthetic; BN folded, channels padded, bf16)
# ----------------------------------------------------------------------------
def _init_bn_folded(key, c):
    k1, k2, k3, k4 = jax.random.split(key, 4)
    gamma = 1.0 + 0.1 * jax.random.normal(k1, (c,), jnp.float32)
    beta = 0.1 * jax.random.normal(k2, (c,), jnp.float32)
    mean = 0.1 * jax.random.normal(k3, (c,), jnp.float32)
    var = jax.random.uniform(k4, (c,), jnp.float32, minval=0.5, maxval=1.5)
    scale = gamma / jnp.sqrt(var + BATCH_NORM_EPSILON)
    shift = beta - mean * scale
    return scale, shift


def _make_1x1(kw, kb, c_in, c_out):
    w = jax.random.normal(kw, (c_in, c_out), jnp.float32) / jnp.sqrt(jnp.float32(c_in))
    scale, shift = _init_bn_folded(kb, c_out)
    w = w * scale[None, :]
    ci_p, co_p = _round_up(c_in, LANE), _round_up(c_out, LANE)
    w = jnp.pad(w, ((0, ci_p - c_in), (0, co_p - c_out))).astype(jnp.bfloat16)
    shift = jnp.pad(shift, (0, co_p - c_out))
    return w, shift


def _make_3x3(kw, kb, c_in, c_out):
    w = jax.random.normal(kw, (3, 3, c_in, c_out), jnp.float32) / jnp.sqrt(jnp.float32(9 * c_in))
    scale, shift = _init_bn_folded(kb, c_out)
    w = w * scale[None, None, None, :]
    ci_p, co_p = _round_up(c_in, LANE), _round_up(c_out, LANE)
    w = jnp.pad(w, ((0, 0), (0, 0), (0, ci_p - c_in), (0, co_p - c_out)))
    w = w.reshape(9, ci_p, co_p).astype(jnp.bfloat16)
    shift = jnp.pad(shift, (0, co_p - c_out))
    return w, shift


def init_bottleneck_params(key, in_c, out_c, use_projection):
    keys = jax.random.split(key, 8)
    p = {}
    if use_projection:
        p['proj_w'], p['proj_b'] = _make_1x1(keys[0], keys[1], in_c, out_c * 4)
    p['w1'], p['b1'] = _make_1x1(keys[2], keys[3], in_c, out_c)
    p['w2'], p['b2'] = _make_3x3(keys[4], keys[5], out_c, out_c)
    p['w3'], p['b3'] = _make_1x1(keys[6], keys[7], out_c, out_c * 4)
    return p


def init_blocks_params(key, num_blocks, in_channels, out_channels):
    keys = jax.random.split(key, num_blocks)
    params = [init_bottleneck_params(keys[0], in_channels, out_channels, True)]
    for i in range(1, num_blocks):
        params.append(init_bottleneck_params(keys[i], out_channels * 4, out_channels, False))
    return params


# ----------------------------------------------------------------------------
# Forward pass (BottleneckBlock / Blocks)
# ----------------------------------------------------------------------------
def bottleneck_block(x, p, stride, use_projection):
    """x: (N, H, W, Cin_padded) bf16."""
    n, h, w_, cin = x.shape
    if use_projection:
        xs = x[:, ::stride, ::stride, :] if stride > 1 else x
        ns, hs, ws, _ = xs.shape
        shortcut2d = fused_matmul(xs.reshape(ns * hs * ws, cin),
                                  p['proj_w'], p['proj_b'], relu=False)
    else:
        shortcut2d = x.reshape(n * h * w_, cin)

    # 1x1 conv + BN + ReLU
    h1 = fused_matmul(x.reshape(n * h * w_, cin), p['w1'], p['b1'], relu=True)
    h1 = h1.reshape(n, h, w_, -1)
    # 3x3 conv (stride) + BN + ReLU, taps accumulated in-kernel
    h2 = conv3x3_bn_relu(h1, p['w2'], p['b2'], stride)
    no, ho, wo, cm = h2.shape
    # 1x1 conv + BN + residual add + final ReLU (fused epilogue)
    out2d = fused_matmul(h2.reshape(no * ho * wo, cm), p['w3'], p['b3'],
                         residual=shortcut2d, relu=True)
    return out2d.reshape(no, ho, wo, -1)


@functools.partial(jax.jit, static_argnums=(2, 3))
def blocks_forward(x_nchw, params, stride, out_channels):
    """Blocks.forward.  Input/output NCHW f32 (PyTorch convention)."""
    x = jnp.transpose(x_nchw, (0, 2, 3, 1))                     # -> NHWC
    cin = x.shape[-1]
    cin_p = _round_up(cin, LANE)
    x = jnp.pad(x, ((0, 0), (0, 0), (0, 0), (0, cin_p - cin))).astype(jnp.bfloat16)

    x = bottleneck_block(x, params[0], stride, use_projection=True)
    for p in params[1:]:
        x = bottleneck_block(x, p, 1, use_projection=False)

    channels_out = out_channels * 4
    x = x[..., :channels_out].astype(jnp.float32)
    return jnp.transpose(x, (0, 3, 1, 2))                        # -> NCHW


# ----------------------------------------------------------------------------
# Pure-JAX reference (same folded-BN bf16 weights) for a correctness cross-check
# ----------------------------------------------------------------------------
def reference_forward(x_nchw, params, stride, out_channels):
    x = jnp.transpose(x_nchw, (0, 2, 3, 1))
    cin = x.shape[-1]
    cin_p = _round_up(cin, LANE)
    x = jnp.pad(x, ((0, 0), (0, 0), (0, 0), (0, cin_p - cin)))
    x = x.astype(jnp.bfloat16).astype(jnp.float32)   # match kernel input quantization

    def conv1x1(h, w, b, s=1):
        w4 = w.astype(jnp.float32)[None, None]                  # (1,1,Cin,Cout)
        y = jax.lax.conv_general_dilated(h, w4, (s, s), 'VALID',
                                         dimension_numbers=('NHWC', 'HWIO', 'NHWC'))
        return y + b

    def conv3x3(h, w9, b, s):
        w4 = w9.astype(jnp.float32).reshape(3, 3, w9.shape[1], w9.shape[2])
        y = jax.lax.conv_general_dilated(h, w4, (s, s), ((1, 1), (1, 1)),
                                         dimension_numbers=('NHWC', 'HWIO', 'NHWC'))
        return y + b

    def block(h, p, s, use_proj):
        sc = conv1x1(h, p['proj_w'], p['proj_b'], s) if use_proj else h
        y = jax.nn.relu(conv1x1(h, p['w1'], p['b1']))
        y = jax.nn.relu(conv3x3(y, p['w2'], p['b2'], s))
        y = conv1x1(y, p['w3'], p['b3'])
        return jax.nn.relu(sc + y)

    x = block(x, params[0], stride, True)
    for p in params[1:]:
        x = block(x, p, 1, False)
    x = x[..., :out_channels * 4]
    return jnp.transpose(x, (0, 3, 1, 2))


# ----------------------------------------------------------------------------
if __name__ == "__main__":
    key = jax.random.PRNGKey(0)
    k_x, k_p = jax.random.split(key)

    # Blocks(num_blocks=2, in_channels=16, out_channels=8, stride=2) at small shapes
    num_blocks, in_channels, out_channels, stride = 2, 16, 8, 2
    batch, spatial = 2, 8

    x = jax.random.normal(k_x, (batch, in_channels, spatial, spatial), jnp.float32)
    params = init_blocks_params(k_p, num_blocks, in_channels, out_channels)

    out = jax.block_until_ready(blocks_forward(x, params, stride, out_channels))

    expected_shape = (batch, out_channels * 4, spatial // stride, spatial // stride)
    assert out.shape == expected_shape, (out.shape, expected_shape)
    assert bool(jnp.all(jnp.isfinite(out)))
    assert bool(jnp.all(out >= 0.0))  # final op is ReLU

    ref = jax.block_until_ready(reference_forward(x, params, stride, out_channels))
    rel_err = float(jnp.max(jnp.abs(out - ref)) / (jnp.max(jnp.abs(ref)) + 1e-6))
    assert rel_err < 0.1, f"relative error too large: {rel_err}"

    print("KERNEL_OK")
</pallas_src>

<mosaic_0001>
module attributes {stable_mosaic.version = 11 : i64} {
  func.func @kernel(%arg0: i32, %arg1: i32, %arg2: i32, %arg3: memref<32x128xbf16, #tpu.memory_space<vmem>>, %arg4: memref<128x128xbf16, #tpu.memory_space<vmem>>, %arg5: memref<1x128xf32, #tpu.memory_space<vmem>>, %arg6: memref<32x128xbf16, #tpu.memory_space<vmem>>) attributes {dimension_semantics = [#tpu.dimension_semantics<parallel>, #tpu.dimension_semantics<parallel>, #tpu.dimension_semantics<arbitrary>], iteration_bounds = array<i64: 1, 1, 1>, scalar_prefetch = 0 : i64, scratch_operands = 0 : i64, tpu.core_type = #tpu.core_type<tc>, window_params = [{transform_indices = @transform_0, window_bounds = array<i64: 32, 128>}, {transform_indices = @transform_1, window_bounds = array<i64: 128, 128>}, {transform_indices = @transform_2, window_bounds = array<i64: 1, 128>}, {transform_indices = @transform_3, window_bounds = array<i64: 32, 128>}]} {
    %c0 = arith.constant 0 : index
    %c0_0 = arith.constant 0 : index
    %0 = vector.load %arg3[%c0, %c0_0] : memref<32x128xbf16, #tpu.memory_space<vmem>>, vector<32x128xbf16>
    %c0_1 = arith.constant 0 : index
    %c0_2 = arith.constant 0 : index
    %1 = vector.load %arg4[%c0_1, %c0_2] : memref<128x128xbf16, #tpu.memory_space<vmem>>, vector<128x128xbf16>
    %cst = arith.constant dense<0.000000e+00> : vector<32x128xf32>
    %2 = tpu.matmul %0, %1, %cst {dimension_numbers = #tpu.dot_dimension_numbers<[1], [0], [0], [1], [0, 0, 1, 1], [], []>} : vector<32x128xbf16>, vector<128x128xbf16>, vector<32x128xf32> -> vector<32x128xf32>
    %c0_3 = arith.constant 0 : index
    %c0_4 = arith.constant 0 : index
    %3 = vector.load %arg5[%c0_3, %c0_4] : memref<1x128xf32, #tpu.memory_space<vmem>>, vector<1x128xf32>
    %4 = vector.broadcast %3 : vector<1x128xf32> to vector<32x128xf32>
    %5 = arith.addf %2, %4 : vector<32x128xf32>
    %6 = arith.truncf %5 : vector<32x128xf32> to vector<32x128xbf16>
    %c0_5 = arith.constant 0 : index
    %c0_6 = arith.constant 0 : index
    %7 = vector.load %arg6[%c0_5, %c0_6] : memref<32x128xbf16, #tpu.memory_space<vmem>>, vector<32x128xbf16>
    tpu.vector_store %arg6[%c0_5, %c0_6], %6 {strides = array<i32>} : memref<32x128xbf16, #tpu.memory_space<vmem>>, vector<32x128xbf16>,
    return
  }
  func.func @transform_0(%arg0: i32, %arg1: i32, %arg2: i32) -> (i32, i32) {
    %c0_i32 = arith.constant 0 : i32
    return %arg0, %arg2 : i32, i32
  }
  func.func @transform_1(%arg0: i32, %arg1: i32, %arg2: i32) -> (i32, i32) {
    %c0_i32 = arith.constant 0 : i32
    return %arg2, %arg1 : i32, i32
  }
  func.func @transform_2(%arg0: i32, %arg1: i32, %arg2: i32) -> (i32, i32) {
    %c0_i32 = arith.constant 0 : i32
    %c0_i32_0 = arith.constant 0 : i32
    return %c0_i32, %arg1 : i32, i32
  }
  func.func @transform_3(%arg0: i32, %arg1: i32, %arg2: i32) -> (i32, i32) {
    %c0_i32 = arith.constant 0 : i32
    return %arg0, %arg1 : i32, i32
  }
}

module attributes {stable_mosaic.version = 11 : i64} {
  func.func @kernel(%arg0: i32, %arg1: i32, %arg2: i32, %arg3: memref<128x128xbf16, #tpu.memory_space<vmem>>, %arg4: memref<128x128xbf16, #tpu.memory_space<vmem>>, %arg5: memref<1x128xf32, #tpu.memory_space<vmem>>, %arg6: memref<128x128xbf16, #tpu.memory_space<vmem>>) attributes {dimension_semantics = [#tpu.dimension_semantics<parallel>, #tpu.dimension_semantics<parallel>, #tpu.dimension_semantics<arbitrary>], iteration_bounds = array<i64: 1, 1, 1>, scalar_prefetch = 0 : i64, scratch_operands = 0 : i64, tpu.core_type = #tpu.core_type<tc>, window_params = [{transform_indices = @transform_0, window_bounds = array<i64: 128, 128>}, {transform_indices = @transform_1, window_bounds = array<i64: 128, 128>}, {transform_indices = @transform_2, window_bounds = array<i64: 1, 128>}, {transform_indices = @transform_3, window_bounds = array<i64: 128, 128>}]} {
    %c0 = arith.constant 0 : index
    %c0_0 = arith.constant 0 : index
    %0 = vector.load %arg3[%c0, %c0_0] : memref<128x128xbf16, #tpu.memory_space<vmem>>, vector<128x128xbf16>
    %c0_1 = arith.constant 0 : index
    %c0_2 = arith.constant 0 : index
    %1 = vector.load %arg4[%c0_1, %c0_2] : memref<128x128xbf16, #tpu.memory_space<vmem>>, vector<128x128xbf16>
    %cst = arith.constant dense<0.000000e+00> : vector<128x128xf32>
    %2 = tpu.matmul %0, %1, %cst {dimension_numbers = #tpu.dot_dimension_numbers<[1], [0], [0], [1], [0, 0, 1, 1], [], []>} : vector<128x128xbf16>, vector<128x128xbf16>, vector<128x128xf32> -> vector<128x128xf32>
    %c0_3 = arith.constant 0 : index
    %c0_4 = arith.constant 0 : index
    %3 = vector.load %arg5[%c0_3, %c0_4] : memref<1x128xf32, #tpu.memory_space<vmem>>, vector<1x128xf32>
    %4 = vector.broadcast %3 : vector<1x128xf32> to vector<128x128xf32>
    %5 = arith.addf %2, %4 : vector<128x128xf32>
    %cst_5 = arith.constant 0.000000e+00 : f32
    %6 = vector.broadcast %cst_5 : f32 to vector<128x128xf32>
    %7 = arith.maximumf %5, %6 : vector<128x128xf32>
    %8 = arith.truncf %7 : vector<128x128xf32> to vector<128x128xbf16>
    %c0_6 = arith.constant 0 : index
    %c0_7 = arith.constant 0 : index
    %9 = vector.load %arg6[%c0_6, %c0_7] : memref<128x128xbf16, #tpu.memory_space<vmem>>, vector<128x128xbf16>
    tpu.vector_store %arg6[%c0_6, %c0_7], %8 {strides = array<i32>} : memref<128x128xbf16, #tpu.memory_space<vmem>>, vector<128x128xbf16>,
    return
  }
  func.func @transform_0(%arg0: i32, %arg1: i32, %arg2: i32) -> (i32, i32) {
    %c0_i32 = arith.constant 0 : i32
    return %arg0, %arg2 : i32, i32
  }
  func.func @transform_1(%arg0: i32, %arg1: i32, %arg2: i32) -> (i32, i32) {
    %c0_i32 = arith.constant 0 : i32
    return %arg2, %arg1 : i32, i32
  }
  func.func @transform_2(%arg0: i32, %arg1: i32, %arg2: i32) -> (i32, i32) {
    %c0_i32 = arith.constant 0 : i32
    %c0_i32_0 = arith.constant 0 : i32
    return %c0_i32, %arg1 : i32, i32
  }
  func.func @transform_3(%arg0: i32, %arg1: i32, %arg2: i32) -> (i32, i32) {
    %c0_i32 = arith.constant 0 : i32
    return %arg0, %arg1 : i32, i32
  }
}

module attributes {stable_mosaic.version = 11 : i64} {
  func.func @kernel(%arg0: i32, %arg1: i32, %arg2: memref<4x26x128xbf16, #tpu.memory_space<vmem>>, %arg3: memref<9x128x128xbf16, #tpu.memory_space<vmem>>, %arg4: memref<1x128xf32, #tpu.memory_space<vmem>>, %arg5: memref<1x20x128xbf16, #tpu.memory_space<vmem>>) attributes {dimension_semantics = [#tpu.dimension_semantics<parallel>, #tpu.dimension_semantics<parallel>], iteration_bounds = array<i64: 2, 1>, scalar_prefetch = 0 : i64, scratch_operands = 0 : i64, tpu.core_type = #tpu.core_type<tc>, window_params = [{transform_indices = @transform_0, window_bounds = array<i64: 4, 26, 128>}, {transform_indices = @transform_1, window_bounds = array<i64: 9, 128, 128>}, {transform_indices = @transform_2, window_bounds = array<i64: 1, 128>}, {transform_indices = @transform_3, window_bounds = array<i64: 1, 20, 128>}]} {
    %cst = arith.constant 0.000000e+00 : f32
    %0 = vector.broadcast %cst : f32 to vector<20x128xf32>
    %c0 = arith.constant 0 : index
    %c0_0 = arith.constant 0 : index
    %c0_1 = arith.constant 0 : index
    %1 = vector.load %arg2[%c0, %c0_0, %c0_1] : memref<4x26x128xbf16, #tpu.memory_space<vmem>>, vector<1x20x128xbf16>
    %2 = vector.shape_cast %1 : vector<1x20x128xbf16> to vector<20x128xbf16>
    %c0_2 = arith.constant 0 : index
    %c0_3 = arith.constant 0 : index
    %c0_4 = arith.constant 0 : index
    %3 = vector.load %arg3[%c0_2, %c0_3, %c0_4] : memref<9x128x128xbf16, #tpu.memory_space<vmem>>, vector<1x128x128xbf16>
    %4 = vector.shape_cast %3 : vector<1x128x128xbf16> to vector<128x128xbf16>
    %cst_5 = arith.constant dense<0.000000e+00> : vector<20x128xf32>
    %5 = tpu.matmul %2, %4, %cst_5 {dimension_numbers = #tpu.dot_dimension_numbers<[1], [0], [0], [1], [0, 0, 1, 1], [], []>} : vector<20x128xbf16>, vector<128x128xbf16>, vector<20x128xf32> -> vector<20x128xf32>
    %6 = arith.addf %0, %5 : vector<20x128xf32>
    %c1 = arith.constant 1 : index
    %c0_6 = arith.constant 0 : index
    %c0_7 = arith.constant 0 : index
    %7 = vector.load %arg2[%c1, %c0_6, %c0_7] : memref<4x26x128xbf16, #tpu.memory_space<vmem>>, vector<1x20x128xbf16>
    %8 = vector.shape_cast %7 : vector<1x20x128xbf16> to vector<20x128xbf16>
    %c1_8 = arith.constant 1 : index
    %c0_9 = arith.constant 0 : index
    %c0_10 = arith.constant 0 : index
    %9 = vector.load %arg3[%c1_8, %c0_9, %c0_10] : memref<9x128x128xbf16, #tpu.memory_space<vmem>>, vector<1x128x128xbf16>
    %10 = vector.shape_cast %9 : vector<1x128x128xbf16> to vector<128x128xbf16>
    %cst_11 = arith.constant dense<0.000000e+00> : vector<20x128xf32>
    %11 = tpu.matmul %8, %10, %cst_11 {dimension_numbers = #tpu.dot_dimension_numbers<[1], [0], [0], [1], [0, 0, 1, 1], [], []>} : vector<20x128xbf16>, vector<128x128xbf16>, vector<20x128xf32> -> vector<20x128xf32>
    %12 = arith.addf %6, %11 : vector<20x128xf32>
    %c0_12 = arith.constant 0 : index
    %c1_13 = arith.constant 1 : index
    %c0_14 = arith.constant 0 : index
    %13 = vector.load %arg2[%c0_12, %c1_13, %c0_14] : memref<4x26x128xbf16, #tpu.memory_space<vmem>>, vector<1x20x128xbf16>
    %14 = vector.shape_cast %13 : vector<1x20x128xbf16> to vector<20x128xbf16>
    %c2 = arith.constant 2 : index
    %c0_15 = arith.constant 0 : index
    %c0_16 = arith.constant 0 : index
    %15 = vector.load %arg3[%c2, %c0_15, %c0_16] : memref<9x128x128xbf16, #tpu.memory_space<vmem>>, vector<1x128x128xbf16>
    %16 = vector.shape_cast %15 : vector<1x128x128xbf16> to vector<128x128xbf16>
    %cst_17 = arith.constant dense<0.000000e+00> : vector<20x128xf32>
    %17 = tpu.matmul %14, %16, %cst_17 {dimension_numbers = #tpu.dot_dimension_numbers<[1], [0], [0], [1], [0, 0, 1, 1], [], []>} : vector<20x128xbf16>, vector<128x128xbf16>, vector<20x128xf32> -> vector<20x128xf32>
    %18 = arith.addf %12, %17 : vector<20x128xf32>
    %c2_18 = arith.constant 2 : index
    %c0_19 = arith.constant 0 : index
    %c0_20 = arith.constant 0 : index
    %19 = vector.load %arg2[%c2_18, %c0_19, %c0_20] : memref<4x26x128xbf16, #tpu.memory_space<vmem>>, vector<1x20x128xbf16>
    %20 = vector.shape_cast %19 : vector<1x20x128xbf16> to vector<20x128xbf16>
    %c3 = arith.constant 3 : index
    %c0_21 = arith.constant 0 : index
    %c0_22 = arith.constant 0 : index
    %21 = vector.load %arg3[%c3, %c0_21, %c0_22] : memref<9x128x128xbf16, #tpu.memory_space<vmem>>, vector<1x128x128xbf16>
    %22 = vector.shape_cast %21 : vector<1x128x128xbf16> to vector<128x128xbf16>
    %cst_23 = arith.constant dense<0.000000e+00> : vector<20x128xf32>
    %23 = tpu.matmul %20, %22, %cst_23 {dimension_numbers = #tpu.dot_dimension_numbers<[1], [0], [0], [1], [0, 0, 1, 1], [], []>} : vector<20x128xbf16>, vector<128x128xbf16>, vector<20x128xf32> -> vector<20x128xf32>
    %24 = arith.addf %18, %23 : vector<20x128xf32>
    %c3_24 = arith.constant 3 : index
    %c0_25 = arith.constant 0 : index
    %c0_26 = arith.constant 0 : index
    %25 = vector.load %arg2[%c3_24, %c0_25, %c0_26] : memref<4x26x128xbf16, #tpu.memory_space<vmem>>, vector<1x20x128xbf16>
    %26 = vector.shape_cast %25 : vector<1x20x128xbf16> to vector<20x128xbf16>
    %c4 = arith.constant 4 : index
    %c0_27 = arith.constant 0 : index
    %c0_28 = arith.constant 0 : index
    %27 = vector.load %arg3[%c4, %c0_27, %c0_28] : memref<9x128x128xbf16, #tpu.memory_space<vmem>>, vector<1x128x128xbf16>
    %28 = vector.shape_cast %27 : vector<1x128x128xbf16> to vector<128x128xbf16>
    %cst_29 = arith.constant dense<0.000000e+00> : vector<20x128xf32>
    %29 = tpu.matmul %26, %28, %cst_29 {dimension_numbers = #tpu.dot_dimension_numbers<[1], [0], [0], [1], [0, 0, 1, 1], [], []>} : vector<20x128xbf16>, vector<128x128xbf16>, vector<20x128xf32> -> vector<20x128xf32>
    %30 = arith.addf %24, %29 : vector<20x128xf32>
    %c2_30 = arith.constant 2 : index
    %c1_31 = arith.constant 1 : index
    %c0_32 = arith.constant 0 : index
    %31 = vector.load %arg2[%c2_30, %c1_31, %c0_32] : memref<4x26x128xbf16, #tpu.memory_space<vmem>>, vector<1x20x128xbf16>
    %32 = vector.shape_cast %31 : vector<1x20x128xbf16> to vector<20x128xbf16>
    %c5 = arith.constant 5 : index
    %c0_33 = arith.constant 0 : index
    %c0_34 = arith.constant 0 : index
    %33 = vector.load %arg3[%c5, %c0_33, %c0_34] : memref<9x128x128xbf16, #tpu.memory_space<vmem>>, vector<1x128x128xbf16>
    %34 = vector.shape_cast %33 : vector<1x128x128xbf16> to vector<128x128xbf16>
    %cst_35 = arith.constant dense<0.000000e+00> : vector<20x128xf32>
    %35 = tpu.matmul %32, %34, %cst_35 {dimension_numbers = #tpu.dot_dimension_numbers<[1], [0], [0], [1], [0, 0, 1, 1], [], []>} : vector<20x128xbf16>, vector<128x128xbf16>, vector<20x128xf32> -> vector<20x128xf32>
    %36 = arith.addf %30, %35 : vector<20x128xf32>
    %c0_36 = arith.constant 0 : index
    %c5_37 = arith.constant 5 : index
    %c0_38 = arith.constant 0 : index
    %37 = vector.load %arg2[%c0_36, %c5_37, %c0_38] : memref<4x26x128xbf16, #tpu.memory_space<vmem>>, vector<1x20x128xbf16>
    %38 = vector.shape_cast %37 : vector<1x20x128xbf16> to vector<20x128xbf16>
    %c6 = arith.constant 6 : index
    %c0_39 = arith.constant 0 : index
    %c0_40 = arith.constant 0 : index
    %39 = vector.load %arg3[%c6, %c0_39, %c0_40] : memref<9x128x128xbf16, #tpu.memory_space<vmem>>, vector<1x128x128xbf16>
    %40 = vector.shape_cast %39 : vector<1x128x128xbf16> to vector<128x128xbf16>
    %cst_41 = arith.constant dense<0.000000e+00> : vector<20x128xf32>
    %41 = tpu.matmul %38, %40, %cst_41 {dimension_numbers = #tpu.dot_dimension_numbers<[1], [0], [0], [1], [0, 0, 1, 1], [], []>} : vector<20x128xbf16>, vector<128x128xbf16>, vector<20x128xf32> -> vector<20x128xf32>
    %42 = arith.addf %36, %41 : vector<20x128xf32>
    %c1_42 = arith.constant 1 : index
    %c5_43 = arith.constant 5 : index
    %c0_44 = arith.constant 0 : index
    %43 = vector.load %arg2[%c1_42, %c5_43, %c0_44] : memref<4x26x128xbf16, #tpu.memory_space<vmem>>, vector<1x20x128xbf16>
    %44 = vector.shape_cast %43 : vector<1x20x128xbf16> to vector<20x128xbf16>
    %c7 = arith.constant 7 : index
    %c0_45 = arith.constant 0 : index
    %c0_46 = arith.constant 0 : index
    %45 = vector.load %arg3[%c7, %c0_45, %c0_46] : memref<9x128x128xbf16, #tpu.memory_space<vmem>>, vector<1x128x128xbf16>
    %46 = vector.shape_cast %45 : vector<1x128x128xbf16> to vector<128x128xbf16>
    %cst_47 = arith.constant dense<0.000000e+00> : vector<20x128xf32>
    %47 = tpu.matmul %44, %46, %cst_47 {dimension_numbers = #tpu.dot_dimension_numbers<[1], [0], [0], [1], [0, 0, 1, 1], [], []>} : vector<20x128xbf16>, vector<128x128xbf16>, vector<20x128xf32> -> vector<20x128xf32>
    %48 = arith.addf %42, %47 : vector<20x128xf32>
    %c0_48 = arith.constant 0 : index
    %c6_49 = arith.constant 6 : index
    %c0_50 = arith.constant 0 : index
    %49 = vector.load %arg2[%c0_48, %c6_49, %c0_50] : memref<4x26x128xbf16, #tpu.memory_space<vmem>>, vector<1x20x128xbf16>
    %50 = vector.shape_cast %49 : vector<1x20x128xbf16> to vector<20x128xbf16>
    %c8 = arith.constant 8 : index
    %c0_51 = arith.constant 0 : index
    %c0_52 = arith.constant 0 : index
    %51 = vector.load %arg3[%c8, %c0_51, %c0_52] : memref<9x128x128xbf16, #tpu.memory_space<vmem>>, vector<1x128x128xbf16>
    %52 = vector.shape_cast %51 : vector<1x128x128xbf16> to vector<128x128xbf16>
    %cst_53 = arith.constant dense<0.000000e+00> : vector<20x128xf32>
    %53 = tpu.matmul %50, %52, %cst_53 {dimension_numbers = #tpu.dot_dimension_numbers<[1], [0], [0], [1], [0, 0, 1, 1], [], []>} : vector<20x128xbf16>, vector<128x128xbf16>, vector<20x128xf32> -> vector<20x128xf32>
    %54 = arith.addf %48, %53 : vector<20x128xf32>
    %c0_54 = arith.constant 0 : index
    %c0_55 = arith.constant 0 : index
    %55 = vector.load %arg4[%c0_54, %c0_55] : memref<1x128xf32, #tpu.memory_space<vmem>>, vector<1x128xf32>
    %56 = vector.broadcast %55 : vector<1x128xf32> to vector<20x128xf32>
    %57 = arith.addf %54, %56 : vector<20x128xf32>
    %cst_56 = arith.constant 0.000000e+00 : f32
    %58 = vector.broadcast %cst_56 : f32 to vector<20x128xf32>
    %59 = arith.maximumf %57, %58 : vector<20x128xf32>
    %60 = arith.truncf %59 : vector<20x128xf32> to vector<20x128xbf16>
    %c0_57 = arith.constant 0 : index
    %c0_58 = arith.constant 0 : index
    %c0_59 = arith.constant 0 : index
    %61 = vector.load %arg5[%c0_57, %c0_58, %c0_59] : memref<1x20x128xbf16, #tpu.memory_space<vmem>>, vector<1x20x128xbf16>
    %62 = vector.shape_cast %61 : vector<1x20x128xbf16> to vector<20x128xbf16>
    %63 = vector.shape_cast %60 : vector<20x128xbf16> to vector<1x20x128xbf16>
    tpu.vector_store %arg5[%c0_57, %c0_58, %c0_59], %63 {strides = array<i32>} : memref<1x20x128xbf16, #tpu.memory_space<vmem>>, vector<1x20x128xbf16>,
    return
  }
  func.func @transform_0(%arg0: i32, %arg1: i32) -> (i32, i32, i32) {
    %c0_i32 = arith.constant 0 : i32
    %c0_i32_0 = arith.constant 0 : i32
    %c0_i32_1 = arith.constant 0 : i32
    return %arg0, %c0_i32, %c0_i32_0 : i32, i32, i32
  }
  func.func @transform_1(%arg0: i32, %arg1: i32) -> (i32, i32, i32) {
    %c0_i32 = arith.constant 0 : i32
    %c0_i32_0 = arith.constant 0 : i32
    %c0_i32_1 = arith.constant 0 : i32
    return %c0_i32, %c0_i32_0, %arg1 : i32, i32, i32
  }
  func.func @transform_2(%arg0: i32, %arg1: i32) -> (i32, i32) {
    %c0_i32 = arith.constant 0 : i32
    %c0_i32_0 = arith.constant 0 : i32
    return %c0_i32, %arg1 : i32, i32
  }
  func.func @transform_3(%arg0: i32, %arg1: i32) -> (i32, i32, i32) {
    %c0_i32 = arith.constant 0 : i32
    %c0_i32_0 = arith.constant 0 : i32
    return %arg0, %c0_i32, %arg1 : i32, i32, i32
  }
}

module attributes {stable_mosaic.version = 11 : i64} {
  func.func @kernel(%arg0: i32, %arg1: i32, %arg2: i32, %arg3: memref<32x128xbf16, #tpu.memory_space<vmem>>, %arg4: memref<128x128xbf16, #tpu.memory_space<vmem>>, %arg5: memref<1x128xf32, #tpu.memory_space<vmem>>, %arg6: memref<32x128xbf16, #tpu.memory_space<vmem>>) attributes {dimension_semantics = [#tpu.dimension_semantics<parallel>, #tpu.dimension_semantics<parallel>, #tpu.dimension_semantics<arbitrary>], iteration_bounds = array<i64: 1, 1, 1>, scalar_prefetch = 0 : i64, scratch_operands = 0 : i64, tpu.core_type = #tpu.core_type<tc>, window_params = [{transform_indices = @transform_0, window_bounds = array<i64: 32, 128>}, {transform_indices = @transform_1, window_bounds = array<i64: 128, 128>}, {transform_indices = @transform_2, window_bounds = array<i64: 1, 128>}, {transform_indices = @transform_3, window_bounds = array<i64: 32, 128>}]} {
    %c0 = arith.constant 0 : index
    %c0_0 = arith.constant 0 : index
    %0 = vector.load %arg3[%c0, %c0_0] : memref<32x128xbf16, #tpu.memory_space<vmem>>, vector<32x128xbf16>
    %c0_1 = arith.constant 0 : index
    %c0_2 = arith.constant 0 : index
    %1 = vector.load %arg4[%c0_1, %c0_2] : memref<128x128xbf16, #tpu.memory_space<vmem>>, vector<128x128xbf16>
    %cst = arith.constant dense<0.000000e+00> : vector<32x128xf32>
    %2 = tpu.matmul %0, %1, %cst {dimension_numbers = #tpu.dot_dimension_numbers<[1], [0], [0], [1], [0, 0, 1, 1], [], []>} : vector<32x128xbf16>, vector<128x128xbf16>, vector<32x128xf32> -> vector<32x128xf32>
    %c0_3 = arith.constant 0 : index
    %c0_4 = arith.constant 0 : index
    %3 = vector.load %arg5[%c0_3, %c0_4] : memref<1x128xf32, #tpu.memory_space<vmem>>, vector<1x128xf32>
    %4 = vector.broadcast %3 : vector<1x128xf32> to vector<32x128xf32>
    %5 = arith.addf %2, %4 : vector<32x128xf32>
    %cst_5 = arith.constant 0.000000e+00 : f32
    %6 = vector.broadcast %cst_5 : f32 to vector<32x128xf32>
    %7 = arith.maximumf %5, %6 : vector<32x128xf32>
    %8 = arith.truncf %7 : vector<32x128xf32> to vector<32x128xbf16>
    %c0_6 = arith.constant 0 : index
    %c0_7 = arith.constant 0 : index
    %9 = vector.load %arg6[%c0_6, %c0_7] : memref<32x128xbf16, #tpu.memory_space<vmem>>, vector<32x128xbf16>
    tpu.vector_store %arg6[%c0_6, %c0_7], %8 {strides = array<i32>} : memref<32x128xbf16, #tpu.memory_space<vmem>>, vector<32x128xbf16>,
    return
  }
  func.func @transform_0(%arg0: i32, %arg1: i32, %arg2: i32) -> (i32, i32) {
    %c0_i32 = arith.constant 0 : i32
    return %arg0, %arg2 : i32, i32
  }
  func.func @transform_1(%arg0: i32, %arg1: i32, %arg2: i32) -> (i32, i32) {
    %c0_i32 = arith.constant 0 : i32
    return %arg2, %arg1 : i32, i32
  }
  func.func @transform_2(%arg0: i32, %arg1: i32, %arg2: i32) -> (i32, i32) {
    %c0_i32 = arith.constant 0 : i32
    %c0_i32_0 = arith.constant 0 : i32
    return %c0_i32, %arg1 : i32, i32
  }
  func.func @transform_3(%arg0: i32, %arg1: i32, %arg2: i32) -> (i32, i32) {
    %c0_i32 = arith.constant 0 : i32
    return %arg0, %arg1 : i32, i32
  }
}

module attributes {stable_mosaic.version = 11 : i64} {
  func.func @kernel(%arg0: i32, %arg1: i32, %arg2: memref<1x38x128xbf16, #tpu.memory_space<vmem>>, %arg3: memref<9x128x128xbf16, #tpu.memory_space<vmem>>, %arg4: memref<1x128xf32, #tpu.memory_space<vmem>>, %arg5: memref<1x24x128xbf16, #tpu.memory_space<vmem>>) attributes {dimension_semantics = [#tpu.dimension_semantics<parallel>, #tpu.dimension_semantics<parallel>], iteration_bounds = array<i64: 2, 1>, scalar_prefetch = 0 : i64, scratch_operands = 0 : i64, tpu.core_type = #tpu.core_type<tc>, window_params = [{transform_indices = @transform_0, window_bounds = array<i64: 1, 38, 128>}, {transform_indices = @transform_1, window_bounds = array<i64: 9, 128, 128>}, {transform_indices = @transform_2, window_bounds = array<i64: 1, 128>}, {transform_indices = @transform_3, window_bounds = array<i64: 1, 24, 128>}]} {
    %cst = arith.constant 0.000000e+00 : f32
    %0 = vector.broadcast %cst : f32 to vector<24x128xf32>
    %c0 = arith.constant 0 : index
    %c0_0 = arith.constant 0 : index
    %c0_1 = arith.constant 0 : index
    %1 = vector.load %arg2[%c0, %c0_0, %c0_1] : memref<1x38x128xbf16, #tpu.memory_space<vmem>>, vector<1x24x128xbf16>
    %2 = vector.shape_cast %1 : vector<1x24x128xbf16> to vector<24x128xbf16>
    %c0_2 = arith.constant 0 : index
    %c0_3 = arith.constant 0 : index
    %c0_4 = arith.constant 0 : index
    %3 = vector.load %arg3[%c0_2, %c0_3, %c0_4] : memref<9x128x128xbf16, #tpu.memory_space<vmem>>, vector<1x128x128xbf16>
    %4 = vector.shape_cast %3 : vector<1x128x128xbf16> to vector<128x128xbf16>
    %cst_5 = arith.constant dense<0.000000e+00> : vector<24x128xf32>
    %5 = tpu.matmul %2, %4, %cst_5 {dimension_numbers = #tpu.dot_dimension_numbers<[1], [0], [0], [1], [0, 0, 1, 1], [], []>} : vector<24x128xbf16>, vector<128x128xbf16>, vector<24x128xf32> -> vector<24x128xf32>
    %6 = arith.addf %0, %5 : vector<24x128xf32>
    %c0_6 = arith.constant 0 : index
    %c1 = arith.constant 1 : index
    %c0_7 = arith.constant 0 : index
    %7 = vector.load %arg2[%c0_6, %c1, %c0_7] : memref<1x38x128xbf16, #tpu.memory_space<vmem>>, vector<1x24x128xbf16>
    %8 = vector.shape_cast %7 : vector<1x24x128xbf16> to vector<24x128xbf16>
    %c1_8 = arith.constant 1 : index
    %c0_9 = arith.constant 0 : index
    %c0_10 = arith.constant 0 : index
    %9 = vector.load %arg3[%c1_8, %c0_9, %c0_10] : memref<9x128x128xbf16, #tpu.memory_space<vmem>>, vector<1x128x128xbf16>
    %10 = vector.shape_cast %9 : vector<1x128x128xbf16> to vector<128x128xbf16>
    %cst_11 = arith.constant dense<0.000000e+00> : vector<24x128xf32>
    %11 = tpu.matmul %8, %10, %cst_11 {dimension_numbers = #tpu.dot_dimension_numbers<[1], [0], [0], [1], [0, 0, 1, 1], [], []>} : vector<24x128xbf16>, vector<128x128xbf16>, vector<24x128xf32> -> vector<24x128xf32>
    %12 = arith.addf %6, %11 : vector<24x128xf32>
    %c0_12 = arith.constant 0 : index
    %c2 = arith.constant 2 : index
    %c0_13 = arith.constant 0 : index
    %13 = vector.load %arg2[%c0_12, %c2, %c0_13] : memref<1x38x128xbf16, #tpu.memory_space<vmem>>, vector<1x24x128xbf16>
    %14 = vector.shape_cast %13 : vector<1x24x128xbf16> to vector<24x128xbf16>
    %c2_14 = arith.constant 2 : index
    %c0_15 = arith.constant 0 : index
    %c0_16 = arith.constant 0 : index
    %15 = vector.load %arg3[%c2_14, %c0_15, %c0_16] : memref<9x128x128xbf16, #tpu.memory_space<vmem>>, vector<1x128x128xbf16>
    %16 = vector.shape_cast %15 : vector<1x128x128xbf16> to vector<128x128xbf16>
    %cst_17 = arith.constant dense<0.000000e+00> : vector<24x128xf32>
    %17 = tpu.matmul %14, %16, %cst_17 {dimension_numbers = #tpu.dot_dimension_numbers<[1], [0], [0], [1], [0, 0, 1, 1], [], []>} : vector<24x128xbf16>, vector<128x128xbf16>, vector<24x128xf32> -> vector<24x128xf32>
    %18 = arith.addf %12, %17 : vector<24x128xf32>
    %c0_18 = arith.constant 0 : index
    %c6 = arith.constant 6 : index
    %c0_19 = arith.constant 0 : index
    %19 = vector.load %arg2[%c0_18, %c6, %c0_19] : memref<1x38x128xbf16, #tpu.memory_space<vmem>>, vector<1x24x128xbf16>
    %20 = vector.shape_cast %19 : vector<1x24x128xbf16> to vector<24x128xbf16>
    %c3 = arith.constant 3 : index
    %c0_20 = arith.constant 0 : index
    %c0_21 = arith.constant 0 : index
    %21 = vector.load %arg3[%c3, %c0_20, %c0_21] : memref<9x128x128xbf16, #tpu.memory_space<vmem>>, vector<1x128x128xbf16>
    %22 = vector.shape_cast %21 : vector<1x128x128xbf16> to vector<128x128xbf16>
    %cst_22 = arith.constant dense<0.000000e+00> : vector<24x128xf32>
    %23 = tpu.matmul %20, %22, %cst_22 {dimension_numbers = #tpu.dot_dimension_numbers<[1], [0], [0], [1], [0, 0, 1, 1], [], []>} : vector<24x128xbf16>, vector<128x128xbf16>, vector<24x128xf32> -> vector<24x128xf32>
    %24 = arith.addf %18, %23 : vector<24x128xf32>
    %c0_23 = arith.constant 0 : index
    %c7 = arith.constant 7 : index
    %c0_24 = arith.constant 0 : index
    %25 = vector.load %arg2[%c0_23, %c7, %c0_24] : memref<1x38x128xbf16, #tpu.memory_space<vmem>>, vector<1x24x128xbf16>
    %26 = vector.shape_cast %25 : vector<1x24x128xbf16> to vector<24x128xbf16>
    %c4 = arith.constant 4 : index
    %c0_25 = arith.constant 0 : index
    %c0_26 = arith.constant 0 : index
    %27 = vector.load %arg3[%c4, %c0_25, %c0_26] : memref<9x128x128xbf16, #tpu.memory_space<vmem>>, vector<1x128x128xbf16>
    %28 = vector.shape_cast %27 : vector<1x128x128xbf16> to vector<128x128xbf16>
    %cst_27 = arith.constant dense<0.000000e+00> : vector<24x128xf32>
    %29 = tpu.matmul %26, %28, %cst_27 {dimension_numbers = #tpu.dot_dimension_numbers<[1], [0], [0], [1], [0, 0, 1, 1], [], []>} : vector<24x128xbf16>, vector<128x128xbf16>, vector<24x128xf32> -> vector<24x128xf32>
    %30 = arith.addf %24, %29 : vector<24x128xf32>
    %c0_28 = arith.constant 0 : index
    %c8 = arith.constant 8 : index
    %c0_29 = arith.constant 0 : index
    %31 = vector.load %arg2[%c0_28, %c8, %c0_29] : memref<1x38x128xbf16, #tpu.memory_space<vmem>>, vector<1x24x128xbf16>
    %32 = vector.shape_cast %31 : vector<1x24x128xbf16> to vector<24x128xbf16>
    %c5 = arith.constant 5 : index
    %c0_30 = arith.constant 0 : index
    %c0_31 = arith.constant 0 : index
    %33 = vector.load %arg3[%c5, %c0_30, %c0_31] : memref<9x128x128xbf16, #tpu.memory_space<vmem>>, vector<1x128x128xbf16>
    %34 = vector.shape_cast %33 : vector<1x128x128xbf16> to vector<128x128xbf16>
    %cst_32 = arith.constant dense<0.000000e+00> : vector<24x128xf32>
    %35 = tpu.matmul %32, %34, %cst_32 {dimension_numbers = #tpu.dot_dimension_numbers<[1], [0], [0], [1], [0, 0, 1, 1], [], []>} : vector<24x128xbf16>, vector<128x128xbf16>, vector<24x128xf32> -> vector<24x128xf32>
    %36 = arith.addf %30, %35 : vector<24x128xf32>
    %c0_33 = arith.constant 0 : index
    %c12 = arith.constant 12 : index
    %c0_34 = arith.constant 0 : index
    %37 = vector.load %arg2[%c0_33, %c12, %c0_34] : memref<1x38x128xbf16, #tpu.memory_space<vmem>>, vector<1x24x128xbf16>
    %38 = vector.shape_cast %37 : vector<1x24x128xbf16> to vector<24x128xbf16>
    %c6_35 = arith.constant 6 : index
    %c0_36 = arith.constant 0 : index
    %c0_37 = arith.constant 0 : index
    %39 = vector.load %arg3[%c6_35, %c0_36, %c0_37] : memref<9x128x128xbf16, #tpu.memory_space<vmem>>, vector<1x128x128xbf16>
    %40 = vector.shape_cast %39 : vector<1x128x128xbf16> to vector<128x128xbf16>
    %cst_38 = arith.constant dense<0.000000e+00> : vector<24x128xf32>
    %41 = tpu.matmul %38, %40, %cst_38 {dimension_numbers = #tpu.dot_dimension_numbers<[1], [0], [0], [1], [0, 0, 1, 1], [], []>} : vector<24x128xbf16>, vector<128x128xbf16>, vector<24x128xf32> -> vector<24x128xf32>
    %42 = arith.addf %36, %41 : vector<24x128xf32>
    %c0_39 = arith.constant 0 : index
    %c13 = arith.constant 13 : index
    %c0_40 = arith.constant 0 : index
    %43 = vector.load %arg2[%c0_39, %c13, %c0_40] : memref<1x38x128xbf16, #tpu.memory_space<vmem>>, vector<1x24x128xbf16>
    %44 = vector.shape_cast %43 : vector<1x24x128xbf16> to vector<24x128xbf16>
    %c7_41 = arith.constant 7 : index
    %c0_42 = arith.constant 0 : index
    %c0_43 = arith.constant 0 : index
    %45 = vector.load %arg3[%c7_41, %c0_42, %c0_43] : memref<9x128x128xbf16, #tpu.memory_space<vmem>>, vector<1x128x128xbf16>
    %46 = vector.shape_cast %45 : vector<1x128x128xbf16> to vector<128x128xbf16>
    %cst_44 = arith.constant dense<0.000000e+00> : vector<24x128xf32>
    %47 = tpu.matmul %44, %46, %cst_44 {dimension_numbers = #tpu.dot_dimension_numbers<[1], [0], [0], [1], [0, 0, 1, 1], [], []>} : vector<24x128xbf16>, vector<128x128xbf16>, vector<24x128xf32> -> vector<24x128xf32>
    %48 = arith.addf %42, %47 : vector<24x128xf32>
    %c0_45 = arith.constant 0 : index
    %c14 = arith.constant 14 : index
    %c0_46 = arith.constant 0 : index
    %49 = vector.load %arg2[%c0_45, %c14, %c0_46] : memref<1x38x128xbf16, #tpu.memory_space<vmem>>, vector<1x24x128xbf16>
    %50 = vector.shape_cast %49 : vector<1x24x128xbf16> to vector<24x128xbf16>
    %c8_47 = arith.constant 8 : index
    %c0_48 = arith.constant 0 : index
    %c0_49 = arith.constant 0 : index
    %51 = vector.load %arg3[%c8_47, %c0_48, %c0_49] : memref<9x128x128xbf16, #tpu.memory_space<vmem>>, vector<1x128x128xbf16>
    %52 = vector.shape_cast %51 : vector<1x128x128xbf16> to vector<128x128xbf16>
    %cst_50 = arith.constant dense<0.000000e+00> : vector<24x128xf32>
    %53 = tpu.matmul %50, %52, %cst_50 {dimension_numbers = #tpu.dot_dimension_numbers<[1], [0], [0], [1], [0, 0, 1, 1], [], []>} : vector<24x128xbf16>, vector<128x128xbf16>, vector<24x128xf32> -> vector<24x128xf32>
    %54 = arith.addf %48, %53 : vector<24x128xf32>
    %c0_51 = arith.constant 0 : index
    %c0_52 = arith.constant 0 : index
    %55 = vector.load %arg4[%c0_51, %c0_52] : memref<1x128xf32, #tpu.memory_space<vmem>>, vector<1x128xf32>
    %56 = vector.broadcast %55 : vector<1x128xf32> to vector<24x128xf32>
    %57 = arith.addf %54, %56 : vector<24x128xf32>
    %cst_53 = arith.constant 0.000000e+00 : f32
    %58 = vector.broadcast %cst_53 : f32 to vector<24x128xf32>
    %59 = arith.maximumf %57, %58 : vector<24x128xf32>
    %60 = arith.truncf %59 : vector<24x128xf32> to vector<24x128xbf16>
    %c0_54 = arith.constant 0 : index
    %c0_55 = arith.constant 0 : index
    %c0_56 = arith.constant 0 : index
    %61 = vector.load %arg5[%c0_54, %c0_55, %c0_56] : memref<1x24x128xbf16, #tpu.memory_space<vmem>>, vector<1x24x128xbf16>
    %62 = vector.shape_cast %61 : vector<1x24x128xbf16> to vector<24x128xbf16>
    %63 = vector.shape_cast %60 : vector<24x128xbf16> to vector<1x24x128xbf16>
    tpu.vector_store %arg5[%c0_54, %c0_55, %c0_56], %63 {strides = array<i32>} : memref<1x24x128xbf16, #tpu.memory_space<vmem>>, vector<1x24x128xbf16>,
    return
  }
  func.func @transform_0(%arg0: i32, %arg1: i32) -> (i32, i32, i32) {
    %c0_i32 = arith.constant 0 : i32
    %c0_i32_0 = arith.constant 0 : i32
    %c0_i32_1 = arith.constant 0 : i32
    return %arg0, %c0_i32, %c0_i32_0 : i32, i32, i32
  }
  func.func @transform_1(%arg0: i32, %arg1: i32) -> (i32, i32, i32) {
    %c0_i32 = arith.constant 0 : i32
    %c0_i32_0 = arith.constant 0 : i32
    %c0_i32_1 = arith.constant 0 : i32
    return %c0_i32, %c0_i32_0, %arg1 : i32, i32, i32
  }
  func.func @transform_2(%arg0: i32, %arg1: i32) -> (i32, i32) {
    %c0_i32 = arith.constant 0 : i32
    %c0_i32_0 = arith.constant 0 : i32
    return %c0_i32, %arg1 : i32, i32
  }
  func.func @transform_3(%arg0: i32, %arg1: i32) -> (i32, i32, i32) {
    %c0_i32 = arith.constant 0 : i32
    %c0_i32_0 = arith.constant 0 : i32
    return %arg0, %c0_i32, %arg1 : i32, i32, i32
  }
}

module attributes {stable_mosaic.version = 11 : i64} {
  func.func @kernel(%arg0: i32, %arg1: i32, %arg2: i32, %arg3: memref<32x128xbf16, #tpu.memory_space<vmem>>, %arg4: memref<128x128xbf16, #tpu.memory_space<vmem>>, %arg5: memref<1x128xf32, #tpu.memory_space<vmem>>, %arg6: memref<32x128xbf16, #tpu.memory_space<vmem>>, %arg7: memref<32x128xbf16, #tpu.memory_space<vmem>>) attributes {dimension_semantics = [#tpu.dimension_semantics<parallel>, #tpu.dimension_semantics<parallel>, #tpu.dimension_semantics<arbitrary>], iteration_bounds = array<i64: 1, 1, 1>, scalar_prefetch = 0 : i64, scratch_operands = 0 : i64, tpu.core_type = #tpu.core_type<tc>, window_params = [{transform_indices = @transform_0, window_bounds = array<i64: 32, 128>}, {transform_indices = @transform_1, window_bounds = array<i64: 128, 128>}, {transform_indices = @transform_2, window_bounds = array<i64: 1, 128>}, {transform_indices = @transform_3, window_bounds = array<i64: 32, 128>}, {transform_indices = @transform_4, window_bounds = array<i64: 32, 128>}]} {
    %c0 = arith.constant 0 : index
    %c0_0 = arith.constant 0 : index
    %0 = vector.load %arg3[%c0, %c0_0] : memref<32x128xbf16, #tpu.memory_space<vmem>>, vector<32x128xbf16>
    %c0_1 = arith.constant 0 : index
    %c0_2 = arith.constant 0 : index
    %1 = vector.load %arg4[%c0_1, %c0_2] : memref<128x128xbf16, #tpu.memory_space<vmem>>, vector<128x128xbf16>
    %cst = arith.constant dense<0.000000e+00> : vector<32x128xf32>
    %2 = tpu.matmul %0, %1, %cst {dimension_numbers = #tpu.dot_dimension_numbers<[1], [0], [0], [1], [0, 0, 1, 1], [], []>} : vector<32x128xbf16>, vector<128x128xbf16>, vector<32x128xf32> -> vector<32x128xf32>
    %c0_3 = arith.constant 0 : index
    %c0_4 = arith.constant 0 : index
    %3 = vector.load %arg5[%c0_3, %c0_4] : memref<1x128xf32, #tpu.memory_space<vmem>>, vector<1x128xf32>
    %4 = vector.broadcast %3 : vector<1x128xf32> to vector<32x128xf32>
    %5 = arith.addf %2, %4 : vector<32x128xf32>
    %c0_5 = arith.constant 0 : index
    %c0_6 = arith.constant 0 : index
    %6 = vector.load %arg6[%c0_5, %c0_6] : memref<32x128xbf16, #tpu.memory_space<vmem>>, vector<32x128xbf16>
    %7 = arith.extf %6 : vector<32x128xbf16> to vector<32x128xf32>
    %8 = arith.addf %5, %7 : vector<32x128xf32>
    %cst_7 = arith.constant 0.000000e+00 : f32
    %9 = vector.broadcast %cst_7 : f32 to vector<32x128xf32>
    %10 = arith.maximumf %8, %9 : vector<32x128xf32>
    %11 = arith.truncf %10 : vector<32x128xf32> to vector<32x128xbf16>
    %c0_8 = arith.constant 0 : index
    %c0_9 = arith.constant 0 : index
    %12 = vector.load %arg7[%c0_8, %c0_9] : memref<32x128xbf16, #tpu.memory_space<vmem>>, vector<32x128xbf16>
    tpu.vector_store %arg7[%c0_8, %c0_9], %11 {strides = array<i32>} : memref<32x128xbf16, #tpu.memory_space<vmem>>, vector<32x128xbf16>,
    return
  }
  func.func @transform_0(%arg0: i32, %arg1: i32, %arg2: i32) -> (i32, i32) {
    %c0_i32 = arith.constant 0 : i32
    return %arg0, %arg2 : i32, i32
  }
  func.func @transform_1(%arg0: i32, %arg1: i32, %arg2: i32) -> (i32, i32) {
    %c0_i32 = arith.constant 0 : i32
    return %arg2, %arg1 : i32, i32
  }
  func.func @transform_2(%arg0: i32, %arg1: i32, %arg2: i32) -> (i32, i32) {
    %c0_i32 = arith.constant 0 : i32
    %c0_i32_0 = arith.constant 0 : i32
    return %c0_i32, %arg1 : i32, i32
  }
  func.func @transform_3(%arg0: i32, %arg1: i32, %arg2: i32) -> (i32, i32) {
    %c0_i32 = arith.constant 0 : i32
    return %arg0, %arg1 : i32, i32
  }
  func.func @transform_4(%arg0: i32, %arg1: i32, %arg2: i32) -> (i32, i32) {
    %c0_i32 = arith.constant 0 : i32
    return %arg0, %arg1 : i32, i32
  }
}

</mosaic_0001>

<llo_original>
// kernel: blocks_forward.7
$region0: #{blocks_forward.7}
  #allocation0 [shape = 'u32[]', space=smem, size = 0x4, offset = 0x4, fixed_abs, tag = 'smem constant byte address 0x4 - core index']
  #allocation1 [shape = 'u32[144,128]{1,0:T(1,128)}', space=vmem, size = 0x12000, scoped, tag = 'internal scratch']
  %s0 = inlined_call_operand.vmem [shape: bf16[32,128], index: 0, kind: input, shape index: {}]
  %s1 = inlined_call_operand.vmem [shape: bf16[128,128], index: 1, kind: input, shape index: {}]
  %s2 = inlined_call_operand.vmem [shape: f32[1,128], index: 2, kind: input, shape index: {}]
  %s3 = inlined_call_operand.vmem [shape: bf16[32,128], index: 3, kind: output, shape index: {}]
  %s4 = sld [smem:[#allocation0]]
  $region22: #{blocks_forward.7} parent=0
    _
  %s6 = ssub.s32 1, %s4
  %s7 = scalar_select 0, %s6, %s4
  // Predicated region
  $region2: #{blocks_forward.7} parent=0 // pred_check
    _
  $region3: #{blocks_forward.7} parent=0 // pred_check_branch
    %9 = sbr.rel (0) target = $region5
  $region4: #{blocks_forward.7} parent=0 // pred_region
    _
  $region5: #{blocks_forward.7} parent=0 // pred_fallthru
    _
  // Predicated region
  $region6: #{blocks_forward.7} parent=0 // pred_check
    _
  $region7: #{blocks_forward.7} parent=0 // pred_check_branch
    %11 = sbr.rel (0) target = $region9
  $region8: #{blocks_forward.7} parent=0 // pred_region
    _
  $region9: #{blocks_forward.7} parent=0 // pred_fallthru
    _
  // Predicated region
  $region10: #{blocks_forward.7} parent=0 // pred_check
    _
  $region11: #{blocks_forward.7} parent=0 // pred_check_branch
    %13 = sbr.rel (0) target = $region13
  $region12: #{blocks_forward.7} parent=0 // pred_region
    _
  $region13: #{blocks_forward.7} parent=0 // pred_fallthru
    _
  %v15 = vld [vmem:[%s0] sm:$0xf]
  %v16 = vld [vmem:[%s0 + $0x4] sm:$0xf]
  %v17 = vld [vmem:[%s0 + $0x8] sm:$0xf]
  %v18 = vld [vmem:[%s0 + $0xc] sm:$0xf]
  %v19 = vld [vmem:[%s1] sm:$0xf]
  %v20 = vld [vmem:[%s1 + $0x4] sm:$0xf]
  %v21 = vld [vmem:[%s1 + $0x8] sm:$0xf]
  %v22 = vld [vmem:[%s1 + $0xc] sm:$0xf]
  %v23 = vld [vmem:[%s1 + $0x10] sm:$0xf]
  %v24 = vld [vmem:[%s1 + $0x14] sm:$0xf]
  %v25 = vld [vmem:[%s1 + $0x18] sm:$0xf]
  %v26 = vld [vmem:[%s1 + $0x1c] sm:$0xf]
  %v27 = vld [vmem:[%s1 + $0x20] sm:$0xf]
  %v28 = vld [vmem:[%s1 + $0x24] sm:$0xf]
  %v29 = vld [vmem:[%s1 + $0x28] sm:$0xf]
  %v30 = vld [vmem:[%s1 + $0x2c] sm:$0xf]
  %v31 = vld [vmem:[%s1 + $0x30] sm:$0xf]
  %v32 = vld [vmem:[%s1 + $0x34] sm:$0xf]
  %v33 = vld [vmem:[%s1 + $0x38] sm:$0xf]
  %v34 = vld [vmem:[%s1 + $0x3c] sm:$0xf]
  %v35 = vld [vmem:[%s2] sm:$0x1]
  %v37 = vlaneseq
  %v38 = vshrl.u32 %v37, 7
  %v39 = vsub.s32 0, %v38
  %v40 = vrot.slane %v35, %v39
  %v46 = vunpack.c.l.b16 %v15
  %v47 = vunpack.c.l.b16 %v16
  %v48 = vunpack.c.l.b16 %v17
  %v49 = vunpack.c.l.b16 %v18
  %v50 = vpack.c.b16 %v47, %v46
  %v51 = vpack.c.b16 %v49, %v48
  %v70 = vunpack.c.l.b16 %v19
  %v71 = vunpack.c.l.b16 %v20
  %v72 = vunpack.c.l.b16 %v21
  %v73 = vunpack.c.l.b16 %v22
  %v74 = vunpack.c.l.b16 %v23
  %v75 = vunpack.c.l.b16 %v24
  %v76 = vunpack.c.l.b16 %v25
  %v77 = vunpack.c.l.b16 %v26
  %v78 = vunpack.c.l.b16 %v27
  %v79 = vunpack.c.l.b16 %v28
  %v80 = vunpack.c.l.b16 %v29
  %v81 = vunpack.c.l.b16 %v30
  %v82 = vunpack.c.l.b16 %v31
  %v83 = vunpack.c.l.b16 %v32
  %v84 = vunpack.c.l.b16 %v33
  %v85 = vunpack.c.l.b16 %v34
  %v86 = vpack.c.b16 %v71, %v70
  %v87 = vpack.c.b16 %v73, %v72
  %v88 = vpack.c.b16 %v75, %v74
  %v89 = vpack.c.b16 %v77, %v76
  %v90 = vpack.c.b16 %v79, %v78
  %v91 = vpack.c.b16 %v81, %v80
  %v92 = vpack.c.b16 %v83, %v82
  %v93 = vpack.c.b16 %v85, %v84
  %102 = vmatprep.subr.bf16.mxu0 0
  %103 = vmatpush1.bf16.msra.mxu0 %v86
  %104 = vmatprep.subr.bf16.mxu0 0
  %105 = vmatpush1.bf16.msra.mxu0 %v87
  %106 = vmatprep.subr.bf16.mxu0 0
  %107 = vmatpush1.bf16.msra.mxu0 %v88
  %108 = vmatprep.subr.bf16.mxu0 0
  %109 = vmatpush1.bf16.msra.mxu0 %v89
  %110 = vmatprep.subr.bf16.mxu0 0
  %111 = vmatpush1.bf16.msra.mxu0 %v90
  %112 = vmatprep.subr.bf16.mxu0 0
  %113 = vmatpush1.bf16.msra.mxu0 %v91
  %114 = vmatprep.subr.bf16.mxu0 0
  %115 = vmatpush1.bf16.msra.mxu0 %v92
  %116 = vmatprep.subr.bf16.mxu0 0
  %117 = vmatpush1.bf16.msra.mxu0 %v93
  %118 = vmatprep.subr.bf16.mxu0 0
  %119 = vmatpush1.bf16.msra.mxu0 0
  %120 = vmatprep.subr.bf16.mxu0 0
  %121 = vmatpush1.bf16.msra.mxu0 0
  %122 = vmatprep.subr.bf16.mxu0 0
  %123 = vmatpush1.bf16.msra.mxu0 0
  %124 = vmatprep.subr.bf16.mxu0 0
  %125 = vmatpush1.bf16.msra.mxu0 0
  %126 = vmatprep.subr.bf16.mxu0 0
  %127 = vmatpush1.bf16.msra.mxu0 0
  %128 = vmatprep.subr.bf16.mxu0 0
  %129 = vmatpush1.bf16.msra.mxu0 0
  %130 = vmatprep.subr.bf16.mxu0 0
  %131 = vmatpush1.bf16.msra.mxu0 0
  %132 = vmatprep.subr.bf16.mxu0 0
  %133 = vmatpush1.bf16.msra.mxu0 0
  %134 = vmatprep.mubr.bf16.mxu0 0
  %135 = vmatmul.mubr.bf16.gmra.mrb[0].mxu0 %v50
  %v136 = vpop.f32.mrb[0].mxu0
  %v137 = vadd.f32 %v40, %v136
  %v138 = vpop.f32.mrb[0].mxu0
  %v139 = vpop.f32.mrb[0].mxu0
  %v140 = vadd.f32 %v40, %v139
  %v141 = vpop.f32.mrb[0].mxu0
  %142 = vmatprep.mubr.bf16.mxu0 0
  %143 = vmatmul.mubr.bf16.gmra.mrb[0].mxu0 %v51
  %v144 = vpop.f32.mrb[0].mxu0
  %v145 = vadd.f32 %v40, %v144
  %v146 = vpop.f32.mrb[0].mxu0
  %v147 = vpop.f32.mrb[0].mxu0
  %v148 = vadd.f32 %v40, %v147
  %v149 = vpop.f32.mrb[0].mxu0
  %150 = vdwg.mxu0
  %v151 = vpack.c.bf16 %v140, %v137
  %v152 = vpack.c.bf16 %v148, %v145
  %v155 = vunpack.c.l.b16 %v151
  %v156 = vunpack.c.h.b16 %v151
  %v157 = vunpack.c.l.b16 %v152
  %v158 = vunpack.c.h.b16 %v152
  %v159 = vpack.c.b16 %v155, %v155
  %v160 = vpack.c.b16 %v156, %v156
  %v161 = vpack.c.b16 %v157, %v157
  %v162 = vpack.c.b16 %v158, %v158
  %167 = vst [vmem:[%s3] sm:$0xf] %v159
  %168 = vst [vmem:[%s3 + $0x4] sm:$0xf] %v160
  %169 = vst [vmem:[%s3 + $0x8] sm:$0xf] %v161
  %170 = vst [vmem:[%s3 + $0xc] sm:$0xf] %v162
  // Predicated region
  $region14: #{blocks_forward.7} parent=0 // pred_check
    _
  $region15: #{blocks_forward.7} parent=0 // pred_check_branch
    %172 = sbr.rel (0) target = $region17
  $region16: #{blocks_forward.7} parent=0 // pred_region
    _
  $region17: #{blocks_forward.7} parent=0 // pred_fallthru
    _
  // Predicated region
  $region18: #{blocks_forward.7} parent=0 // pred_check
    _
  $region19: #{blocks_forward.7} parent=0 // pred_check_branch
    %174 = sbr.rel (0) target = $region21
  $region20: #{blocks_forward.7} parent=0 // pred_region
    _
  $region21: #{blocks_forward.7} parent=0 // pred_fallthru
    _

// kernel: blocks_forward.8
$region0: #{blocks_forward.8}
  #allocation0 [shape = 'u32[]', space=smem, size = 0x4, offset = 0x4, fixed_abs, tag = 'smem constant byte address 0x4 - core index']
  #allocation1 [shape = 'u32[144,128]{1,0:T(1,128)}', space=vmem, size = 0x12000, scoped, tag = 'internal scratch']
  %s0 = inlined_call_operand.vmem [shape: bf16[128,128], index: 0, kind: input, shape index: {}]
  %s1 = inlined_call_operand.vmem [shape: bf16[128,128], index: 1, kind: input, shape index: {}]
  %s2 = inlined_call_operand.vmem [shape: f32[1,128], index: 2, kind: input, shape index: {}]
  %s3 = inlined_call_operand.vmem [shape: bf16[128,128], index: 3, kind: output, shape index: {}]
  %s4 = sld [smem:[#allocation0]]
  $region22: #{blocks_forward.8} parent=0
    _
  %s6 = ssub.s32 1, %s4
  %s7 = scalar_select 0, %s6, %s4
  // Predicated region
  $region2: #{blocks_forward.8} parent=0 // pred_check
    _
  $region3: #{blocks_forward.8} parent=0 // pred_check_branch
    %9 = sbr.rel (0) target = $region5
  $region4: #{blocks_forward.8} parent=0 // pred_region
    _
  $region5: #{blocks_forward.8} parent=0 // pred_fallthru
    _
  // Predicated region
  $region6: #{blocks_forward.8} parent=0 // pred_check
    _
  $region7: #{blocks_forward.8} parent=0 // pred_check_branch
    %11 = sbr.rel (0) target = $region9
  $region8: #{blocks_forward.8} parent=0 // pred_region
    _
  $region9: #{blocks_forward.8} parent=0 // pred_fallthru
    _
  // Predicated region
  $region10: #{blocks_forward.8} parent=0 // pred_check
    _
  $region11: #{blocks_forward.8} parent=0 // pred_check_branch
    %13 = sbr.rel (0) target = $region13
  $region12: #{blocks_forward.8} parent=0 // pred_region
    _
  $region13: #{blocks_forward.8} parent=0 // pred_fallthru
    _
  %v15 = vld [vmem:[%s0] sm:$0xf]
  %v16 = vld [vmem:[%s0 + $0x4] sm:$0xf]
  %v17 = vld [vmem:[%s0 + $0x8] sm:$0xf]
  %v18 = vld [vmem:[%s0 + $0xc] sm:$0xf]
  %v19 = vld [vmem:[%s0 + $0x10] sm:$0xf]
  %v20 = vld [vmem:[%s0 + $0x14] sm:$0xf]
  %v21 = vld [vmem:[%s0 + $0x18] sm:$0xf]
  %v22 = vld [vmem:[%s0 + $0x1c] sm:$0xf]
  %v23 = vld [vmem:[%s0 + $0x20] sm:$0xf]
  %v24 = vld [vmem:[%s0 + $0x24] sm:$0xf]
  %v25 = vld [vmem:[%s0 + $0x28] sm:$0xf]
  %v26 = vld [vmem:[%s0 + $0x2c] sm:$0xf]
  %v27 = vld [vmem:[%s0 + $0x30] sm:$0xf]
  %v28 = vld [vmem:[%s0 + $0x34] sm:$0xf]
  %v29 = vld [vmem:[%s0 + $0x38] sm:$0xf]
  %v30 = vld [vmem:[%s0 + $0x3c] sm:$0xf]
  %v31 = vld [vmem:[%s1] sm:$0xf]
  %v32 = vld [vmem:[%s1 + $0x4] sm:$0xf]
  %v33 = vld [vmem:[%s1 + $0x8] sm:$0xf]
  %v34 = vld [vmem:[%s1 + $0xc] sm:$0xf]
  %v35 = vld [vmem:[%s1 + $0x10] sm:$0xf]
  %v36 = vld [vmem:[%s1 + $0x14] sm:$0xf]
  %v37 = vld [vmem:[%s1 + $0x18] sm:$0xf]
  %v38 = vld [vmem:[%s1 + $0x1c] sm:$0xf]
  %v39 = vld [vmem:[%s1 + $0x20] sm:$0xf]
  %v40 = vld [vmem:[%s1 + $0x24] sm:$0xf]
  %v41 = vld [vmem:[%s1 + $0x28] sm:$0xf]
  %v42 = vld [vmem:[%s1 + $0x2c] sm:$0xf]
  %v43 = vld [vmem:[%s1 + $0x30] sm:$0xf]
  %v44 = vld [vmem:[%s1 + $0x34] sm:$0xf]
  %v45 = vld [vmem:[%s1 + $0x38] sm:$0xf]
  %v46 = vld [vmem:[%s1 + $0x3c] sm:$0xf]
  %v47 = vld [vmem:[%s2] sm:$0x1]
  %v49 = vlaneseq
  %v50 = vshrl.u32 %v49, 7
  %v51 = vsub.s32 0, %v50
  %v52 = vrot.slane %v47, %v51
  %v70 = vunpack.c.l.b16 %v15
  %v71 = vunpack.c.l.b16 %v16
  %v72 = vunpack.c.l.b16 %v17
  %v73 = vunpack.c.l.b16 %v18
  %v74 = vunpack.c.l.b16 %v19
  %v75 = vunpack.c.l.b16 %v20
  %v76 = vunpack.c.l.b16 %v21
  %v77 = vunpack.c.l.b16 %v22
  %v78 = vunpack.c.l.b16 %v23
  %v79 = vunpack.c.l.b16 %v24
  %v80 = vunpack.c.l.b16 %v25
  %v81 = vunpack.c.l.b16 %v26
  %v82 = vunpack.c.l.b16 %v27
  %v83 = vunpack.c.l.b16 %v28
  %v84 = vunpack.c.l.b16 %v29
  %v85 = vunpack.c.l.b16 %v30
  %v86 = vpack.c.b16 %v71, %v70
  %v87 = vpack.c.b16 %v73, %v72
  %v88 = vpack.c.b16 %v75, %v74
  %v89 = vpack.c.b16 %v77, %v76
  %v90 = vpack.c.b16 %v79, %v78
  %v91 = vpack.c.b16 %v81, %v80
  %v92 = vpack.c.b16 %v83, %v82
  %v93 = vpack.c.b16 %v85, %v84
  %v118 = vunpack.c.l.b16 %v31
  %v119 = vunpack.c.l.b16 %v32
  %v120 = vunpack.c.l.b16 %v33
  %v121 = vunpack.c.l.b16 %v34
  %v122 = vunpack.c.l.b16 %v35
  %v123 = vunpack.c.l.b16 %v36
  %v124 = vunpack.c.l.b16 %v37
  %v125 = vunpack.c.l.b16 %v38
  %v126 = vunpack.c.l.b16 %v39
  %v127 = vunpack.c.l.b16 %v40
  %v128 = vunpack.c.l.b16 %v41
  %v129 = vunpack.c.l.b16 %v42
  %v130 = vunpack.c.l.b16 %v43
  %v131 = vunpack.c.l.b16 %v44
  %v132 = vunpack.c.l.b16 %v45
  %v133 = vunpack.c.l.b16 %v46
  %v134 = vpack.c.b16 %v119, %v118
  %v135 = vpack.c.b16 %v121, %v120
  %v136 = vpack.c.b16 %v123, %v122
  %v137 = vpack.c.b16 %v125, %v124
  %v138 = vpack.c.b16 %v127, %v126
  %v139 = vpack.c.b16 %v129, %v128
  %v140 = vpack.c.b16 %v131, %v130
  %v141 = vpack.c.b16 %v133, %v132
  %150 = vmatprep.subr.bf16.mxu0 0
  %151 = vmatpush1.bf16.msra.mxu0 %v134
  %152 = vmatprep.subr.bf16.mxu0 0
  %153 = vmatpush1.bf16.msra.mxu0 %v135
  %154 = vmatprep.subr.bf16.mxu0 0
  %155 = vmatpush1.bf16.msra.mxu0 %v136
  %156 = vmatprep.subr.bf16.mxu0 0
  %157 = vmatpush1.bf16.msra.mxu0 %v137
  %158 = vmatprep.subr.bf16.mxu0 0
  %159 = vmatpush1.bf16.msra.mxu0 %v138
  %160 = vmatprep.subr.bf16.mxu0 0
  %161 = vmatpush1.bf16.msra.mxu0 %v139
  %162 = vmatprep.subr.bf16.mxu0 0
  %163 = vmatpush1.bf16.msra.mxu0 %v140
  %164 = vmatprep.subr.bf16.mxu0 0
  %165 = vmatpush1.bf16.msra.mxu0 %v141
  %166 = vmatprep.subr.bf16.mxu0 0
  %167 = vmatpush1.bf16.msra.mxu0 0
  %168 = vmatprep.subr.bf16.mxu0 0
  %169 = vmatpush1.bf16.msra.mxu0 0
  %170 = vmatprep.subr.bf16.mxu0 0
  %171 = vmatpush1.bf16.msra.mxu0 0
  %172 = vmatprep.subr.bf16.mxu0 0
  %173 = vmatpush1.bf16.msra.mxu0 0
  %174 = vmatprep.subr.bf16.mxu0 0
  %175 = vmatpush1.bf16.msra.mxu0 0
  %176 = vmatprep.subr.bf16.mxu0 0
  %177 = vmatpush1.bf16.msra.mxu0 0
  %178 = vmatprep.subr.bf16.mxu0 0
  %179 = vmatpush1.bf16.msra.mxu0 0
  %180 = vmatprep.subr.bf16.mxu0 0
  %181 = vmatpush1.bf16.msra.mxu0 0
  %182 = vmatprep.mubr.bf16.mxu0 0
  %183 = vmatmul.mubr.bf16.gmra.mrb[0].mxu0 %v86
  %v184 = vpop.f32.mrb[0].mxu0
  %v185 = vadd.f32 %v52, %v184
  %v186 = vpop.f32.mrb[0].mxu0
  %v187 = vpop.f32.mrb[0].mxu0
  %v188 = vadd.f32 %v52, %v187
  %v189 = vpop.f32.mrb[0].mxu0
  %190 = vmatprep.mubr.bf16.mxu0 0
  %191 = vmatmul.mubr.bf16.gmra.mrb[0].mxu0 %v87
  %v192 = vpop.f32.mrb[0].mxu0
  %v193 = vadd.f32 %v52, %v192
  %v194 = vpop.f32.mrb[0].mxu0
  %v195 = vpop.f32.mrb[0].mxu0
  %v196 = vadd.f32 %v52, %v195
  %v197 = vpop.f32.mrb[0].mxu0
  %198 = vmatprep.mubr.bf16.mxu0 0
  %199 = vmatmul.mubr.bf16.gmra.mrb[0].mxu0 %v88
  %v200 = vpop.f32.mrb[0].mxu0
  %v201 = vadd.f32 %v52, %v200
  %v202 = vpop.f32.mrb[0].mxu0
  %v203 = vpop.f32.mrb[0].mxu0
  %v204 = vadd.f32 %v52, %v203
  %v205 = vpop.f32.mrb[0].mxu0
  %206 = vmatprep.mubr.bf16.mxu0 0
  %207 = vmatmul.mubr.bf16.gmra.mrb[0].mxu0 %v89
  %v208 = vpop.f32.mrb[0].mxu0
  %v209 = vadd.f32 %v52, %v208
  %v210 = vpop.f32.mrb[0].mxu0
  %v211 = vpop.f32.mrb[0].mxu0
  %v212 = vadd.f32 %v52, %v211
  %v213 = vpop.f32.mrb[0].mxu0
  %214 = vmatprep.mubr.bf16.mxu0 0
  %215 = vmatmul.mubr.bf16.gmra.mrb[0].mxu0 %v90
  %v216 = vpop.f32.mrb[0].mxu0
  %v217 = vadd.f32 %v52, %v216
  %v218 = vpop.f32.mrb[0].mxu0
  %v219 = vpop.f32.mrb[0].mxu0
  %v220 = vadd.f32 %v52, %v219
  %v221 = vpop.f32.mrb[0].mxu0
  %222 = vmatprep.mubr.bf16.mxu0 0
  %223 = vmatmul.mubr.bf16.gmra.mrb[0].mxu0 %v91
  %v224 = vpop.f32.mrb[0].mxu0
  %v225 = vadd.f32 %v52, %v224
  %v226 = vpop.f32.mrb[0].mxu0
  %v227 = vpop.f32.mrb[0].mxu0
  %v228 = vadd.f32 %v52, %v227
  %v229 = vpop.f32.mrb[0].mxu0
  %230 = vmatprep.mubr.bf16.mxu0 0
  %231 = vmatmul.mubr.bf16.gmra.mrb[0].mxu0 %v92
  %v232 = vpop.f32.mrb[0].mxu0
  %v233 = vadd.f32 %v52, %v232
  %v234 = vpop.f32.mrb[0].mxu0
  %v235 = vpop.f32.mrb[0].mxu0
  %v236 = vadd.f32 %v52, %v235
  %v237 = vpop.f32.mrb[0].mxu0
  %238 = vmatprep.mubr.bf16.mxu0 0
  %239 = vmatmul.mubr.bf16.gmra.mrb[0].mxu0 %v93
  %v240 = vpop.f32.mrb[0].mxu0
  %v241 = vadd.f32 %v52, %v240
  %v242 = vpop.f32.mrb[0].mxu0
  %v243 = vpop.f32.mrb[0].mxu0
  %v244 = vadd.f32 %v52, %v243
  %v245 = vpop.f32.mrb[0].mxu0
  %246 = vdwg.mxu0
  %v247 = vmax.f32 %v185, 0.0
  %v248 = vmax.f32 %v188, 0.0
  %v249 = vmax.f32 %v193, 0.0
  %v250 = vmax.f32 %v196, 0.0
  %v251 = vmax.f32 %v201, 0.0
  %v252 = vmax.f32 %v204, 0.0
  %v253 = vmax.f32 %v209, 0.0
  %v254 = vmax.f32 %v212, 0.0
  %v255 = vmax.f32 %v217, 0.0
  %v256 = vmax.f32 %v220, 0.0
  %v257 = vmax.f32 %v225, 0.0
  %v258 = vmax.f32 %v228, 0.0
  %v259 = vmax.f32 %v233, 0.0
  %v260 = vmax.f32 %v236, 0.0
  %v261 = vmax.f32 %v241, 0.0
  %v262 = vmax.f32 %v244, 0.0
  %v263 = vpack.c.bf16 %v248, %v247
  %v264 = vpack.c.bf16 %v250, %v249
  %v265 = vpack.c.bf16 %v252, %v251
  %v266 = vpack.c.bf16 %v254, %v253
  %v267 = vpack.c.bf16 %v256, %v255
  %v268 = vpack.c.bf16 %v258, %v257
  %v269 = vpack.c.bf16 %v260, %v259
  %v270 = vpack.c.bf16 %v262, %v261
  %v279 = vunpack.c.l.b16 %v263
  %v280 = vunpack.c.h.b16 %v263
  %v281 = vunpack.c.l.b16 %v264
  %v282 = vunpack.c.h.b16 %v264
  %v283 = vunpack.c.l.b16 %v265
  %v284 = vunpack.c.h.b16 %v265
  %v285 = vunpack.c.l.b16 %v266
  %v286 = vunpack.c.h.b16 %v266
  %v287 = vunpack.c.l.b16 %v267
  %v288 = vunpack.c.h.b16 %v267
  %v289 = vunpack.c.l.b16 %v268
  %v290 = vunpack.c.h.b16 %v268
  %v291 = vunpack.c.l.b16 %v269
  %v292 = vunpack.c.h.b16 %v269
  %v293 = vunpack.c.l.b16 %v270
  %v294 = vunpack.c.h.b16 %v270
  %v295 = vpack.c.b16 %v279, %v279
  %v296 = vpack.c.b16 %v280, %v280
  %v297 = vpack.c.b16 %v281, %v281
  %v298 = vpack.c.b16 %v282, %v282
  %v299 = vpack.c.b16 %v283, %v283
  %v300 = vpack.c.b16 %v284, %v284
  %v301 = vpack.c.b16 %v285, %v285
  %v302 = vpack.c.b16 %v286, %v286
  %v303 = vpack.c.b16 %v287, %v287
  %v304 = vpack.c.b16 %v288, %v288
  %v305 = vpack.c.b16 %v289, %v289
  %v306 = vpack.c.b16 %v290, %v290
  %v307 = vpack.c.b16 %v291, %v291
  %v308 = vpack.c.b16 %v292, %v292
  %v309 = vpack.c.b16 %v293, %v293
  %v310 = vpack.c.b16 %v294, %v294
  %327 = vst [vmem:[%s3] sm:$0xf] %v295
  %328 = vst [vmem:[%s3 + $0x4] sm:$0xf] %v296
  %329 = vst [vmem:[%s3 + $0x8] sm:$0xf] %v297
  %330 = vst [vmem:[%s3 + $0xc] sm:$0xf] %v298
  %331 = vst [vmem:[%s3 + $0x10] sm:$0xf] %v299
  %332 = vst [vmem:[%s3 + $0x14] sm:$0xf] %v300
  %333 = vst [vmem:[%s3 + $0x18] sm:$0xf] %v301
  %334 = vst [vmem:[%s3 + $0x1c] sm:$0xf] %v302
  %335 = vst [vmem:[%s3 + $0x20] sm:$0xf] %v303
  %336 = vst [vmem:[%s3 + $0x24] sm:$0xf] %v304
  %337 = vst [vmem:[%s3 + $0x28] sm:$0xf] %v305
  %338 = vst [vmem:[%s3 + $0x2c] sm:$0xf] %v306
  %339 = vst [vmem:[%s3 + $0x30] sm:$0xf] %v307
  %340 = vst [vmem:[%s3 + $0x34] sm:$0xf] %v308
  %341 = vst [vmem:[%s3 + $0x38] sm:$0xf] %v309
  %342 = vst [vmem:[%s3 + $0x3c] sm:$0xf] %v310
  // Predicated region
  $region14: #{blocks_forward.8} parent=0 // pred_check
    _
  $region15: #{blocks_forward.8} parent=0 // pred_check_branch
    %344 = sbr.rel (0) target = $region17
  $region16: #{blocks_forward.8} parent=0 // pred_region
    _
  $region17: #{blocks_forward.8} parent=0 // pred_fallthru
    _
  // Predicated region
  $region18: #{blocks_forward.8} parent=0 // pred_check
    _
  $region19: #{blocks_forward.8} parent=0 // pred_check_branch
    %346 = sbr.rel (0) target = $region21
  $region20: #{blocks_forward.8} parent=0 // pred_region
    _
  $region21: #{blocks_forward.8} parent=0 // pred_fallthru
    _

// kernel: blocks_forward.11
$region0: #{blocks_forward.11}
  #allocation0 [shape = 'u32[]', space=smem, size = 0x4, offset = 0x4, fixed_abs, tag = 'smem constant byte address 0x4 - core index']
  #allocation1 [shape = 'u32[144,128]{1,0:T(1,128)}', space=vmem, size = 0x12000, scoped, tag = 'internal scratch']
  %s0 = inlined_call_operand.vmem [shape: bf16[32,128], index: 0, kind: input, shape index: {}]
  %s1 = inlined_call_operand.vmem [shape: bf16[128,128], index: 1, kind: input, shape index: {}]
  %s2 = inlined_call_operand.vmem [shape: f32[1,128], index: 2, kind: input, shape index: {}]
  %s3 = inlined_call_operand.vmem [shape: bf16[32,128], index: 3, kind: output, shape index: {}]
  %s4 = sld [smem:[#allocation0]]
  $region22: #{blocks_forward.11} parent=0
    _
  %s6 = ssub.s32 1, %s4
  %s7 = scalar_select 0, %s6, %s4
  // Predicated region
  $region2: #{blocks_forward.11} parent=0 // pred_check
    _
  $region3: #{blocks_forward.11} parent=0 // pred_check_branch
    %9 = sbr.rel (0) target = $region5
  $region4: #{blocks_forward.11} parent=0 // pred_region
    _
  $region5: #{blocks_forward.11} parent=0 // pred_fallthru
    _
  // Predicated region
  $region6: #{blocks_forward.11} parent=0 // pred_check
    _
  $region7: #{blocks_forward.11} parent=0 // pred_check_branch
    %11 = sbr.rel (0) target = $region9
  $region8: #{blocks_forward.11} parent=0 // pred_region
    _
  $region9: #{blocks_forward.11} parent=0 // pred_fallthru
    _
  // Predicated region
  $region10: #{blocks_forward.11} parent=0 // pred_check
    _
  $region11: #{blocks_forward.11} parent=0 // pred_check_branch
    %13 = sbr.rel (0) target = $region13
  $region12: #{blocks_forward.11} parent=0 // pred_region
    _
  $region13: #{blocks_forward.11} parent=0 // pred_fallthru
    _
  %v15 = vld [vmem:[%s0] sm:$0xf]
  %v16 = vld [vmem:[%s0 + $0x4] sm:$0xf]
  %v17 = vld [vmem:[%s0 + $0x8] sm:$0xf]
  %v18 = vld [vmem:[%s0 + $0xc] sm:$0xf]
  %v19 = vld [vmem:[%s1] sm:$0xf]
  %v20 = vld [vmem:[%s1 + $0x4] sm:$0xf]
  %v21 = vld [vmem:[%s1 + $0x8] sm:$0xf]
  %v22 = vld [vmem:[%s1 + $0xc] sm:$0xf]
  %v23 = vld [vmem:[%s1 + $0x10] sm:$0xf]
  %v24 = vld [vmem:[%s1 + $0x14] sm:$0xf]
  %v25 = vld [vmem:[%s1 + $0x18] sm:$0xf]
  %v26 = vld [vmem:[%s1 + $0x1c] sm:$0xf]
  %v27 = vld [vmem:[%s1 + $0x20] sm:$0xf]
  %v28 = vld [vmem:[%s1 + $0x24] sm:$0xf]
  %v29 = vld [vmem:[%s1 + $0x28] sm:$0xf]
  %v30 = vld [vmem:[%s1 + $0x2c] sm:$0xf]
  %v31 = vld [vmem:[%s1 + $0x30] sm:$0xf]
  %v32 = vld [vmem:[%s1 + $0x34] sm:$0xf]
  %v33 = vld [vmem:[%s1 + $0x38] sm:$0xf]
  %v34 = vld [vmem:[%s1 + $0x3c] sm:$0xf]
  %v35 = vld [vmem:[%s2] sm:$0x1]
  %v37 = vlaneseq
  %v38 = vshrl.u32 %v37, 7
  %v39 = vsub.s32 0, %v38
  %v40 = vrot.slane %v35, %v39
  %v46 = vunpack.c.l.b16 %v15
  %v47 = vunpack.c.l.b16 %v16
  %v48 = vunpack.c.l.b16 %v17
  %v49 = vunpack.c.l.b16 %v18
  %v50 = vpack.c.b16 %v47, %v46
  %v51 = vpack.c.b16 %v49, %v48
  %v70 = vunpack.c.l.b16 %v19
  %v71 = vunpack.c.l.b16 %v20
  %v72 = vunpack.c.l.b16 %v21
  %v73 = vunpack.c.l.b16 %v22
  %v74 = vunpack.c.l.b16 %v23
  %v75 = vunpack.c.l.b16 %v24
  %v76 = vunpack.c.l.b16 %v25
  %v77 = vunpack.c.l.b16 %v26
  %v78 = vunpack.c.l.b16 %v27
  %v79 = vunpack.c.l.b16 %v28
  %v80 = vunpack.c.l.b16 %v29
  %v81 = vunpack.c.l.b16 %v30
  %v82 = vunpack.c.l.b16 %v31
  %v83 = vunpack.c.l.b16 %v32
  %v84 = vunpack.c.l.b16 %v33
  %v85 = vunpack.c.l.b16 %v34
  %v86 = vpack.c.b16 %v71, %v70
  %v87 = vpack.c.b16 %v73, %v72
  %v88 = vpack.c.b16 %v75, %v74
  %v89 = vpack.c.b16 %v77, %v76
  %v90 = vpack.c.b16 %v79, %v78
  %v91 = vpack.c.b16 %v81, %v80
  %v92 = vpack.c.b16 %v83, %v82
  %v93 = vpack.c.b16 %v85, %v84
  %102 = vmatprep.subr.bf16.mxu0 0
  %103 = vmatpush1.bf16.msra.mxu0 %v86
  %104 = vmatprep.subr.bf16.mxu0 0
  %105 = vmatpush1.bf16.msra.mxu0 %v87
  %106 = vmatprep.subr.bf16.mxu0 0
  %107 = vmatpush1.bf16.msra.mxu0 %v88
  %108 = vmatprep.subr.bf16.mxu0 0
  %109 = vmatpush1.bf16.msra.mxu0 %v89
  %110 = vmatprep.subr.bf16.mxu0 0
  %111 = vmatpush1.bf16.msra.mxu0 %v90
  %112 = vmatprep.subr.bf16.mxu0 0
  %113 = vmatpush1.bf16.msra.mxu0 %v91
  %114 = vmatprep.subr.bf16.mxu0 0
  %115 = vmatpush1.bf16.msra.mxu0 %v92
  %116 = vmatprep.subr.bf16.mxu0 0
  %117 = vmatpush1.bf16.msra.mxu0 %v93
  %118 = vmatprep.subr.bf16.mxu0 0
  %119 = vmatpush1.bf16.msra.mxu0 0
  %120 = vmatprep.subr.bf16.mxu0 0
  %121 = vmatpush1.bf16.msra.mxu0 0
  %122 = vmatprep.subr.bf16.mxu0 0
  %123 = vmatpush1.bf16.msra.mxu0 0
  %124 = vmatprep.subr.bf16.mxu0 0
  %125 = vmatpush1.bf16.msra.mxu0 0
  %126 = vmatprep.subr.bf16.mxu0 0
  %127 = vmatpush1.bf16.msra.mxu0 0
  %128 = vmatprep.subr.bf16.mxu0 0
  %129 = vmatpush1.bf16.msra.mxu0 0
  %130 = vmatprep.subr.bf16.mxu0 0
  %131 = vmatpush1.bf16.msra.mxu0 0
  %132 = vmatprep.subr.bf16.mxu0 0
  %133 = vmatpush1.bf16.msra.mxu0 0
  %134 = vmatprep.mubr.bf16.mxu0 0
  %135 = vmatmul.mubr.bf16.gmra.mrb[0].mxu0 %v50
  %v136 = vpop.f32.mrb[0].mxu0
  %v137 = vadd.f32 %v40, %v136
  %v138 = vpop.f32.mrb[0].mxu0
  %v139 = vpop.f32.mrb[0].mxu0
  %v140 = vadd.f32 %v40, %v139
  %v141 = vpop.f32.mrb[0].mxu0
  %142 = vmatprep.mubr.bf16.mxu0 0
  %143 = vmatmul.mubr.bf16.gmra.mrb[0].mxu0 %v51
  %v144 = vpop.f32.mrb[0].mxu0
  %v145 = vadd.f32 %v40, %v144
  %v146 = vpop.f32.mrb[0].mxu0
  %v147 = vpop.f32.mrb[0].mxu0
  %v148 = vadd.f32 %v40, %v147
  %v149 = vpop.f32.mrb[0].mxu0
  %150 = vdwg.mxu0
  %v151 = vmax.f32 %v137, 0.0
  %v152 = vmax.f32 %v140, 0.0
  %v153 = vmax.f32 %v145, 0.0
  %v154 = vmax.f32 %v148, 0.0
  %v155 = vpack.c.bf16 %v152, %v151
  %v156 = vpack.c.bf16 %v154, %v153
  %v159 = vunpack.c.l.b16 %v155
  %v160 = vunpack.c.h.b16 %v155
  %v161 = vunpack.c.l.b16 %v156
  %v162 = vunpack.c.h.b16 %v156
  %v163 = vpack.c.b16 %v159, %v159
  %v164 = vpack.c.b16 %v160, %v160
  %v165 = vpack.c.b16 %v161, %v161
  %v166 = vpack.c.b16 %v162, %v162
  %171 = vst [vmem:[%s3] sm:$0xf] %v163
  %172 = vst [vmem:[%s3 + $0x4] sm:$0xf] %v164
  %173 = vst [vmem:[%s3 + $0x8] sm:$0xf] %v165
  %174 = vst [vmem:[%s3 + $0xc] sm:$0xf] %v166
  // Predicated region
  $region14: #{blocks_forward.11} parent=0 // pred_check
    _
  $region15: #{blocks_forward.11} parent=0 // pred_check_branch
    %176 = sbr.rel (0) target = $region17
  $region16: #{blocks_forward.11} parent=0 // pred_region
    _
  $region17: #{blocks_forward.11} parent=0 // pred_fallthru
    _
  // Predicated region
  $region18: #{blocks_forward.11} parent=0 // pred_check
    _
  $region19: #{blocks_forward.11} parent=0 // pred_check_branch
    %178 = sbr.rel (0) target = $region21
  $region20: #{blocks_forward.11} parent=0 // pred_region
    _
  $region21: #{blocks_forward.11} parent=0 // pred_fallthru
    _

// kernel: blocks_forward.10
$region0: #{blocks_forward.10}
  #allocation0 [shape = 'u32[]', space=smem, size = 0x4, offset = 0x4, fixed_abs, tag = 'smem constant byte address 0x4 - core index']
  #allocation1 [shape = 'u32[144,128]{1,0:T(1,128)}', space=vmem, size = 0x12000, scoped, tag = 'internal scratch']
  %s0 = inlined_call_operand.vmem [shape: bf16[32,128], index: 0, kind: input, shape index: {}]
  %s1 = inlined_call_operand.vmem [shape: bf16[128,128], index: 1, kind: input, shape index: {}]
  %s2 = inlined_call_operand.vmem [shape: f32[1,128], index: 2, kind: input, shape index: {}]
  %s3 = inlined_call_operand.vmem [shape: bf16[32,128], index: 3, kind: input, shape index: {}]
  %s4 = inlined_call_operand.vmem [shape: bf16[32,128], index: 4, kind: output, shape index: {}]
  %s5 = sld [smem:[#allocation0]]
  $region26: #{blocks_forward.10} parent=0
    _
  %s7 = ssub.s32 1, %s5
  %s8 = scalar_select 0, %s7, %s5
  // Predicated region
  $region2: #{blocks_forward.10} parent=0 // pred_check
    _
  $region3: #{blocks_forward.10} parent=0 // pred_check_branch
    %10 = sbr.rel (0) target = $region5
  $region4: #{blocks_forward.10} parent=0 // pred_region
    _
  $region5: #{blocks_forward.10} parent=0 // pred_fallthru
    _
  // Predicated region
  $region6: #{blocks_forward.10} parent=0 // pred_check
    _
  $region7: #{blocks_forward.10} parent=0 // pred_check_branch
    %12 = sbr.rel (0) target = $region9
  $region8: #{blocks_forward.10} parent=0 // pred_region
    _
  $region9: #{blocks_forward.10} parent=0 // pred_fallthru
    _
  // Predicated region
  $region10: #{blocks_forward.10} parent=0 // pred_check
    _
  $region11: #{blocks_forward.10} parent=0 // pred_check_branch
    %14 = sbr.rel (0) target = $region13
  $region12: #{blocks_forward.10} parent=0 // pred_region
    _
  $region13: #{blocks_forward.10} parent=0 // pred_fallthru
    _
  // Predicated region
  $region14: #{blocks_forward.10} parent=0 // pred_check
    _
  $region15: #{blocks_forward.10} parent=0 // pred_check_branch
    %16 = sbr.rel (0) target = $region17
  $region16: #{blocks_forward.10} parent=0 // pred_region
    _
  $region17: #{blocks_forward.10} parent=0 // pred_fallthru
    _
  %v18 = vld [vmem:[%s0] sm:$0xf]
  %v19 = vld [vmem:[%s0 + $0x4] sm:$0xf]
  %v20 = vld [vmem:[%s0 + $0x8] sm:$0xf]
  %v21 = vld [vmem:[%s0 + $0xc] sm:$0xf]
  %v22 = vld [vmem:[%s1] sm:$0xf]
  %v23 = vld [vmem:[%s1 + $0x4] sm:$0xf]
  %v24 = vld [vmem:[%s1 + $0x8] sm:$0xf]
  %v25 = vld [vmem:[%s1 + $0xc] sm:$0xf]
  %v26 = vld [vmem:[%s1 + $0x10] sm:$0xf]
  %v27 = vld [vmem:[%s1 + $0x14] sm:$0xf]
  %v28 = vld [vmem:[%s1 + $0x18] sm:$0xf]
  %v29 = vld [vmem:[%s1 + $0x1c] sm:$0xf]
  %v30 = vld [vmem:[%s1 + $0x20] sm:$0xf]
  %v31 = vld [vmem:[%s1 + $0x24] sm:$0xf]
  %v32 = vld [vmem:[%s1 + $0x28] sm:$0xf]
  %v33 = vld [vmem:[%s1 + $0x2c] sm:$0xf]
  %v34 = vld [vmem:[%s1 + $0x30] sm:$0xf]
  %v35 = vld [vmem:[%s1 + $0x34] sm:$0xf]
  %v36 = vld [vmem:[%s1 + $0x38] sm:$0xf]
  %v37 = vld [vmem:[%s1 + $0x3c] sm:$0xf]
  %v38 = vld [vmem:[%s2] sm:$0x1]
  %v40 = vlaneseq
  %v41 = vshrl.u32 %v40, 7
  %v42 = vsub.s32 0, %v41
  %v43 = vrot.slane %v38, %v42
  %v49 = vunpack.c.l.b16 %v18
  %v50 = vunpack.c.l.b16 %v19
  %v51 = vunpack.c.l.b16 %v20
  %v52 = vunpack.c.l.b16 %v21
  %v53 = vpack.c.b16 %v50, %v49
  %v54 = vpack.c.b16 %v52, %v51
  %v73 = vunpack.c.l.b16 %v22
  %v74 = vunpack.c.l.b16 %v23
  %v75 = vunpack.c.l.b16 %v24
  %v76 = vunpack.c.l.b16 %v25
  %v77 = vunpack.c.l.b16 %v26
  %v78 = vunpack.c.l.b16 %v27
  %v79 = vunpack.c.l.b16 %v28
  %v80 = vunpack.c.l.b16 %v29
  %v81 = vunpack.c.l.b16 %v30
  %v82 = vunpack.c.l.b16 %v31
  %v83 = vunpack.c.l.b16 %v32
  %v84 = vunpack.c.l.b16 %v33
  %v85 = vunpack.c.l.b16 %v34
  %v86 = vunpack.c.l.b16 %v35
  %v87 = vunpack.c.l.b16 %v36
  %v88 = vunpack.c.l.b16 %v37
  %v89 = vpack.c.b16 %v74, %v73
  %v90 = vpack.c.b16 %v76, %v75
  %v91 = vpack.c.b16 %v78, %v77
  %v92 = vpack.c.b16 %v80, %v79
  %v93 = vpack.c.b16 %v82, %v81
  %v94 = vpack.c.b16 %v84, %v83
  %v95 = vpack.c.b16 %v86, %v85
  %v96 = vpack.c.b16 %v88, %v87
  %105 = vmatprep.subr.bf16.mxu0 0
  %106 = vmatpush1.bf16.msra.mxu0 %v89
  %107 = vmatprep.subr.bf16.mxu0 0
  %108 = vmatpush1.bf16.msra.mxu0 %v90
  %109 = vmatprep.subr.bf16.mxu0 0
  %110 = vmatpush1.bf16.msra.mxu0 %v91
  %111 = vmatprep.subr.bf16.mxu0 0
  %112 = vmatpush1.bf16.msra.mxu0 %v92
  %113 = vmatprep.subr.bf16.mxu0 0
  %114 = vmatpush1.bf16.msra.mxu0 %v93
  %115 = vmatprep.subr.bf16.mxu0 0
  %116 = vmatpush1.bf16.msra.mxu0 %v94
  %117 = vmatprep.subr.bf16.mxu0 0
  %118 = vmatpush1.bf16.msra.mxu0 %v95
  %119 = vmatprep.subr.bf16.mxu0 0
  %120 = vmatpush1.bf16.msra.mxu0 %v96
  %121 = vmatprep.subr.bf16.mxu0 0
  %122 = vmatpush1.bf16.msra.mxu0 0
  %123 = vmatprep.subr.bf16.mxu0 0
  %124 = vmatpush1.bf16.msra.mxu0 0
  %125 = vmatprep.subr.bf16.mxu0 0
  %126 = vmatpush1.bf16.msra.mxu0 0
  %127 = vmatprep.subr.bf16.mxu0 0
  %128 = vmatpush1.bf16.msra.mxu0 0
  %129 = vmatprep.subr.bf16.mxu0 0
  %130 = vmatpush1.bf16.msra.mxu0 0
  %131 = vmatprep.subr.bf16.mxu0 0
  %132 = vmatpush1.bf16.msra.mxu0 0
  %133 = vmatprep.subr.bf16.mxu0 0
  %134 = vmatpush1.bf16.msra.mxu0 0
  %135 = vmatprep.subr.bf16.mxu0 0
  %136 = vmatpush1.bf16.msra.mxu0 0
  %137 = vmatprep.mubr.bf16.mxu0 0
  %138 = vmatmul.mubr.bf16.gmra.mrb[0].mxu0 %v53
  %v139 = vpop.f32.mrb[0].mxu0
  %v140 = vadd.f32 %v43, %v139
  %v141 = vpop.f32.mrb[0].mxu0
  %v142 = vpop.f32.mrb[0].mxu0
  %v143 = vadd.f32 %v43, %v142
  %v144 = vpop.f32.mrb[0].mxu0
  %145 = vmatprep.mubr.bf16.mxu0 0
  %146 = vmatmul.mubr.bf16.gmra.mrb[0].mxu0 %v54
  %v147 = vpop.f32.mrb[0].mxu0
  %v148 = vadd.f32 %v43, %v147
  %v149 = vpop.f32.mrb[0].mxu0
  %v150 = vpop.f32.mrb[0].mxu0
  %v151 = vadd.f32 %v43, %v150
  %v152 = vpop.f32.mrb[0].mxu0
  %153 = vdwg.mxu0
  %v154 = vld [vmem:[%s3] sm:$0xf]
  %v155 = vld [vmem:[%s3 + $0x4] sm:$0xf]
  %v156 = vld [vmem:[%s3 + $0x8] sm:$0xf]
  %v157 = vld [vmem:[%s3 + $0xc] sm:$0xf]
  %v158 = vunpack.c.l.bf16 %v154
  %v159 = vunpack.c.l.bf16 %v155
  %v160 = vunpack.c.l.bf16 %v156
  %v161 = vunpack.c.l.bf16 %v157
  %v162 = vadd.f32 %v140, %v158
  %v163 = vadd.f32 %v143, %v159
  %v164 = vadd.f32 %v148, %v160
  %v165 = vadd.f32 %v151, %v161
  %v166 = vmax.f32 %v162, 0.0
  %v167 = vmax.f32 %v163, 0.0
  %v168 = vmax.f32 %v164, 0.0
  %v169 = vmax.f32 %v165, 0.0
  %v170 = vpack.c.bf16 %v167, %v166
  %v171 = vpack.c.bf16 %v169, %v168
  %v174 = vunpack.c.l.b16 %v170
  %v175 = vunpack.c.h.b16 %v170
  %v176 = vunpack.c.l.b16 %v171
  %v177 = vunpack.c.h.b16 %v171
  %v178 = vpack.c.b16 %v174, %v174
  %v179 = vpack.c.b16 %v175, %v175
  %v180 = vpack.c.b16 %v176, %v176
  %v181 = vpack.c.b16 %v177, %v177
  %186 = vst [vmem:[%s4] sm:$0xf] %v178
  %187 = vst [vmem:[%s4 + $0x4] sm:$0xf] %v179
  %188 = vst [vmem:[%s4 + $0x8] sm:$0xf] %v180
  %189 = vst [vmem:[%s4 + $0xc] sm:$0xf] %v181
  // Predicated region
  $region18: #{blocks_forward.10} parent=0 // pred_check
    _
  $region19: #{blocks_forward.10} parent=0 // pred_check_branch
    %191 = sbr.rel (0) target = $region21
  $region20: #{blocks_forward.10} parent=0 // pred_region
    _
  $region21: #{blocks_forward.10} parent=0 // pred_fallthru
    _
  // Predicated region
  $region22: #{blocks_forward.10} parent=0 // pred_check
    _
  $region23: #{blocks_forward.10} parent=0 // pred_check_branch
    %193 = sbr.rel (0) target = $region25
  $region24: #{blocks_forward.10} parent=0 // pred_region
    _
  $region25: #{blocks_forward.10} parent=0 // pred_fallthru
    _

// kernel: blocks_forward.9
$region0: #{blocks_forward.9}
  #allocation0 [shape = 'u32[]', space=smem, size = 0x4, offset = 0x4, fixed_abs, tag = 'smem constant byte address 0x4 - core index']
  #allocation1 [shape = 'u32[144,128]{1,0:T(1,128)}', space=vmem, size = 0x12000, scoped, tag = 'internal scratch']
  %s0 = inlined_call_operand.vmem [shape: bf16[8,26,128], index: 0, kind: input, shape index: {}]
  %s1 = inlined_call_operand.vmem [shape: bf16[9,128,128], index: 1, kind: input, shape index: {}]
  %s2 = inlined_call_operand.vmem [shape: f32[1,128], index: 2, kind: input, shape index: {}]
  %s3 = inlined_call_operand.vmem [shape: bf16[2,20,128], index: 3, kind: output, shape index: {}]
  %s4 = sld [smem:[#allocation0]]
  $region45: #{blocks_forward.9} parent=0
    _
  %s6 = ssub.s32 1, %s4
  %s7 = scalar_select 0, %s6, %s4
  loop: start=0, step=1, limit=4
  $region2: #{blocks_forward.9} parent=0 // loop_pre_header
    _
  $region3: #{blocks_forward.9} parent=0 // loop_header
    %s9 = sphi 0, %s13
    %p10 = scmp.ge.s32.totalorder %s9, 4
    %s16 = sphi 0, %s28
    %s17 = sphi 0, %s24
    %s18 = sphi 0, %s16
    %s19 = sphi 0, %s17
    %s20 = sphi 0, %s18
    %s21 = sphi 0, %s19
    %s31 = sphi 0, %s33
    %s34 = sphi 0, %s31
    %s35 = sphi 0, %s34
    %s51 = sphi 0, %s35
    %s57 = sphi 0, %s59
    %s60 = sphi 0, %s57
    %s61 = sphi 0, %s60
    %s77 = sphi 0, %s61
    %s83 = sphi 0, %s85
    %s86 = sphi 0, %s83
    %s87 = sphi 0, %s86
    %s103 = sphi 0, %s87
    %s111 = sphi 0, %s113
    %s114 = sphi 0, %s111
    %s115 = sphi 0, %s114
    %s131 = sphi 0, %s115
  $region4: #{blocks_forward.9} parent=0 // loop_header_branch
    %12 = sbr.rel (%p10) target = $region8
  $region5: #{blocks_forward.9} parent=0 // loop_body
    %s14 = ssub.s32 %s9, 1
    %s15 = ssub.s32 %s9, 2
    %s22 = sadd.s32 1, %s17
    %p23 = scmp.ge.s32.totalorder %s22, 1
    %s24 = scalar_select %p23, 0, %s22
    %s25 = sadd.s32 1, %s16
    %s26 = scalar_select %p23, %s25, %s16
    %p27 = scmp.ge.s32.totalorder %s26, 2
    %s28 = scalar_select %p27, 0, %s26
    %s29 = ssub.s32 %s16, %s28
    %p30 = scmp.eq.s32.totalorder %s29, 0
    %s32 = sadd.s32 %s31, 1
    %s33 = scalar_select %p30, %s31, %s32
    %p36 = pneg %p30
    %p37 = scmp.eq.s32.totalorder %s9, 1
    %p38 = por %p36, %p37
    %p39 = scmp.ne.s32.totalorder %s31, %s34
    %p40 = scmp.eq.s32.totalorder %s9, 0
    %p41 = por %p39, %p40
    %p42 = scmp.ne.s32.totalorder %s31, %s34
    %p43 = scmp.eq.s32.totalorder %s14, 1
    %p44 = por %p42, %p43
    %p45 = scmp.ne.s32.totalorder %s34, %s35
    %p46 = scmp.eq.s32.totalorder %s14, 0
    %p47 = por %p45, %p46
    %p48 = scmp.ne.s32.totalorder %s34, %s35
    %p49 = scmp.eq.s32.totalorder %s15, 1
    %p50 = por %p48, %p49
    %p52 = scmp.ne.s32.totalorder %s35, %s51
    %p53 = scmp.eq.s32.totalorder %s15, 0
    %p54 = por %p52, %p53
    %s55 = ssub.s32 %s17, %s24
    %p56 = scmp.eq.s32.totalorder %s55, 0
    %s58 = sadd.s32 %s57, 1
    %s59 = scalar_select %p56, %s57, %s58
    %p62 = pneg %p56
    %p63 = scmp.eq.s32.totalorder %s9, 1
    %p64 = por %p62, %p63
    %p65 = scmp.ne.s32.totalorder %s57, %s60
    %p66 = scmp.eq.s32.totalorder %s9, 0
    %p67 = por %p65, %p66
    %p68 = scmp.ne.s32.totalorder %s57, %s60
    %p69 = scmp.eq.s32.totalorder %s14, 1
    %p70 = por %p68, %p69
    %p71 = scmp.ne.s32.totalorder %s60, %s61
    %p72 = scmp.eq.s32.totalorder %s14, 0
    %p73 = por %p71, %p72
    %p74 = scmp.ne.s32.totalorder %s60, %s61
    %p75 = scmp.eq.s32.totalorder %s15, 1
    %p76 = por %p74, %p75
    %p78 = scmp.ne.s32.totalorder %s61, %s77
    %p79 = scmp.eq.s32.totalorder %s15, 0
    %p80 = por %p78, %p79
    %s81 = ssub.s32 %s17, %s24
    %p82 = scmp.eq.s32.totalorder %s81, 0
    %s84 = sadd.s32 %s83, 1
    %s85 = scalar_select %p82, %s83, %s84
    %p88 = pneg %p82
    %p89 = scmp.eq.s32.totalorder %s9, 1
    %p90 = por %p88, %p89
    %p91 = scmp.ne.s32.totalorder %s83, %s86
    %p92 = scmp.eq.s32.totalorder %s9, 0
    %p93 = por %p91, %p92
    %p94 = scmp.ne.s32.totalorder %s83, %s86
    %p95 = scmp.eq.s32.totalorder %s14, 1
    %p96 = por %p94, %p95
    %p97 = scmp.ne.s32.totalorder %s86, %s87
    %p98 = scmp.eq.s32.totalorder %s14, 0
    %p99 = por %p97, %p98
    %p100 = scmp.ne.s32.totalorder %s86, %s87
    %p101 = scmp.eq.s32.totalorder %s15, 1
    %p102 = por %p100, %p101
    %p104 = scmp.ne.s32.totalorder %s87, %s103
    %p105 = scmp.eq.s32.totalorder %s15, 0
    %p106 = por %p104, %p105
    %s107 = ssub.s32 %s16, %s28
    %s108 = ssub.s32 %s17, %s24
    %s109 = sor.u32 %s107, %s108
    %p110 = scmp.eq.s32.totalorder %s109, 0
    %s112 = sadd.s32 %s111, 1
    %s113 = scalar_select %p110, %s111, %s112
    %p116 = pneg %p110
    %p117 = scmp.eq.s32.totalorder %s9, 1
    %p118 = por %p116, %p117
    %p119 = scmp.ne.s32.totalorder %s111, %s114
    %p120 = scmp.eq.s32.totalorder %s9, 0
    %p121 = por %p119, %p120
    %p122 = scmp.ne.s32.totalorder %s111, %s114
    %p123 = scmp.eq.s32.totalorder %s14, 1
    %p124 = por %p122, %p123
    %p125 = scmp.ne.s32.totalorder %s114, %s115
    %p126 = scmp.eq.s32.totalorder %s14, 0
    %p127 = por %p125, %p126
    %p128 = scmp.ne.s32.totalorder %s114, %s115
    %p129 = scmp.eq.s32.totalorder %s15, 1
    %p130 = por %p128, %p129
    %p132 = scmp.ne.s32.totalorder %s115, %s131
    %p133 = scmp.eq.s32.totalorder %s15, 0
    %p134 = por %p132, %p133
    %p135 = scmp.le.s32.totalorder 1, %s9
    %p136 = scmp.lt.s32.totalorder %s9, 3
    %p137 = pnand %p135, %p136
    %p138 = pneg %p137
    // Predicated region
    $region9: #{blocks_forward.9} parent=5 // pred_check
      _
    $region10: #{blocks_forward.9} parent=5 // pred_check_branch
      %140 = sbr.rel (%p137) target = $region12
    $region11: #{blocks_forward.9} parent=5 // pred_region
      %s141 = ssub.s32 %s9, 1
      // Predicated region
      $region13: #{blocks_forward.9} parent=11 // pred_check
        %p142 = pneg %p73
      $region14: #{blocks_forward.9} parent=11 // pred_check_branch
        %144 = sbr.rel (%p142) target = $region16
      $region15: #{blocks_forward.9} parent=11 // pred_region
        %p145 = scmp.lt.s32.totalorder %s19, 0
        %s146 = scalar_select %p145, %s19, 0
        %s147 = smul.addr %s146, 4
        %s148 = scalar_lea.vmem %s1, %s147
      $region16: #{blocks_forward.9} parent=11 // pred_fallthru
        _
      // Predicated region
      $region17: #{blocks_forward.9} parent=11 // pred_check
        %p149 = pneg %p99
      $region18: #{blocks_forward.9} parent=11 // pred_check_branch
        %151 = sbr.rel (%p149) target = $region20
      $region19: #{blocks_forward.9} parent=11 // pred_region
        %p152 = scmp.lt.s32.totalorder %s19, 0
        %s153 = scalar_select %p152, %s19, 0
        %s154 = scalar_lea.vmem %s2, %s153
      $region20: #{blocks_forward.9} parent=11 // pred_fallthru
        _
    $region12: #{blocks_forward.9} parent=5 // pred_fallthru
      _
    %p155 = scmp.lt.s32.totalorder %s9, 2
    // Predicated region
    $region21: #{blocks_forward.9} parent=5 // pred_check
      %p156 = pneg %p155
    $region22: #{blocks_forward.9} parent=5 // pred_check_branch
      %158 = sbr.rel (%p156) target = $region24
    $region23: #{blocks_forward.9} parent=5 // pred_region
      // Predicated region
      $region25: #{blocks_forward.9} parent=23 // pred_check
        %p159 = pneg %p41
      $region26: #{blocks_forward.9} parent=23 // pred_check_branch
        %161 = sbr.rel (%p159) target = $region28
      $region27: #{blocks_forward.9} parent=23 // pred_region
        %s162 = smul.u32 4, %s16
        %p163 = scmp.lt.s32.totalorder %s162, 7
        %s164 = scalar_select %p163, %s162, 7
        %s165 = smul.addr %s164, 4
        %s166 = smul.addr %s165, 4
        %s167 = scalar_lea.vmem %s0, %s166
        %s168 = smul.u32 4, %s16
      $region28: #{blocks_forward.9} parent=23 // pred_fallthru
        _
    $region24: #{blocks_forward.9} parent=5 // pred_fallthru
      _
    %p169 = scmp.le.s32.totalorder 1, %s9
    %p170 = scmp.lt.s32.totalorder %s9, 3
    %p171 = pnand %p169, %p170
    %p172 = pneg %p171
    // Predicated region
    $region29: #{blocks_forward.9} parent=5 // pred_check
      _
    $region30: #{blocks_forward.9} parent=5 // pred_check_branch
      %174 = sbr.rel (%p171) target = $region32
    $region31: #{blocks_forward.9} parent=5 // pred_region
      %s175 = ssub.s32 %s9, 1
      %s176 = smul.u32 4, %s18
      %p177 = scmp.lt.s32.totalorder %s176, 7
      %s178 = scalar_select %p177, %s176, 7
      %s179 = smul.addr %s178, 4
      %s180 = smul.addr %s179, 4
      %s181 = scalar_lea.vmem %s0, %s180
      %p182 = pneg %p47
      %p183 = pneg %p44
      %p184 = scmp.lt.s32.totalorder %s19, 0
      %s185 = scalar_select %p184, %s19, 0
      %s186 = smul.addr %s185, 4
      %s187 = scalar_lea.vmem %s1, %s186
      %p188 = pneg %p73
      %p189 = pneg %p70
      %p190 = scmp.lt.s32.totalorder %s19, 0
      %s191 = scalar_select %p190, %s19, 0
      %s192 = scalar_lea.vmem %s2, %s191
      %p193 = pneg %p99
      %p194 = pneg %p96
      %p195 = pneg %p127
      %p196 = pneg %p124
      %p197 = scmp.lt.s32.totalorder %s18, 1
      %s198 = scalar_select %p197, %s18, 1
      %p199 = scmp.lt.s32.totalorder %s19, 0
      %s200 = scalar_select %p199, %s19, 0
      %s201 = smul.addr %s198, 3
      %s202 = sadd.s32 %s200, %s201
      %s203 = smul.addr %s202, 4
      %s204 = scalar_lea.vmem %s3, %s203
      %s205 = smul.u32 4, %s18
      %p206 = scmp.lt.s32.totalorder %s205, 7
      %s207 = scalar_select %p206, %s205, 7
      %s208 = smul.addr %s207, 4
      %s209 = smul.addr %s208, 4
      %s210 = scalar_lea.vmem %s0, %s209
      %s211 = smul.u32 4, %s18
      %p212 = scmp.lt.s32.totalorder %s19, 0
      %s213 = scalar_select %p212, %s19, 0
      %s214 = smul.addr %s213, 4
      %s215 = scalar_lea.vmem %s1, %s214
      %p216 = scmp.lt.s32.totalorder %s19, 0
      %s217 = scalar_select %p216, %s19, 0
      %s218 = scalar_lea.vmem %s2, %s217
      %p219 = scmp.lt.s32.totalorder %s18, 1
      %s220 = scalar_select %p219, %s18, 1
      %p221 = scmp.lt.s32.totalorder %s19, 0
      %s222 = scalar_select %p221, %s19, 0
      %s223 = smul.addr %s220, 3
      %s224 = sadd.s32 %s222, %s223
      %s225 = smul.addr %s224, 4
      %s226 = scalar_lea.vmem %s3, %s225
      %v228 = vld [vmem:[%s210] sm:$0xf]
      %v229 = vld [vmem:[%s210 + $0x4] sm:$0xf]
      %v230 = vld [vmem:[%s210 + $0x8] sm:$0x3]
      %v231 = vld [vmem:[%s215] sm:$0xf]
      %v232 = vld [vmem:[%s215 + $0x4] sm:$0xf]
      %v233 = vld [vmem:[%s215 + $0x8] sm:$0xf]
      %v234 = vld [vmem:[%s215 + $0xc] sm:$0xf]
      %v235 = vld [vmem:[%s215 + $0x10] sm:$0xf]
      %v236 = vld [vmem:[%s215 + $0x14] sm:$0xf]
      %v237 = vld [vmem:[%s215 + $0x18] sm:$0xf]
      %v238 = vld [vmem:[%s215 + $0x1c] sm:$0xf]
      %v239 = vld [vmem:[%s215 + $0x20] sm:$0xf]
      %v240 = vld [vmem:[%s215 + $0x24] sm:$0xf]
      %v241 = vld [vmem:[%s215 + $0x28] sm:$0xf]
      %v242 = vld [vmem:[%s215 + $0x2c] sm:$0xf]
      %v243 = vld [vmem:[%s215 + $0x30] sm:$0xf]
      %v244 = vld [vmem:[%s215 + $0x34] sm:$0xf]
      %v245 = vld [vmem:[%s215 + $0x38] sm:$0xf]
      %v246 = vld [vmem:[%s215 + $0x3c] sm:$0xf]
      %s247 = scalar_lea.vmem %s210, 16
      %v248 = vld [vmem:[%s247] sm:$0xf]
      %v249 = vld [vmem:[%s247 + $0x4] sm:$0xf]
      %v250 = vld [vmem:[%s247 + $0x8] sm:$0x3]
      %s251 = scalar_lea.vmem %s215, 64
      %v252 = vld [vmem:[%s251] sm:$0xf]
      %v253 = vld [vmem:[%s251 + $0x4] sm:$0xf]
      %v254 = vld [vmem:[%s251 + $0x8] sm:$0xf]
      %v255 = vld [vmem:[%s251 + $0xc] sm:$0xf]
      %v256 = vld [vmem:[%s251 + $0x10] sm:$0xf]
      %v257 = vld [vmem:[%s251 + $0x14] sm:$0xf]
      %v258 = vld [vmem:[%s251 + $0x18] sm:$0xf]
      %v259 = vld [vmem:[%s251 + $0x1c] sm:$0xf]
      %v260 = vld [vmem:[%s251 + $0x20] sm:$0xf]
      %v261 = vld [vmem:[%s251 + $0x24] sm:$0xf]
      %v262 = vld [vmem:[%s251 + $0x28] sm:$0xf]
      %v263 = vld [vmem:[%s251 + $0x2c] sm:$0xf]
      %v264 = vld [vmem:[%s251 + $0x30] sm:$0xf]
      %v265 = vld [vmem:[%s251 + $0x34] sm:$0xf]
      %v266 = vld [vmem:[%s251 + $0x38] sm:$0xf]
      %v267 = vld [vmem:[%s251 + $0x3c] sm:$0xf]
      %v271 = vunpack.c.l.b16 %v248
      %v272 = vunpack.c.l.b16 %v249
      %v273 = vunpack.c.l.b16 %v250
      %v274 = vpack.c.b16 %v272, %v271
      %v275 = vpack.c.b16 %v273, %v273
      %v294 = vunpack.c.l.b16 %v252
      %v295 = vunpack.c.l.b16 %v253
      %v296 = vunpack.c.l.b16 %v254
      %v297 = vunpack.c.l.b16 %v255
      %v298 = vunpack.c.l.b16 %v256
      %v299 = vunpack.c.l.b16 %v257
      %v300 = vunpack.c.l.b16 %v258
      %v301 = vunpack.c.l.b16 %v259
      %v302 = vunpack.c.l.b16 %v260
      %v303 = vunpack.c.l.b16 %v261
      %v304 = vunpack.c.l.b16 %v262
      %v305 = vunpack.c.l.b16 %v263
      %v306 = vunpack.c.l.b16 %v264
      %v307 = vunpack.c.l.b16 %v265
      %v308 = vunpack.c.l.b16 %v266
      %v309 = vunpack.c.l.b16 %v267
      %v310 = vpack.c.b16 %v295, %v294
      %v311 = vpack.c.b16 %v297, %v296
      %v312 = vpack.c.b16 %v299, %v298
      %v313 = vpack.c.b16 %v301, %v300
      %v314 = vpack.c.b16 %v303, %v302
      %v315 = vpack.c.b16 %v305, %v304
      %v316 = vpack.c.b16 %v307, %v306
      %v317 = vpack.c.b16 %v309, %v308
      %326 = vmatprep.subr.bf16.mxu0 0
      %327 = vmatpush1.bf16.msra.mxu0 %v310
      %328 = vmatprep.subr.bf16.mxu0 0
      %329 = vmatpush1.bf16.msra.mxu0 %v311
      %330 = vmatprep.subr.bf16.mxu0 0
      %331 = vmatpush1.bf16.msra.mxu0 %v312
      %332 = vmatprep.subr.bf16.mxu0 0
      %333 = vmatpush1.bf16.msra.mxu0 %v313
      %334 = vmatprep.subr.bf16.mxu0 0
      %335 = vmatpush1.bf16.msra.mxu0 %v314
      %336 = vmatprep.subr.bf16.mxu0 0
      %337 = vmatpush1.bf16.msra.mxu0 %v315
      %338 = vmatprep.subr.bf16.mxu0 0
      %339 = vmatpush1.bf16.msra.mxu0 %v316
      %340 = vmatprep.subr.bf16.mxu0 0
      %341 = vmatpush1.bf16.msra.mxu0 %v317
      %342 = vmatprep.subr.bf16.mxu0 0
      %343 = vmatpush1.bf16.msra.mxu0 0
      %344 = vmatprep.subr.bf16.mxu0 0
      %345 = vmatpush1.bf16.msra.mxu0 0
      %346 = vmatprep.subr.bf16.mxu0 0
      %347 = vmatpush1.bf16.msra.mxu0 0
      %348 = vmatprep.subr.bf16.mxu0 0
      %349 = vmatpush1.bf16.msra.mxu0 0
      %350 = vmatprep.subr.bf16.mxu0 0
      %351 = vmatpush1.bf16.msra.mxu0 0
      %352 = vmatprep.subr.bf16.mxu0 0
      %353 = vmatpush1.bf16.msra.mxu0 0
      %354 = vmatprep.subr.bf16.mxu0 0
      %355 = vmatpush1.bf16.msra.mxu0 0
      %356 = vmatprep.subr.bf16.mxu0 0
      %357 = vmatpush1.bf16.msra.mxu0 0
      %358 = vmatprep.mubr.bf16.mxu0 0
      %359 = vmatmul.mubr.bf16.gmra.mrb[0].mxu0 %v274
      %v360 = vpop.f32.mrb[0].mxu0
      %v361 = vadd.f32 0.0, %v360
      %v362 = vpop.f32.mrb[0].mxu0
      %v363 = vpop.f32.mrb[0].mxu0
      %v364 = vadd.f32 0.0, %v363
      %v365 = vpop.f32.mrb[0].mxu0
      %366 = vmatprep.mubr.bf16.mxu0 0
      %367 = vmatmul.mubr.bf16.gmra.mrb[0].mxu0 %v275
      %v368 = vpop.f32.mrb[0].mxu0
      %v369 = vadd.f32 0.0, %v368
      %v370 = vpop.f32.mrb[0].mxu0
      %v371 = vpop.f32.mrb[0].mxu0
      %v372 = vpop.f32.mrb[0].mxu0
      %373 = vdwg.mxu0
      %v377 = vunpack.c.l.b16 %v228
      %v378 = vunpack.c.l.b16 %v229
      %v379 = vunpack.c.l.b16 %v230
      %v380 = vpack.c.b16 %v378, %v377
      %v381 = vpack.c.b16 %v379, %v379
      %v400 = vunpack.c.l.b16 %v231
      %v401 = vunpack.c.l.b16 %v232
      %v402 = vunpack.c.l.b16 %v233
      %v403 = vunpack.c.l.b16 %v234
      %v404 = vunpack.c.l.b16 %v235
      %v405 = vunpack.c.l.b16 %v236
      %v406 = vunpack.c.l.b16 %v237
      %v407 = vunpack.c.l.b16 %v238
      %v408 = vunpack.c.l.b16 %v239
      %v409 = vunpack.c.l.b16 %v240
      %v410 = vunpack.c.l.b16 %v241
      %v411 = vunpack.c.l.b16 %v242
      %v412 = vunpack.c.l.b16 %v243
      %v413 = vunpack.c.l.b16 %v244
      %v414 = vunpack.c.l.b16 %v245
      %v415 = vunpack.c.l.b16 %v246
      %v416 = vpack.c.b16 %v401, %v400
      %v417 = vpack.c.b16 %v403, %v402
      %v418 = vpack.c.b16 %v405, %v404
      %v419 = vpack.c.b16 %v407, %v406
      %v420 = vpack.c.b16 %v409, %v408
      %v421 = vpack.c.b16 %v411, %v410
      %v422 = vpack.c.b16 %v413, %v412
      %v423 = vpack.c.b16 %v415, %v414
      %432 = vmatprep.subr.bf16.mxu0 0
      %433 = vmatpush1.bf16.msra.mxu0 %v416
      %434 = vmatprep.subr.bf16.mxu0 0
      %435 = vmatpush1.bf16.msra.mxu0 %v417
      %436 = vmatprep.subr.bf16.mxu0 0
      %437 = vmatpush1.bf16.msra.mxu0 %v418
      %438 = vmatprep.subr.bf16.mxu0 0
      %439 = vmatpush1.bf16.msra.mxu0 %v419
      %440 = vmatprep.subr.bf16.mxu0 0
      %441 = vmatpush1.bf16.msra.mxu0 %v420
      %442 = vmatprep.subr.bf16.mxu0 0
      %443 = vmatpush1.bf16.msra.mxu0 %v421
      %444 = vmatprep.subr.bf16.mxu0 0
      %445 = vmatpush1.bf16.msra.mxu0 %v422
      %446 = vmatprep.subr.bf16.mxu0 0
      %447 = vmatpush1.bf16.msra.mxu0 %v423
      %448 = vmatprep.subr.bf16.mxu0 0
      %449 = vmatpush1.bf16.msra.mxu0 0
      %450 = vmatprep.subr.bf16.mxu0 0
      %451 = vmatpush1.bf16.msra.mxu0 0
      %452 = vmatprep.subr.bf16.mxu0 0
      %453 = vmatpush1.bf16.msra.mxu0 0
      %454 = vmatprep.subr.bf16.mxu0 0
      %455 = vmatpush1.bf16.msra.mxu0 0
      %456 = vmatprep.subr.bf16.mxu0 0
      %457 = vmatpush1.bf16.msra.mxu0 0
      %458 = vmatprep.subr.bf16.mxu0 0
      %459 = vmatpush1.bf16.msra.mxu0 0
      %460 = vmatprep.subr.bf16.mxu0 0
      %461 = vmatpush1.bf16.msra.mxu0 0
      %462 = vmatprep.subr.bf16.mxu0 0
      %463 = vmatpush1.bf16.msra.mxu0 0
      %464 = vmatprep.mubr.bf16.mxu0 0
      %465 = vmatmul.mubr.bf16.gmra.mrb[0].mxu0 %v380
      %v466 = vpop.f32.mrb[0].mxu0
      %v467 = vadd.f32 %v361, %v466
      %v468 = vpop.f32.mrb[0].mxu0
      %v469 = vpop.f32.mrb[0].mxu0
      %v470 = vadd.f32 %v364, %v469
      %v471 = vpop.f32.mrb[0].mxu0
      %472 = vmatprep.mubr.bf16.mxu0 0
      %473 = vmatmul.mubr.bf16.gmra.mrb[0].mxu0 %v381
      %v474 = vpop.f32.mrb[0].mxu0
      %v475 = vadd.f32 %v369, %v474
      %v476 = vpop.f32.mrb[0].mxu0
      %v477 = vpop.f32.mrb[0].mxu0
      %v478 = vpop.f32.mrb[0].mxu0
      %479 = vdwg.mxu0
      %v480 = vld [vmem:[%s210 + $0x8] sm:$0x7]
      %s481 = scalar_lea.vmem %s215, 128
      %v482 = vld [vmem:[%s481] sm:$0xf]
      %v483 = vld [vmem:[%s481 + $0x4] sm:$0xf]
      %v484 = vld [vmem:[%s481 + $0x8] sm:$0xf]
      %v485 = vld [vmem:[%s481 + $0xc] sm:$0xf]
      %v486 = vld [vmem:[%s481 + $0x10] sm:$0xf]
      %v487 = vld [vmem:[%s481 + $0x14] sm:$0xf]
      %v488 = vld [vmem:[%s481 + $0x18] sm:$0xf]
      %v489 = vld [vmem:[%s481 + $0x1c] sm:$0xf]
      %v490 = vld [vmem:[%s481 + $0x20] sm:$0xf]
      %v491 = vld [vmem:[%s481 + $0x24] sm:$0xf]
      %v492 = vld [vmem:[%s481 + $0x28] sm:$0xf]
      %v493 = vld [vmem:[%s481 + $0x2c] sm:$0xf]
      %v494 = vld [vmem:[%s481 + $0x30] sm:$0xf]
      %v495 = vld [vmem:[%s481 + $0x34] sm:$0xf]
      %v496 = vld [vmem:[%s481 + $0x38] sm:$0xf]
      %v497 = vld [vmem:[%s481 + $0x3c] sm:$0xf]
      %v499 = vunpack.c.l.b16 %v480
      %v500 = vpack.c.b16 %v499, %v499
      %vm501 = vsmask.f32 7424
      %v503 = vshrl.u32 %v380, 16
      %v505 = vshll.u32 %v380, 16
      %v507 = vrot.slane %v505, 1
      %v508 = vor.u32 %v503, %v507
      %v510 = vshll.u32 %v500, 16
      %v512 = vrot.slane %v510, 1
      %v513 = vsel %vm501, %v508, %v512
      %v514 = vshrl.u32 %v500, 16
      %v516 = vor.u32 %v514, %v512
      %v535 = vunpack.c.l.b16 %v482
      %v536 = vunpack.c.l.b16 %v483
      %v537 = vunpack.c.l.b16 %v484
      %v538 = vunpack.c.l.b16 %v485
      %v539 = vunpack.c.l.b16 %v486
      %v540 = vunpack.c.l.b16 %v487
      %v541 = vunpack.c.l.b16 %v488
      %v542 = vunpack.c.l.b16 %v489
      %v543 = vunpack.c.l.b16 %v490
      %v544 = vunpack.c.l.b16 %v491
      %v545 = vunpack.c.l.b16 %v492
      %v546 = vunpack.c.l.b16 %v493
      %v547 = vunpack.c.l.b16 %v494
      %v548 = vunpack.c.l.b16 %v495
      %v549 = vunpack.c.l.b16 %v496
      %v550 = vunpack.c.l.b16 %v497
      %v551 = vpack.c.b16 %v536, %v535
      %v552 = vpack.c.b16 %v538, %v537
      %v553 = vpack.c.b16 %v540, %v539
      %v554 = vpack.c.b16 %v542, %v541
      %v555 = vpack.c.b16 %v544, %v543
      %v556 = vpack.c.b16 %v546, %v545
      %v557 = vpack.c.b16 %v548, %v547
      %v558 = vpack.c.b16 %v550, %v549
      %567 = vmatprep.subr.bf16.mxu0 0
      %568 = vmatpush1.bf16.msra.mxu0 %v551
      %569 = vmatprep.subr.bf16.mxu0 0
      %570 = vmatpush1.bf16.msra.mxu0 %v552
      %571 = vmatprep.subr.bf16.mxu0 0
      %572 = vmatpush1.bf16.msra.mxu0 %v553
      %573 = vmatprep.subr.bf16.mxu0 0
      %574 = vmatpush1.bf16.msra.mxu0 %v554
      %575 = vmatprep.subr.bf16.mxu0 0
      %576 = vmatpush1.bf16.msra.mxu0 %v555
      %577 = vmatprep.subr.bf16.mxu0 0
      %578 = vmatpush1.bf16.msra.mxu0 %v556
      %579 = vmatprep.subr.bf16.mxu0 0
      %580 = vmatpush1.bf16.msra.mxu0 %v557
      %581 = vmatprep.subr.bf16.mxu0 0
      %582 = vmatpush1.bf16.msra.mxu0 %v558
      %583 = vmatprep.subr.bf16.mxu0 0
      %584 = vmatpush1.bf16.msra.mxu0 0
      %585 = vmatprep.subr.bf16.mxu0 0
      %586 = vmatpush1.bf16.msra.mxu0 0
      %587 = vmatprep.subr.bf16.mxu0 0
      %588 = vmatpush1.bf16.msra.mxu0 0
      %589 = vmatprep.subr.bf16.mxu0 0
      %590 = vmatpush1.bf16.msra.mxu0 0
      %591 = vmatprep.subr.bf16.mxu0 0
      %592 = vmatpush1.bf16.msra.mxu0 0
      %593 = vmatprep.subr.bf16.mxu0 0
      %594 = vmatpush1.bf16.msra.mxu0 0
      %595 = vmatprep.subr.bf16.mxu0 0
      %596 = vmatpush1.bf16.msra.mxu0 0
      %597 = vmatprep.subr.bf16.mxu0 0
      %598 = vmatpush1.bf16.msra.mxu0 0
      %599 = vmatprep.mubr.bf16.mxu0 0
      %600 = vmatmul.mubr.bf16.gmra.mrb[0].mxu0 %v513
      %v601 = vpop.f32.mrb[0].mxu0
      %v602 = vadd.f32 0.0, %v601
      %v603 = vpop.f32.mrb[0].mxu0
      %v604 = vpop.f32.mrb[0].mxu0
      %v605 = vadd.f32 0.0, %v604
      %v606 = vpop.f32.mrb[0].mxu0
      %607 = vmatprep.mubr.bf16.mxu0 0
      %608 = vmatmul.mubr.bf16.gmra.mrb[0].mxu0 %v516
      %v609 = vpop.f32.mrb[0].mxu0
      %v610 = vadd.f32 0.0, %v609
      %v611 = vpop.f32.mrb[0].mxu0
      %v612 = vpop.f32.mrb[0].mxu0
      %v613 = vpop.f32.mrb[0].mxu0
      %614 = vdwg.mxu0
      %v615 = vadd.f32 %v467, %v602
      %v616 = vadd.f32 %v470, %v605
      %v617 = vadd.f32 %v475, %v610
      %s618 = scalar_lea.vmem %s210, 32
      %v619 = vld [vmem:[%s618] sm:$0xf]
      %v620 = vld [vmem:[%s618 + $0x4] sm:$0xf]
      %v621 = vld [vmem:[%s618 + $0x8] sm:$0x3]
      %s622 = scalar_lea.vmem %s215, 192
      %v623 = vld [vmem:[%s622] sm:$0xf]
      %v624 = vld [vmem:[%s622 + $0x4] sm:$0xf]
      %v625 = vld [vmem:[%s622 + $0x8] sm:$0xf]
      %v626 = vld [vmem:[%s622 + $0xc] sm:$0xf]
      %v627 = vld [vmem:[%s622 + $0x10] sm:$0xf]
      %v628 = vld [vmem:[%s622 + $0x14] sm:$0xf]
      %v629 = vld [vmem:[%s622 + $0x18] sm:$0xf]
      %v630 = vld [vmem:[%s622 + $0x1c] sm:$0xf]
      %v631 = vld [vmem:[%s622 + $0x20] sm:$0xf]
      %v632 = vld [vmem:[%s622 + $0x24] sm:$0xf]
      %v633 = vld [vmem:[%s622 + $0x28] sm:$0xf]
      %v634 = vld [vmem:[%s622 + $0x2c] sm:$0xf]
      %v635 = vld [vmem:[%s622 + $0x30] sm:$0xf]
      %v636 = vld [vmem:[%s622 + $0x34] sm:$0xf]
      %v637 = vld [vmem:[%s622 + $0x38] sm:$0xf]
      %v638 = vld [vmem:[%s622 + $0x3c] sm:$0xf]
      %v642 = vunpack.c.l.b16 %v619
      %v643 = vunpack.c.l.b16 %v620
      %v644 = vunpack.c.l.b16 %v621
      %v645 = vpack.c.b16 %v643, %v642
      %v646 = vpack.c.b16 %v644, %v644
      %v665 = vunpack.c.l.b16 %v623
      %v666 = vunpack.c.l.b16 %v624
      %v667 = vunpack.c.l.b16 %v625
      %v668 = vunpack.c.l.b16 %v626
      %v669 = vunpack.c.l.b16 %v627
      %v670 = vunpack.c.l.b16 %v628
      %v671 = vunpack.c.l.b16 %v629
      %v672 = vunpack.c.l.b16 %v630
      %v673 = vunpack.c.l.b16 %v631
      %v674 = vunpack.c.l.b16 %v632
      %v675 = vunpack.c.l.b16 %v633
      %v676 = vunpack.c.l.b16 %v634
      %v677 = vunpack.c.l.b16 %v635
      %v678 = vunpack.c.l.b16 %v636
      %v679 = vunpack.c.l.b16 %v637
      %v680 = vunpack.c.l.b16 %v638
      %v681 = vpack.c.b16 %v666, %v665
      %v682 = vpack.c.b16 %v668, %v667
      %v683 = vpack.c.b16 %v670, %v669
      %v684 = vpack.c.b16 %v672, %v671
      %v685 = vpack.c.b16 %v674, %v673
      %v686 = vpack.c.b16 %v676, %v675
      %v687 = vpack.c.b16 %v678, %v677
      %v688 = vpack.c.b16 %v680, %v679
      %697 = vmatprep.subr.bf16.mxu0 0
      %698 = vmatpush1.bf16.msra.mxu0 %v681
      %699 = vmatprep.subr.bf16.mxu0 0
      %700 = vmatpush1.bf16.msra.mxu0 %v682
      %701 = vmatprep.subr.bf16.mxu0 0
      %702 = vmatpush1.bf16.msra.mxu0 %v683
      %703 = vmatprep.subr.bf16.mxu0 0
      %704 = vmatpush1.bf16.msra.mxu0 %v684
      %705 = vmatprep.subr.bf16.mxu0 0
      %706 = vmatpush1.bf16.msra.mxu0 %v685
      %707 = vmatprep.subr.bf16.mxu0 0
      %708 = vmatpush1.bf16.msra.mxu0 %v686
      %709 = vmatprep.subr.bf16.mxu0 0
      %710 = vmatpush1.bf16.msra.mxu0 %v687
      %711 = vmatprep.subr.bf16.mxu0 0
      %712 = vmatpush1.bf16.msra.mxu0 %v688
      %713 = vmatprep.subr.bf16.mxu0 0
      %714 = vmatpush1.bf16.msra.mxu0 0
      %715 = vmatprep.subr.bf16.mxu0 0
      %716 = vmatpush1.bf16.msra.mxu0 0
      %717 = vmatprep.subr.bf16.mxu0 0
      %718 = vmatpush1.bf16.msra.mxu0 0
      %719 = vmatprep.subr.bf16.mxu0 0
      %720 = vmatpush1.bf16.msra.mxu0 0
      %721 = vmatprep.subr.bf16.mxu0 0
      %722 = vmatpush1.bf16.msra.mxu0 0
      %723 = vmatprep.subr.bf16.mxu0 0
      %724 = vmatpush1.bf16.msra.mxu0 0
      %725 = vmatprep.subr.bf16.mxu0 0
      %726 = vmatpush1.bf16.msra.mxu0 0
      %727 = vmatprep.subr.bf16.mxu0 0
      %728 = vmatpush1.bf16.msra.mxu0 0
      %729 = vmatprep.mubr.bf16.mxu0 0
      %730 = vmatmul.mubr.bf16.gmra.mrb[0].mxu0 %v645
      %v731 = vpop.f32.mrb[0].mxu0
      %v732 = vadd.f32 0.0, %v731
      %v733 = vpop.f32.mrb[0].mxu0
      %v734 = vpop.f32.mrb[0].mxu0
      %v735 = vadd.f32 0.0, %v734
      %v736 = vpop.f32.mrb[0].mxu0
      %737 = vmatprep.mubr.bf16.mxu0 0
      %738 = vmatmul.mubr.bf16.gmra.mrb[0].mxu0 %v646
      %v739 = vpop.f32.mrb[0].mxu0
      %v740 = vadd.f32 0.0, %v739
      %v741 = vpop.f32.mrb[0].mxu0
      %v742 = vpop.f32.mrb[0].mxu0
      %v743 = vpop.f32.mrb[0].mxu0
      %744 = vdwg.mxu0
      %v745 = vadd.f32 %v615, %v732
      %v746 = vadd.f32 %v616, %v735
      %v747 = vadd.f32 %v617, %v740
      %s748 = scalar_lea.vmem %s210, 48
      %v749 = vld [vmem:[%s748] sm:$0xf]
      %v750 = vld [vmem:[%s748 + $0x4] sm:$0xf]
      %v751 = vld [vmem:[%s748 + $0x8] sm:$0x3]
      %s752 = scalar_lea.vmem %s215, 256
      %v753 = vld [vmem:[%s752] sm:$0xf]
      %v754 = vld [vmem:[%s752 + $0x4] sm:$0xf]
      %v755 = vld [vmem:[%s752 + $0x8] sm:$0xf]
      %v756 = vld [vmem:[%s752 + $0xc] sm:$0xf]
      %v757 = vld [vmem:[%s752 + $0x10] sm:$0xf]
      %v758 = vld [vmem:[%s752 + $0x14] sm:$0xf]
      %v759 = vld [vmem:[%s752 + $0x18] sm:$0xf]
      %v760 = vld [vmem:[%s752 + $0x1c] sm:$0xf]
      %v761 = vld [vmem:[%s752 + $0x20] sm:$0xf]
      %v762 = vld [vmem:[%s752 + $0x24] sm:$0xf]
      %v763 = vld [vmem:[%s752 + $0x28] sm:$0xf]
      %v764 = vld [vmem:[%s752 + $0x2c] sm:$0xf]
      %v765 = vld [vmem:[%s752 + $0x30] sm:$0xf]
      %v766 = vld [vmem:[%s752 + $0x34] sm:$0xf]
      %v767 = vld [vmem:[%s752 + $0x38] sm:$0xf]
      %v768 = vld [vmem:[%s752 + $0x3c] sm:$0xf]
      %v772 = vunpack.c.l.b16 %v749
      %v773 = vunpack.c.l.b16 %v750
      %v774 = vunpack.c.l.b16 %v751
      %v775 = vpack.c.b16 %v773, %v772
      %v776 = vpack.c.b16 %v774, %v774
      %v795 = vunpack.c.l.b16 %v753
      %v796 = vunpack.c.l.b16 %v754
      %v797 = vunpack.c.l.b16 %v755
      %v798 = vunpack.c.l.b16 %v756
      %v799 = vunpack.c.l.b16 %v757
      %v800 = vunpack.c.l.b16 %v758
      %v801 = vunpack.c.l.b16 %v759
      %v802 = vunpack.c.l.b16 %v760
      %v803 = vunpack.c.l.b16 %v761
      %v804 = vunpack.c.l.b16 %v762
      %v805 = vunpack.c.l.b16 %v763
      %v806 = vunpack.c.l.b16 %v764
      %v807 = vunpack.c.l.b16 %v765
      %v808 = vunpack.c.l.b16 %v766
      %v809 = vunpack.c.l.b16 %v767
      %v810 = vunpack.c.l.b16 %v768
      %v811 = vpack.c.b16 %v796, %v795
      %v812 = vpack.c.b16 %v798, %v797
      %v813 = vpack.c.b16 %v800, %v799
      %v814 = vpack.c.b16 %v802, %v801
      %v815 = vpack.c.b16 %v804, %v803
      %v816 = vpack.c.b16 %v806, %v805
      %v817 = vpack.c.b16 %v808, %v807
      %v818 = vpack.c.b16 %v810, %v809
      %827 = vmatprep.subr.bf16.mxu0 0
      %828 = vmatpush1.bf16.msra.mxu0 %v811
      %829 = vmatprep.subr.bf16.mxu0 0
      %830 = vmatpush1.bf16.msra.mxu0 %v812
      %831 = vmatprep.subr.bf16.mxu0 0
      %832 = vmatpush1.bf16.msra.mxu0 %v813
      %833 = vmatprep.subr.bf16.mxu0 0
      %834 = vmatpush1.bf16.msra.mxu0 %v814
      %835 = vmatprep.subr.bf16.mxu0 0
      %836 = vmatpush1.bf16.msra.mxu0 %v815
      %837 = vmatprep.subr.bf16.mxu0 0
      %838 = vmatpush1.bf16.msra.mxu0 %v816
      %839 = vmatprep.subr.bf16.mxu0 0
      %840 = vmatpush1.bf16.msra.mxu0 %v817
      %841 = vmatprep.subr.bf16.mxu0 0
      %842 = vmatpush1.bf16.msra.mxu0 %v818
      %843 = vmatprep.subr.bf16.mxu0 0
      %844 = vmatpush1.bf16.msra.mxu0 0
      %845 = vmatprep.subr.bf16.mxu0 0
      %846 = vmatpush1.bf16.msra.mxu0 0
      %847 = vmatprep.subr.bf16.mxu0 0
      %848 = vmatpush1.bf16.msra.mxu0 0
      %849 = vmatprep.subr.bf16.mxu0 0
      %850 = vmatpush1.bf16.msra.mxu0 0
      %851 = vmatprep.subr.bf16.mxu0 0
      %852 = vmatpush1.bf16.msra.mxu0 0
      %853 = vmatprep.subr.bf16.mxu0 0
      %854 = vmatpush1.bf16.msra.mxu0 0
      %855 = vmatprep.subr.bf16.mxu0 0
      %856 = vmatpush1.bf16.msra.mxu0 0
      %857 = vmatprep.subr.bf16.mxu0 0
      %858 = vmatpush1.bf16.msra.mxu0 0
      %859 = vmatprep.mubr.bf16.mxu0 0
      %860 = vmatmul.mubr.bf16.gmra.mrb[0].mxu0 %v775
      %v861 = vpop.f32.mrb[0].mxu0
      %v862 = vadd.f32 0.0, %v861
      %v863 = vpop.f32.mrb[0].mxu0
      %v864 = vpop.f32.mrb[0].mxu0
      %v865 = vadd.f32 0.0, %v864
      %v866 = vpop.f32.mrb[0].mxu0
      %867 = vmatprep.mubr.bf16.mxu0 0
      %868 = vmatmul.mubr.bf16.gmra.mrb[0].mxu0 %v776
      %v869 = vpop.f32.mrb[0].mxu0
      %v870 = vadd.f32 0.0, %v869
      %v871 = vpop.f32.mrb[0].mxu0
      %v872 = vpop.f32.mrb[0].mxu0
      %v873 = vpop.f32.mrb[0].mxu0
      %874 = vdwg.mxu0
      %v875 = vadd.f32 %v745, %v862
      %v876 = vadd.f32 %v746, %v865
      %v877 = vadd.f32 %v747, %v870
      %v878 = vld [vmem:[%s618 + $0x8] sm:$0x7]
      %s879 = scalar_lea.vmem %s215, 320
      %v880 = vld [vmem:[%s879] sm:$0xf]
      %v881 = vld [vmem:[%s879 + $0x4] sm:$0xf]
      %v882 = vld [vmem:[%s879 + $0x8] sm:$0xf]
      %v883 = vld [vmem:[%s879 + $0xc] sm:$0xf]
      %v884 = vld [vmem:[%s879 + $0x10] sm:$0xf]
      %v885 = vld [vmem:[%s879 + $0x14] sm:$0xf]
      %v886 = vld [vmem:[%s879 + $0x18] sm:$0xf]
      %v887 = vld [vmem:[%s879 + $0x1c] sm:$0xf]
      %v888 = vld [vmem:[%s879 + $0x20] sm:$0xf]
      %v889 = vld [vmem:[%s879 + $0x24] sm:$0xf]
      %v890 = vld [vmem:[%s879 + $0x28] sm:$0xf]
      %v891 = vld [vmem:[%s879 + $0x2c] sm:$0xf]
      %v892 = vld [vmem:[%s879 + $0x30] sm:$0xf]
      %v893 = vld [vmem:[%s879 + $0x34] sm:$0xf]
      %v894 = vld [vmem:[%s879 + $0x38] sm:$0xf]
      %v895 = vld [vmem:[%s879 + $0x3c] sm:$0xf]
      %v897 = vunpack.c.l.b16 %v878
      %v898 = vpack.c.b16 %v897, %v897
      %v900 = vshrl.u32 %v645, 16
      %v902 = vshll.u32 %v645, 16
      %v904 = vrot.slane %v902, 1
      %v905 = vor.u32 %v900, %v904
      %v907 = vshll.u32 %v898, 16
      %v909 = vrot.slane %v907, 1
      %v910 = vsel %vm501, %v905, %v909
      %v911 = vshrl.u32 %v898, 16
      %v913 = vor.u32 %v911, %v909
      %v932 = vunpack.c.l.b16 %v880
      %v933 = vunpack.c.l.b16 %v881
      %v934 = vunpack.c.l.b16 %v882
      %v935 = vunpack.c.l.b16 %v883
      %v936 = vunpack.c.l.b16 %v884
      %v937 = vunpack.c.l.b16 %v885
      %v938 = vunpack.c.l.b16 %v886
      %v939 = vunpack.c.l.b16 %v887
      %v940 = vunpack.c.l.b16 %v888
      %v941 = vunpack.c.l.b16 %v889
      %v942 = vunpack.c.l.b16 %v890
      %v943 = vunpack.c.l.b16 %v891
      %v944 = vunpack.c.l.b16 %v892
      %v945 = vunpack.c.l.b16 %v893
      %v946 = vunpack.c.l.b16 %v894
      %v947 = vunpack.c.l.b16 %v895
      %v948 = vpack.c.b16 %v933, %v932
      %v949 = vpack.c.b16 %v935, %v934
      %v950 = vpack.c.b16 %v937, %v936
      %v951 = vpack.c.b16 %v939, %v938
      %v952 = vpack.c.b16 %v941, %v940
      %v953 = vpack.c.b16 %v943, %v942
      %v954 = vpack.c.b16 %v945, %v944
      %v955 = vpack.c.b16 %v947, %v946
      %964 = vmatprep.subr.bf16.mxu0 0
      %965 = vmatpush1.bf16.msra.mxu0 %v948
      %966 = vmatprep.subr.bf16.mxu0 0
      %967 = vmatpush1.bf16.msra.mxu0 %v949
      %968 = vmatprep.subr.bf16.mxu0 0
      %969 = vmatpush1.bf16.msra.mxu0 %v950
      %970 = vmatprep.subr.bf16.mxu0 0
      %971 = vmatpush1.bf16.msra.mxu0 %v951
      %972 = vmatprep.subr.bf16.mxu0 0
      %973 = vmatpush1.bf16.msra.mxu0 %v952
      %974 = vmatprep.subr.bf16.mxu0 0
      %975 = vmatpush1.bf16.msra.mxu0 %v953
      %976 = vmatprep.subr.bf16.mxu0 0
      %977 = vmatpush1.bf16.msra.mxu0 %v954
      %978 = vmatprep.subr.bf16.mxu0 0
      %979 = vmatpush1.bf16.msra.mxu0 %v955
      %980 = vmatprep.subr.bf16.mxu0 0
      %981 = vmatpush1.bf16.msra.mxu0 0
      %982 = vmatprep.subr.bf16.mxu0 0
      %983 = vmatpush1.bf16.msra.mxu0 0
      %984 = vmatprep.subr.bf16.mxu0 0
      %985 = vmatpush1.bf16.msra.mxu0 0
      %986 = vmatprep.subr.bf16.mxu0 0
      %987 = vmatpush1.bf16.msra.mxu0 0
      %988 = vmatprep.subr.bf16.mxu0 0
      %989 = vmatpush1.bf16.msra.mxu0 0
      %990 = vmatprep.subr.bf16.mxu0 0
      %991 = vmatpush1.bf16.msra.mxu0 0
      %992 = vmatprep.subr.bf16.mxu0 0
      %993 = vmatpush1.bf16.msra.mxu0 0
      %994 = vmatprep.subr.bf16.mxu0 0
      %995 = vmatpush1.bf16.msra.mxu0 0
      %996 = vmatprep.mubr.bf16.mxu0 0
      %997 = vmatmul.mubr.bf16.gmra.mrb[0].mxu0 %v910
      %v998 = vpop.f32.mrb[0].mxu0
      %v999 = vadd.f32 0.0, %v998
      %v1000 = vpop.f32.mrb[0].mxu0
      %v1001 = vpop.f32.mrb[0].mxu0
      %v1002 = vadd.f32 0.0, %v1001
      %v1003 = vpop.f32.mrb[0].mxu0
      %1004 = vmatprep.mubr.bf16.mxu0 0
      %1005 = vmatmul.mubr.bf16.gmra.mrb[0].mxu0 %v913
      %v1006 = vpop.f32.mrb[0].mxu0
      %v1007 = vadd.f32 0.0, %v1006
      %v1008 = vpop.f32.mrb[0].mxu0
      %v1009 = vpop.f32.mrb[0].mxu0
      %v1010 = vpop.f32.mrb[0].mxu0
      %1011 = vdwg.mxu0
      %v1012 = vadd.f32 %v875, %v999
      %v1013 = vadd.f32 %v876, %v1002
      %v1014 = vadd.f32 %v877, %v1007
      %v1015 = vld [vmem:[%s210] sm:$0xc]
      %v1016 = vld [vmem:[%s210 + $0x4] sm:$0xf]
      %v1017 = vld [vmem:[%s210 + $0x8] sm:$0xf]
      %v1018 = vld [vmem:[%s210 + $0xc] sm:$0x1]
      %s1019 = scalar_lea.vmem %s215, 384
      %v1020 = vld [vmem:[%s1019] sm:$0xf]
      %v1021 = vld [vmem:[%s1019 + $0x4] sm:$0xf]
      %v1022 = vld [vmem:[%s1019 + $0x8] sm:$0xf]
      %v1023 = vld [vmem:[%s1019 + $0xc] sm:$0xf]
      %v1024 = vld [vmem:[%s1019 + $0x10] sm:$0xf]
      %v1025 = vld [vmem:[%s1019 + $0x14] sm:$0xf]
      %v1026 = vld [vmem:[%s1019 + $0x18] sm:$0xf]
      %v1027 = vld [vmem:[%s1019 + $0x1c] sm:$0xf]
      %v1028 = vld [vmem:[%s1019 + $0x20] sm:$0xf]
      %v1029 = vld [vmem:[%s1019 + $0x24] sm:$0xf]
      %v1030 = vld [vmem:[%s1019 + $0x28] sm:$0xf]
      %v1031 = vld [vmem:[%s1019 + $0x2c] sm:$0xf]
      %v1032 = vld [vmem:[%s1019 + $0x30] sm:$0xf]
      %v1033 = vld [vmem:[%s1019 + $0x34] sm:$0xf]
      %v1034 = vld [vmem:[%s1019 + $0x38] sm:$0xf]
      %v1035 = vld [vmem:[%s1019 + $0x3c] sm:$0xf]
      %v1040 = vunpack.c.l.b16 %v1015
      %v1041 = vunpack.c.l.b16 %v1016
      %v1042 = vunpack.c.l.b16 %v1017
      %v1043 = vunpack.c.l.b16 %v1018
      %v1044 = vpack.c.b16 %v1041, %v1040
      %v1045 = vpack.c.b16 %v1043, %v1042
      %vm1046 = vsmask.f32 5376
      %v1048 = vshrl.u32 %v1044, 16
      %v1050 = vrot.slane %v1048, 2
      %v1051 = vshll.u32 %v1044, 16
      %v1053 = vrot.slane %v1051, 3
      %v1054 = vor.u32 %v1050, %v1053
      %v1056 = vshrl.u32 %v1045, 16
      %v1058 = vrot.slane %v1056, 2
      %v1059 = vshll.u32 %v1045, 16
      %v1061 = vrot.slane %v1059, 3
      %v1062 = vor.u32 %v1058, %v1061
      %v1063 = vsel %vm1046, %v1054, %v1062
      %v1082 = vunpack.c.l.b16 %v1020
      %v1083 = vunpack.c.l.b16 %v1021
      %v1084 = vunpack.c.l.b16 %v1022
      %v1085 = vunpack.c.l.b16 %v1023
      %v1086 = vunpack.c.l.b16 %v1024
      %v1087 = vunpack.c.l.b16 %v1025
      %v1088 = vunpack.c.l.b16 %v1026
      %v1089 = vunpack.c.l.b16 %v1027
      %v1090 = vunpack.c.l.b16 %v1028
      %v1091 = vunpack.c.l.b16 %v1029
      %v1092 = vunpack.c.l.b16 %v1030
      %v1093 = vunpack.c.l.b16 %v1031
      %v1094 = vunpack.c.l.b16 %v1032
      %v1095 = vunpack.c.l.b16 %v1033
      %v1096 = vunpack.c.l.b16 %v1034
      %v1097 = vunpack.c.l.b16 %v1035
      %v1098 = vpack.c.b16 %v1083, %v1082
      %v1099 = vpack.c.b16 %v1085, %v1084
      %v1100 = vpack.c.b16 %v1087, %v1086
      %v1101 = vpack.c.b16 %v1089, %v1088
      %v1102 = vpack.c.b16 %v1091, %v1090
      %v1103 = vpack.c.b16 %v1093, %v1092
      %v1104 = vpack.c.b16 %v1095, %v1094
      %v1105 = vpack.c.b16 %v1097, %v1096
      %1114 = vmatprep.subr.bf16.mxu0 0
      %1115 = vmatpush1.bf16.msra.mxu0 %v1098
      %1116 = vmatprep.subr.bf16.mxu0 0
      %1117 = vmatpush1.bf16.msra.mxu0 %v1099
      %1118 = vmatprep.subr.bf16.mxu0 0
      %1119 = vmatpush1.bf16.msra.mxu0 %v1100
      %1120 = vmatprep.subr.bf16.mxu0 0
      %1121 = vmatpush1.bf16.msra.mxu0 %v1101
      %1122 = vmatprep.subr.bf16.mxu0 0
      %1123 = vmatpush1.bf16.msra.mxu0 %v1102
      %1124 = vmatprep.subr.bf16.mxu0 0
      %1125 = vmatpush1.bf16.msra.mxu0 %v1103
      %1126 = vmatprep.subr.bf16.mxu0 0
      %1127 = vmatpush1.bf16.msra.mxu0 %v1104
      %1128 = vmatprep.subr.bf16.mxu0 0
      %1129 = vmatpush1.bf16.msra.mxu0 %v1105
      %1130 = vmatprep.subr.bf16.mxu0 0
      %1131 = vmatpush1.bf16.msra.mxu0 0
      %1132 = vmatprep.subr.bf16.mxu0 0
      %1133 = vmatpush1.bf16.msra.mxu0 0
      %1134 = vmatprep.subr.bf16.mxu0 0
      %1135 = vmatpush1.bf16.msra.mxu0 0
      %1136 = vmatprep.subr.bf16.mxu0 0
      %1137 = vmatpush1.bf16.msra.mxu0 0
      %1138 = vmatprep.subr.bf16.mxu0 0
      %1139 = vmatpush1.bf16.msra.mxu0 0
      %1140 = vmatprep.subr.bf16.mxu0 0
      %1141 = vmatpush1.bf16.msra.mxu0 0
      %1142 = vmatprep.subr.bf16.mxu0 0
      %1143 = vmatpush1.bf16.msra.mxu0 0
      %1144 = vmatprep.subr.bf16.mxu0 0
      %1145 = vmatpush1.bf16.msra.mxu0 0
      %1146 = vmatprep.mubr.bf16.mxu0 0
      %1147 = vmatmul.mubr.bf16.gmra.mrb[0].mxu0 %v1063
      %v1148 = vpop.f32.mrb[0].mxu0
      %v1149 = vadd.f32 0.0, %v1148
      %v1150 = vpop.f32.mrb[0].mxu0
      %v1151 = vpop.f32.mrb[0].mxu0
      %v1152 = vadd.f32 0.0, %v1151
      %v1153 = vpop.f32.mrb[0].mxu0
      %1154 = vmatprep.mubr.bf16.mxu0 0
      %1155 = vmatmul.mubr.bf16.gmra.mrb[0].mxu0 %v1062
      %v1156 = vpop.f32.mrb[0].mxu0
      %v1157 = vadd.f32 0.0, %v1156
      %v1158 = vpop.f32.mrb[0].mxu0
      %v1159 = vpop.f32.mrb[0].mxu0
      %v1160 = vpop.f32.mrb[0].mxu0
      %1161 = vdwg.mxu0
      %v1162 = vadd.f32 %v1012, %v1149
      %v1163 = vadd.f32 %v1013, %v1152
      %v1164 = vadd.f32 %v1014, %v1157
      %v1165 = vld [vmem:[%s247] sm:$0xc]
      %v1166 = vld [vmem:[%s247 + $0x4] sm:$0xf]
      %v1167 = vld [vmem:[%s247 + $0x8] sm:$0xf]
      %v1168 = vld [vmem:[%s247 + $0xc] sm:$0x1]
      %s1169 = scalar_lea.vmem %s215, 448
      %v1170 = vld [vmem:[%s1169] sm:$0xf]
      %v1171 = vld [vmem:[%s1169 + $0x4] sm:$0xf]
      %v1172 = vld [vmem:[%s1169 + $0x8] sm:$0xf]
      %v1173 = vld [vmem:[%s1169 + $0xc] sm:$0xf]
      %v1174 = vld [vmem:[%s1169 + $0x10] sm:$0xf]
      %v1175 = vld [vmem:[%s1169 + $0x14] sm:$0xf]
      %v1176 = vld [vmem:[%s1169 + $0x18] sm:$0xf]
      %v1177 = vld [vmem:[%s1169 + $0x1c] sm:$0xf]
      %v1178 = vld [vmem:[%s1169 + $0x20] sm:$0xf]
      %v1179 = vld [vmem:[%s1169 + $0x24] sm:$0xf]
      %v1180 = vld [vmem:[%s1169 + $0x28] sm:$0xf]
      %v1181 = vld [vmem:[%s1169 + $0x2c] sm:$0xf]
      %v1182 = vld [vmem:[%s1169 + $0x30] sm:$0xf]
      %v1183 = vld [vmem:[%s1169 + $0x34] sm:$0xf]
      %v1184 = vld [vmem:[%s1169 + $0x38] sm:$0xf]
      %v1185 = vld [vmem:[%s1169 + $0x3c] sm:$0xf]
      %v1190 = vunpack.c.l.b16 %v1165
      %v1191 = vunpack.c.l.b16 %v1166
      %v1192 = vunpack.c.l.b16 %v1167
      %v1193 = vunpack.c.l.b16 %v1168
      %v1194 = vpack.c.b16 %v1191, %v1190
      %v1195 = vpack.c.b16 %v1193, %v1192
      %v1197 = vshrl.u32 %v1194, 16
      %v1199 = vrot.slane %v1197, 2
      %v1200 = vshll.u32 %v1194, 16
      %v1202 = vrot.slane %v1200, 3
      %v1203 = vor.u32 %v1199, %v1202
      %v1205 = vshrl.u32 %v1195, 16
      %v1207 = vrot.slane %v1205, 2
      %v1208 = vshll.u32 %v1195, 16
      %v1210 = vrot.slane %v1208, 3
      %v1211 = vor.u32 %v1207, %v1210
      %v1212 = vsel %vm1046, %v1203, %v1211
      %v1231 = vunpack.c.l.b16 %v1170
      %v1232 = vunpack.c.l.b16 %v1171
      %v1233 = vunpack.c.l.b16 %v1172
      %v1234 = vunpack.c.l.b16 %v1173
      %v1235 = vunpack.c.l.b16 %v1174
      %v1236 = vunpack.c.l.b16 %v1175
      %v1237 = vunpack.c.l.b16 %v1176
      %v1238 = vunpack.c.l.b16 %v1177
      %v1239 = vunpack.c.l.b16 %v1178
      %v1240 = vunpack.c.l.b16 %v1179
      %v1241 = vunpack.c.l.b16 %v1180
      %v1242 = vunpack.c.l.b16 %v1181
      %v1243 = vunpack.c.l.b16 %v1182
      %v1244 = vunpack.c.l.b16 %v1183
      %v1245 = vunpack.c.l.b16 %v1184
      %v1246 = vunpack.c.l.b16 %v1185
      %v1247 = vpack.c.b16 %v1232, %v1231
      %v1248 = vpack.c.b16 %v1234, %v1233
      %v1249 = vpack.c.b16 %v1236, %v1235
      %v1250 = vpack.c.b16 %v1238, %v1237
      %v1251 = vpack.c.b16 %v1240, %v1239
      %v1252 = vpack.c.b16 %v1242, %v1241
      %v1253 = vpack.c.b16 %v1244, %v1243
      %v1254 = vpack.c.b16 %v1246, %v1245
      %1263 = vmatprep.subr.bf16.mxu0 0
      %1264 = vmatpush1.bf16.msra.mxu0 %v1247
      %1265 = vmatprep.subr.bf16.mxu0 0
      %1266 = vmatpush1.bf16.msra.mxu0 %v1248
      %1267 = vmatprep.subr.bf16.mxu0 0
      %1268 = vmatpush1.bf16.msra.mxu0 %v1249
      %1269 = vmatprep.subr.bf16.mxu0 0
      %1270 = vmatpush1.bf16.msra.mxu0 %v1250
      %1271 = vmatprep.subr.bf16.mxu0 0
      %1272 = vmatpush1.bf16.msra.mxu0 %v1251
      %1273 = vmatprep.subr.bf16.mxu0 0
      %1274 = vmatpush1.bf16.msra.mxu0 %v1252
      %1275 = vmatprep.subr.bf16.mxu0 0
      %1276 = vmatpush1.bf16.msra.mxu0 %v1253
      %1277 = vmatprep.subr.bf16.mxu0 0
      %1278 = vmatpush1.bf16.msra.mxu0 %v1254
      %1279 = vmatprep.subr.bf16.mxu0 0
      %1280 = vmatpush1.bf16.msra.mxu0 0
      %1281 = vmatprep.subr.bf16.mxu0 0
      %1282 = vmatpush1.bf16.msra.mxu0 0
      %1283 = vmatprep.subr.bf16.mxu0 0
      %1284 = vmatpush1.bf16.msra.mxu0 0
      %1285 = vmatprep.subr.bf16.mxu0 0
      %1286 = vmatpush1.bf16.msra.mxu0 0
      %1287 = vmatprep.subr.bf16.mxu0 0
      %1288 = vmatpush1.bf16.msra.mxu0 0
      %1289 = vmatprep.subr.bf16.mxu0 0
      %1290 = vmatpush1.bf16.msra.mxu0 0
      %1291 = vmatprep.subr.bf16.mxu0 0
      %1292 = vmatpush1.bf16.msra.mxu0 0
      %1293 = vmatprep.subr.bf16.mxu0 0
      %1294 = vmatpush1.bf16.msra.mxu0 0
      %1295 = vmatprep.mubr.bf16.mxu0 0
      %1296 = vmatmul.mubr.bf16.gmra.mrb[0].mxu0 %v1212
      %v1297 = vpop.f32.mrb[0].mxu0
      %v1298 = vadd.f32 0.0, %v1297
      %v1299 = vpop.f32.mrb[0].mxu0
      %v1300 = vpop.f32.mrb[0].mxu0
      %v1301 = vadd.f32 0.0, %v1300
      %v1302 = vpop.f32.mrb[0].mxu0
      %1303 = vmatprep.mubr.bf16.mxu0 0
      %1304 = vmatmul.mubr.bf16.gmra.mrb[0].mxu0 %v1211
      %v1305 = vpop.f32.mrb[0].mxu0
      %v1306 = vadd.f32 0.0, %v1305
      %v1307 = vpop.f32.mrb[0].mxu0
      %v1308 = vpop.f32.mrb[0].mxu0
      %v1309 = vpop.f32.mrb[0].mxu0
      %1310 = vdwg.mxu0
      %v1311 = vadd.f32 %v1162, %v1298
      %v1312 = vadd.f32 %v1163, %v1301
      %v1313 = vadd.f32 %v1164, %v1306
      %v1314 = vld [vmem:[%s210] sm:$0x8]
      %s1315 = scalar_lea.vmem %s215, 512
      %v1316 = vld [vmem:[%s1315] sm:$0xf]
      %v1317 = vld [vmem:[%s1315 + $0x4] sm:$0xf]
      %v1318 = vld [vmem:[%s1315 + $0x8] sm:$0xf]
      %v1319 = vld [vmem:[%s1315 + $0xc] sm:$0xf]
      %v1320 = vld [vmem:[%s1315 + $0x10] sm:$0xf]
      %v1321 = vld [vmem:[%s1315 + $0x14] sm:$0xf]
      %v1322 = vld [vmem:[%s1315 + $0x18] sm:$0xf]
      %v1323 = vld [vmem:[%s1315 + $0x1c] sm:$0xf]
      %v1324 = vld [vmem:[%s1315 + $0x20] sm:$0xf]
      %v1325 = vld [vmem:[%s1315 + $0x24] sm:$0xf]
      %v1326 = vld [vmem:[%s1315 + $0x28] sm:$0xf]
      %v1327 = vld [vmem:[%s1315 + $0x2c] sm:$0xf]
      %v1328 = vld [vmem:[%s1315 + $0x30] sm:$0xf]
      %v1329 = vld [vmem:[%s1315 + $0x34] sm:$0xf]
      %v1330 = vld [vmem:[%s1315 + $0x38] sm:$0xf]
      %v1331 = vld [vmem:[%s1315 + $0x3c] sm:$0xf]
      %v1333 = vunpack.c.l.b16 %v1314
      %v1334 = vpack.c.b16 %v1041, %v1333
      %vm1335 = vcmask 1044480
      %v1336 = vrot.slane %v1334, 3
      %v1337 = vrot.slane %v1045, 3
      %v1338 = vsel %vm1335, %v1336, %v1337
      %v1357 = vunpack.c.l.b16 %v1316
      %v1358 = vunpack.c.l.b16 %v1317
      %v1359 = vunpack.c.l.b16 %v1318
      %v1360 = vunpack.c.l.b16 %v1319
      %v1361 = vunpack.c.l.b16 %v1320
      %v1362 = vunpack.c.l.b16 %v1321
      %v1363 = vunpack.c.l.b16 %v1322
      %v1364 = vunpack.c.l.b16 %v1323
      %v1365 = vunpack.c.l.b16 %v1324
      %v1366 = vunpack.c.l.b16 %v1325
      %v1367 = vunpack.c.l.b16 %v1326
      %v1368 = vunpack.c.l.b16 %v1327
      %v1369 = vunpack.c.l.b16 %v1328
      %v1370 = vunpack.c.l.b16 %v1329
      %v1371 = vunpack.c.l.b16 %v1330
      %v1372 = vunpack.c.l.b16 %v1331
      %v1373 = vpack.c.b16 %v1358, %v1357
      %v1374 = vpack.c.b16 %v1360, %v1359
      %v1375 = vpack.c.b16 %v1362, %v1361
      %v1376 = vpack.c.b16 %v1364, %v1363
      %v1377 = vpack.c.b16 %v1366, %v1365
      %v1378 = vpack.c.b16 %v1368, %v1367
      %v1379 = vpack.c.b16 %v1370, %v1369
      %v1380 = vpack.c.b16 %v1372, %v1371
      %1389 = vmatprep.subr.bf16.mxu0 0
      %1390 = vmatpush1.bf16.msra.mxu0 %v1373
      %1391 = vmatprep.subr.bf16.mxu0 0
      %1392 = vmatpush1.bf16.msra.mxu0 %v1374
      %1393 = vmatprep.subr.bf16.mxu0 0
      %1394 = vmatpush1.bf16.msra.mxu0 %v1375
      %1395 = vmatprep.subr.bf16.mxu0 0
      %1396 = vmatpush1.bf16.msra.mxu0 %v1376
      %1397 = vmatprep.subr.bf16.mxu0 0
      %1398 = vmatpush1.bf16.msra.mxu0 %v1377
      %1399 = vmatprep.subr.bf16.mxu0 0
      %1400 = vmatpush1.bf16.msra.mxu0 %v1378
      %1401 = vmatprep.subr.bf16.mxu0 0
      %1402 = vmatpush1.bf16.msra.mxu0 %v1379
      %1403 = vmatprep.subr.bf16.mxu0 0
      %1404 = vmatpush1.bf16.msra.mxu0 %v1380
      %1405 = vmatprep.subr.bf16.mxu0 0
      %1406 = vmatpush1.bf16.msra.mxu0 0
      %1407 = vmatprep.subr.bf16.mxu0 0
      %1408 = vmatpush1.bf16.msra.mxu0 0
      %1409 = vmatprep.subr.bf16.mxu0 0
      %1410 = vmatpush1.bf16.msra.mxu0 0
      %1411 = vmatprep.subr.bf16.mxu0 0
      %1412 = vmatpush1.bf16.msra.mxu0 0
      %1413 = vmatprep.subr.bf16.mxu0 0
      %1414 = vmatpush1.bf16.msra.mxu0 0
      %1415 = vmatprep.subr.bf16.mxu0 0
      %1416 = vmatpush1.bf16.msra.mxu0 0
      %1417 = vmatprep.subr.bf16.mxu0 0
      %1418 = vmatpush1.bf16.msra.mxu0 0
      %1419 = vmatprep.subr.bf16.mxu0 0
      %1420 = vmatpush1.bf16.msra.mxu0 0
      %1421 = vmatprep.mubr.bf16.mxu0 0
      %1422 = vmatmul.mubr.bf16.gmra.mrb[0].mxu0 %v1338
      %v1423 = vpop.f32.mrb[0].mxu0
      %v1424 = vadd.f32 0.0, %v1423
      %v1425 = vpop.f32.mrb[0].mxu0
      %v1426 = vpop.f32.mrb[0].mxu0
      %v1427 = vadd.f32 0.0, %v1426
      %v1428 = vpop.f32.mrb[0].mxu0
      %1429 = vmatprep.mubr.bf16.mxu0 0
      %1430 = vmatmul.mubr.bf16.gmra.mrb[0].mxu0 %v1337
      %v1431 = vpop.f32.mrb[0].mxu0
      %v1432 = vadd.f32 0.0, %v1431
      %v1433 = vpop.f32.mrb[0].mxu0
      %v1434 = vpop.f32.mrb[0].mxu0
      %v1435 = vpop.f32.mrb[0].mxu0
      %1436 = vdwg.mxu0
      %v1437 = vadd.f32 %v1311, %v1424
      %v1438 = vadd.f32 %v1312, %v1427
      %v1439 = vadd.f32 %v1313, %v1432
      %v1440 = vld [vmem:[%s218] sm:$0x1]
      %v1442 = vlaneseq
      %v1443 = vshrl.u32 %v1442, 7
      %v1444 = vsub.s32 0, %v1443
      %v1445 = vrot.slane %v1440, %v1444
      %v1447 = vadd.f32 %v1437, %v1445
      %v1448 = vadd.f32 %v1438, %v1445
      %v1449 = vadd.f32 %v1439, %v1445
      %v1450 = vmax.f32 %v1447, 0.0
      %v1451 = vmax.f32 %v1448, 0.0
      %v1452 = vmax.f32 %v1449, 0.0
      %v1453 = vpack.c.bf16 %v1451, %v1450
      %v1454 = vpack.c.bf16 %v1452, %v1452
      %v1457 = vunpack.c.l.b16 %v1453
      %v1458 = vunpack.c.h.b16 %v1453
      %v1459 = vunpack.c.l.b16 %v1454
      %v1460 = vpack.c.b16 %v1457, %v1457
      %v1461 = vpack.c.b16 %v1458, %v1458
      %v1462 = vpack.c.b16 %v1459, %v1459
      %1466 = vst [vmem:[%s226] sm:$0xf] %v1460
      %1467 = vst [vmem:[%s226 + $0x4] sm:$0xf] %v1461
      %1468 = vst [vmem:[%s226 + $0x8] sm:$0x3] %v1462
      %p1469 = scmp.lt.s32.totalorder %s18, 1
      %s1470 = scalar_select %p1469, %s18, 1
      %p1471 = scmp.lt.s32.totalorder %s19, 0
      %s1472 = scalar_select %p1471, %s19, 0
      %s1473 = smul.addr %s1470, 3
      %s1474 = sadd.s32 %s1472, %s1473
      %s1475 = smul.addr %s1474, 4
      %s1476 = scalar_lea.vmem %s3, %s1475
      // Predicated region
      $region33: #{blocks_forward.9} parent=31 // pred_check
        %p1477 = pneg %p124
      $region34: #{blocks_forward.9} parent=31 // pred_check_branch
        %1479 = sbr.rel (%p1477) target = $region36
      $region35: #{blocks_forward.9} parent=31 // pred_region
        _
      $region36: #{blocks_forward.9} parent=31 // pred_fallthru
        _
    $region32: #{blocks_forward.9} parent=5 // pred_fallthru
      _
    %p1480 = scmp.le.s32.totalorder 2, %s9
    // Predicated region
    $region37: #{blocks_forward.9} parent=5 // pred_check
      %p1481 = pneg %p1480
    $region38: #{blocks_forward.9} parent=5 // pred_check_branch
      %1483 = sbr.rel (%p1481) target = $region40
    $region39: #{blocks_forward.9} parent=5 // pred_region
      %s1484 = ssub.s32 %s9, 2
      // Predicated region
      $region41: #{blocks_forward.9} parent=39 // pred_check
        %p1485 = pneg %p130
      $region42: #{blocks_forward.9} parent=39 // pred_check_branch
        %1487 = sbr.rel (%p1485) target = $region44
      $region43: #{blocks_forward.9} parent=39 // pred_region
        %p1488 = scmp.lt.s32.totalorder %s20, 1
        %s1489 = scalar_select %p1488, %s20, 1
        %p1490 = scmp.lt.s32.totalorder %s21, 0
        %s1491 = scalar_select %p1490, %s21, 0
        %s1492 = smul.addr %s1489, 3
        %s1493 = sadd.s32 %s1491, %s1492
        %s1494 = smul.addr %s1493, 4
        %s1495 = scalar_lea.vmem %s3, %s1494
      $region44: #{blocks_forward.9} parent=39 // pred_fallthru
        _
    $region40: #{blocks_forward.9} parent=5 // pred_fallthru
      _
  $region6: #{blocks_forward.9} parent=0 // loop_footer
    %s13 = sadd.s32 1, %s9
  $region7: #{blocks_forward.9} parent=0 // loop_footer_branch
    %8 = sbr.rel target = $region3
  $region8: #{blocks_forward.9} parent=0 // loop_exit
    _

// kernel: blocks_forward.12
$region0: #{blocks_forward.12}
  #allocation0 [shape = 'u32[]', space=smem, size = 0x4, offset = 0x4, fixed_abs, tag = 'smem constant byte address 0x4 - core index']
  #allocation1 [shape = 'u32[144,128]{1,0:T(1,128)}', space=vmem, size = 0x12000, scoped, tag = 'internal scratch']
  %s0 = inlined_call_operand.vmem [shape: bf16[2,38,128], index: 0, kind: input, shape index: {}]
  %s1 = inlined_call_operand.vmem [shape: bf16[9,128,128], index: 1, kind: input, shape index: {}]
  %s2 = inlined_call_operand.vmem [shape: f32[1,128], index: 2, kind: input, shape index: {}]
  %s3 = inlined_call_operand.vmem [shape: bf16[2,24,128], index: 3, kind: output, shape index: {}]
  %s4 = sld [smem:[#allocation0]]
  $region45: #{blocks_forward.12} parent=0
    _
  %s6 = ssub.s32 1, %s4
  %s7 = scalar_select 0, %s6, %s4
  loop: start=0, step=1, limit=4
  $region2: #{blocks_forward.12} parent=0 // loop_pre_header
    _
  $region3: #{blocks_forward.12} parent=0 // loop_header
    %s9 = sphi 0, %s13
    %p10 = scmp.ge.s32.totalorder %s9, 4
    %s16 = sphi 0, %s28
    %s17 = sphi 0, %s24
    %s18 = sphi 0, %s16
    %s19 = sphi 0, %s17
    %s20 = sphi 0, %s18
    %s21 = sphi 0, %s19
    %s31 = sphi 0, %s33
    %s34 = sphi 0, %s31
    %s35 = sphi 0, %s34
    %s51 = sphi 0, %s35
    %s57 = sphi 0, %s59
    %s60 = sphi 0, %s57
    %s61 = sphi 0, %s60
    %s77 = sphi 0, %s61
    %s83 = sphi 0, %s85
    %s86 = sphi 0, %s83
    %s87 = sphi 0, %s86
    %s103 = sphi 0, %s87
    %s111 = sphi 0, %s113
    %s114 = sphi 0, %s111
    %s115 = sphi 0, %s114
    %s131 = sphi 0, %s115
  $region4: #{blocks_forward.12} parent=0 // loop_header_branch
    %12 = sbr.rel (%p10) target = $region8
  $region5: #{blocks_forward.12} parent=0 // loop_body
    %s14 = ssub.s32 %s9, 1
    %s15 = ssub.s32 %s9, 2
    %s22 = sadd.s32 1, %s17
    %p23 = scmp.ge.s32.totalorder %s22, 1
    %s24 = scalar_select %p23, 0, %s22
    %s25 = sadd.s32 1, %s16
    %s26 = scalar_select %p23, %s25, %s16
    %p27 = scmp.ge.s32.totalorder %s26, 2
    %s28 = scalar_select %p27, 0, %s26
    %s29 = ssub.s32 %s16, %s28
    %p30 = scmp.eq.s32.totalorder %s29, 0
    %s32 = sadd.s32 %s31, 1
    %s33 = scalar_select %p30, %s31, %s32
    %p36 = pneg %p30
    %p37 = scmp.eq.s32.totalorder %s9, 1
    %p38 = por %p36, %p37
    %p39 = scmp.ne.s32.totalorder %s31, %s34
    %p40 = scmp.eq.s32.totalorder %s9, 0
    %p41 = por %p39, %p40
    %p42 = scmp.ne.s32.totalorder %s31, %s34
    %p43 = scmp.eq.s32.totalorder %s14, 1
    %p44 = por %p42, %p43
    %p45 = scmp.ne.s32.totalorder %s34, %s35
    %p46 = scmp.eq.s32.totalorder %s14, 0
    %p47 = por %p45, %p46
    %p48 = scmp.ne.s32.totalorder %s34, %s35
    %p49 = scmp.eq.s32.totalorder %s15, 1
    %p50 = por %p48, %p49
    %p52 = scmp.ne.s32.totalorder %s35, %s51
    %p53 = scmp.eq.s32.totalorder %s15, 0
    %p54 = por %p52, %p53
    %s55 = ssub.s32 %s17, %s24
    %p56 = scmp.eq.s32.totalorder %s55, 0
    %s58 = sadd.s32 %s57, 1
    %s59 = scalar_select %p56, %s57, %s58
    %p62 = pneg %p56
    %p63 = scmp.eq.s32.totalorder %s9, 1
    %p64 = por %p62, %p63
    %p65 = scmp.ne.s32.totalorder %s57, %s60
    %p66 = scmp.eq.s32.totalorder %s9, 0
    %p67 = por %p65, %p66
    %p68 = scmp.ne.s32.totalorder %s57, %s60
    %p69 = scmp.eq.s32.totalorder %s14, 1
    %p70 = por %p68, %p69
    %p71 = scmp.ne.s32.totalorder %s60, %s61
    %p72 = scmp.eq.s32.totalorder %s14, 0
    %p73 = por %p71, %p72
    %p74 = scmp.ne.s32.totalorder %s60, %s61
    %p75 = scmp.eq.s32.totalorder %s15, 1
    %p76 = por %p74, %p75
    %p78 = scmp.ne.s32.totalorder %s61, %s77
    %p79 = scmp.eq.s32.totalorder %s15, 0
    %p80 = por %p78, %p79
    %s81 = ssub.s32 %s17, %s24
    %p82 = scmp.eq.s32.totalorder %s81, 0
    %s84 = sadd.s32 %s83, 1
    %s85 = scalar_select %p82, %s83, %s84
    %p88 = pneg %p82
    %p89 = scmp.eq.s32.totalorder %s9, 1
    %p90 = por %p88, %p89
    %p91 = scmp.ne.s32.totalorder %s83, %s86
    %p92 = scmp.eq.s32.totalorder %s9, 0
    %p93 = por %p91, %p92
    %p94 = scmp.ne.s32.totalorder %s83, %s86
    %p95 = scmp.eq.s32.totalorder %s14, 1
    %p96 = por %p94, %p95
    %p97 = scmp.ne.s32.totalorder %s86, %s87
    %p98 = scmp.eq.s32.totalorder %s14, 0
    %p99 = por %p97, %p98
    %p100 = scmp.ne.s32.totalorder %s86, %s87
    %p101 = scmp.eq.s32.totalorder %s15, 1
    %p102 = por %p100, %p101
    %p104 = scmp.ne.s32.totalorder %s87, %s103
    %p105 = scmp.eq.s32.totalorder %s15, 0
    %p106 = por %p104, %p105
    %s107 = ssub.s32 %s16, %s28
    %s108 = ssub.s32 %s17, %s24
    %s109 = sor.u32 %s107, %s108
    %p110 = scmp.eq.s32.totalorder %s109, 0
    %s112 = sadd.s32 %s111, 1
    %s113 = scalar_select %p110, %s111, %s112
    %p116 = pneg %p110
    %p117 = scmp.eq.s32.totalorder %s9, 1
    %p118 = por %p116, %p117
    %p119 = scmp.ne.s32.totalorder %s111, %s114
    %p120 = scmp.eq.s32.totalorder %s9, 0
    %p121 = por %p119, %p120
    %p122 = scmp.ne.s32.totalorder %s111, %s114
    %p123 = scmp.eq.s32.totalorder %s14, 1
    %p124 = por %p122, %p123
    %p125 = scmp.ne.s32.totalorder %s114, %s115
    %p126 = scmp.eq.s32.totalorder %s14, 0
    %p127 = por %p125, %p126
    %p128 = scmp.ne.s32.totalorder %s114, %s115
    %p129 = scmp.eq.s32.totalorder %s15, 1
    %p130 = por %p128, %p129
    %p132 = scmp.ne.s32.totalorder %s115, %s131
    %p133 = scmp.eq.s32.totalorder %s15, 0
    %p134 = por %p132, %p133
    %p135 = scmp.le.s32.totalorder 1, %s9
    %p136 = scmp.lt.s32.totalorder %s9, 3
    %p137 = pnand %p135, %p136
    %p138 = pneg %p137
    // Predicated region
    $region9: #{blocks_forward.12} parent=5 // pred_check
      _
    $region10: #{blocks_forward.12} parent=5 // pred_check_branch
      %140 = sbr.rel (%p137) target = $region12
    $region11: #{blocks_forward.12} parent=5 // pred_region
      %s141 = ssub.s32 %s9, 1
      // Predicated region
      $region13: #{blocks_forward.12} parent=11 // pred_check
        %p142 = pneg %p73
      $region14: #{blocks_forward.12} parent=11 // pred_check_branch
        %144 = sbr.rel (%p142) target = $region16
      $region15: #{blocks_forward.12} parent=11 // pred_region
        %p145 = scmp.lt.s32.totalorder %s19, 0
        %s146 = scalar_select %p145, %s19, 0
        %s147 = smul.addr %s146, 4
        %s148 = scalar_lea.vmem %s1, %s147
      $region16: #{blocks_forward.12} parent=11 // pred_fallthru
        _
      // Predicated region
      $region17: #{blocks_forward.12} parent=11 // pred_check
        %p149 = pneg %p99
      $region18: #{blocks_forward.12} parent=11 // pred_check_branch
        %151 = sbr.rel (%p149) target = $region20
      $region19: #{blocks_forward.12} parent=11 // pred_region
        %p152 = scmp.lt.s32.totalorder %s19, 0
        %s153 = scalar_select %p152, %s19, 0
        %s154 = scalar_lea.vmem %s2, %s153
      $region20: #{blocks_forward.12} parent=11 // pred_fallthru
        _
    $region12: #{blocks_forward.12} parent=5 // pred_fallthru
      _
    %p155 = scmp.lt.s32.totalorder %s9, 2
    // Predicated region
    $region21: #{blocks_forward.12} parent=5 // pred_check
      %p156 = pneg %p155
    $region22: #{blocks_forward.12} parent=5 // pred_check_branch
      %158 = sbr.rel (%p156) target = $region24
    $region23: #{blocks_forward.12} parent=5 // pred_region
      // Predicated region
      $region25: #{blocks_forward.12} parent=23 // pred_check
        %p159 = pneg %p41
      $region26: #{blocks_forward.12} parent=23 // pred_check_branch
        %161 = sbr.rel (%p159) target = $region28
      $region27: #{blocks_forward.12} parent=23 // pred_region
        %p162 = scmp.lt.s32.totalorder %s16, 1
        %s163 = scalar_select %p162, %s16, 1
        %s164 = smul.addr %s163, 5
        %s165 = smul.addr %s164, 4
        %s166 = scalar_lea.vmem %s0, %s165
      $region28: #{blocks_forward.12} parent=23 // pred_fallthru
        _
    $region24: #{blocks_forward.12} parent=5 // pred_fallthru
      _
    %p167 = scmp.le.s32.totalorder 1, %s9
    %p168 = scmp.lt.s32.totalorder %s9, 3
    %p169 = pnand %p167, %p168
    %p170 = pneg %p169
    // Predicated region
    $region29: #{blocks_forward.12} parent=5 // pred_check
      _
    $region30: #{blocks_forward.12} parent=5 // pred_check_branch
      %172 = sbr.rel (%p169) target = $region32
    $region31: #{blocks_forward.12} parent=5 // pred_region
      %s173 = ssub.s32 %s9, 1
      %p174 = scmp.lt.s32.totalorder %s18, 1
      %s175 = scalar_select %p174, %s18, 1
      %s176 = smul.addr %s175, 5
      %s177 = smul.addr %s176, 4
      %s178 = scalar_lea.vmem %s0, %s177
      %p179 = pneg %p47
      %p180 = pneg %p44
      %p181 = scmp.lt.s32.totalorder %s19, 0
      %s182 = scalar_select %p181, %s19, 0
      %s183 = smul.addr %s182, 4
      %s184 = scalar_lea.vmem %s1, %s183
      %p185 = pneg %p73
      %p186 = pneg %p70
      %p187 = scmp.lt.s32.totalorder %s19, 0
      %s188 = scalar_select %p187, %s19, 0
      %s189 = scalar_lea.vmem %s2, %s188
      %p190 = pneg %p99
      %p191 = pneg %p96
      %p192 = pneg %p127
      %p193 = pneg %p124
      %p194 = scmp.lt.s32.totalorder %s18, 1
      %s195 = scalar_select %p194, %s18, 1
      %p196 = scmp.lt.s32.totalorder %s19, 0
      %s197 = scalar_select %p196, %s19, 0
      %s198 = smul.addr %s195, 3
      %s199 = sadd.s32 %s197, %s198
      %s200 = smul.addr %s199, 4
      %s201 = scalar_lea.vmem %s3, %s200
      %p202 = scmp.lt.s32.totalorder %s18, 1
      %s203 = scalar_select %p202, %s18, 1
      %s204 = smul.addr %s203, 5
      %s205 = smul.addr %s204, 4
      %s206 = scalar_lea.vmem %s0, %s205
      %p207 = scmp.lt.s32.totalorder %s19, 0
      %s208 = scalar_select %p207, %s19, 0
      %s209 = smul.addr %s208, 4
      %s210 = scalar_lea.vmem %s1, %s209
      %p211 = scmp.lt.s32.totalorder %s19, 0
      %s212 = scalar_select %p211, %s19, 0
      %s213 = scalar_lea.vmem %s2, %s212
      %p214 = scmp.lt.s32.totalorder %s18, 1
      %s215 = scalar_select %p214, %s18, 1
      %p216 = scmp.lt.s32.totalorder %s19, 0
      %s217 = scalar_select %p216, %s19, 0
      %s218 = smul.addr %s215, 3
      %s219 = sadd.s32 %s217, %s218
      %s220 = smul.addr %s219, 4
      %s221 = scalar_lea.vmem %s3, %s220
      %v223 = vld [vmem:[%s206] sm:$0xf]
      %v224 = vld [vmem:[%s206 + $0x4] sm:$0xf]
      %v225 = vld [vmem:[%s206 + $0x8] sm:$0xf]
      %v226 = vld [vmem:[%s210] sm:$0xf]
      %v227 = vld [vmem:[%s210 + $0x4] sm:$0xf]
      %v228 = vld [vmem:[%s210 + $0x8] sm:$0xf]
      %v229 = vld [vmem:[%s210 + $0xc] sm:$0xf]
      %v230 = vld [vmem:[%s210 + $0x10] sm:$0xf]
      %v231 = vld [vmem:[%s210 + $0x14] sm:$0xf]
      %v232 = vld [vmem:[%s210 + $0x18] sm:$0xf]
      %v233 = vld [vmem:[%s210 + $0x1c] sm:$0xf]
      %v234 = vld [vmem:[%s210 + $0x20] sm:$0xf]
      %v235 = vld [vmem:[%s210 + $0x24] sm:$0xf]
      %v236 = vld [vmem:[%s210 + $0x28] sm:$0xf]
      %v237 = vld [vmem:[%s210 + $0x2c] sm:$0xf]
      %v238 = vld [vmem:[%s210 + $0x30] sm:$0xf]
      %v239 = vld [vmem:[%s210 + $0x34] sm:$0xf]
      %v240 = vld [vmem:[%s210 + $0x38] sm:$0xf]
      %v241 = vld [vmem:[%s210 + $0x3c] sm:$0xf]
      %v242 = vld [vmem:[%s206 + $0xc] sm:$0x1]
      %s243 = scalar_lea.vmem %s210, 64
      %v244 = vld [vmem:[%s243] sm:$0xf]
      %v245 = vld [vmem:[%s243 + $0x4] sm:$0xf]
      %v246 = vld [vmem:[%s243 + $0x8] sm:$0xf]
      %v247 = vld [vmem:[%s243 + $0xc] sm:$0xf]
      %v248 = vld [vmem:[%s243 + $0x10] sm:$0xf]
      %v249 = vld [vmem:[%s243 + $0x14] sm:$0xf]
      %v250 = vld [vmem:[%s243 + $0x18] sm:$0xf]
      %v251 = vld [vmem:[%s243 + $0x1c] sm:$0xf]
      %v252 = vld [vmem:[%s243 + $0x20] sm:$0xf]
      %v253 = vld [vmem:[%s243 + $0x24] sm:$0xf]
      %v254 = vld [vmem:[%s243 + $0x28] sm:$0xf]
      %v255 = vld [vmem:[%s243 + $0x2c] sm:$0xf]
      %v256 = vld [vmem:[%s243 + $0x30] sm:$0xf]
      %v257 = vld [vmem:[%s243 + $0x34] sm:$0xf]
      %v258 = vld [vmem:[%s243 + $0x38] sm:$0xf]
      %v259 = vld [vmem:[%s243 + $0x3c] sm:$0xf]
      %v264 = vunpack.c.l.b16 %v223
      %v265 = vunpack.c.l.b16 %v224
      %v266 = vunpack.c.l.b16 %v225
      %v267 = vunpack.c.l.b16 %v242
      %v268 = vpack.c.b16 %v265, %v264
      %v269 = vpack.c.b16 %v267, %v266
      %vm270 = vsmask.f32 7424
      %v272 = vshrl.u32 %v268, 16
      %v274 = vshll.u32 %v268, 16
      %v276 = vrot.slane %v274, 1
      %v277 = vor.u32 %v272, %v276
      %v279 = vshll.u32 %v269, 16
      %v281 = vrot.slane %v279, 1
      %v282 = vsel %vm270, %v277, %v281
      %v283 = vshrl.u32 %v269, 16
      %v285 = vor.u32 %v283, %v281
      %v304 = vunpack.c.l.b16 %v244
      %v305 = vunpack.c.l.b16 %v245
      %v306 = vunpack.c.l.b16 %v246
      %v307 = vunpack.c.l.b16 %v247
      %v308 = vunpack.c.l.b16 %v248
      %v309 = vunpack.c.l.b16 %v249
      %v310 = vunpack.c.l.b16 %v250
      %v311 = vunpack.c.l.b16 %v251
      %v312 = vunpack.c.l.b16 %v252
      %v313 = vunpack.c.l.b16 %v253
      %v314 = vunpack.c.l.b16 %v254
      %v315 = vunpack.c.l.b16 %v255
      %v316 = vunpack.c.l.b16 %v256
      %v317 = vunpack.c.l.b16 %v257
      %v318 = vunpack.c.l.b16 %v258
      %v319 = vunpack.c.l.b16 %v259
      %v320 = vpack.c.b16 %v305, %v304
      %v321 = vpack.c.b16 %v307, %v306
      %v322 = vpack.c.b16 %v309, %v308
      %v323 = vpack.c.b16 %v311, %v310
      %v324 = vpack.c.b16 %v313, %v312
      %v325 = vpack.c.b16 %v315, %v314
      %v326 = vpack.c.b16 %v317, %v316
      %v327 = vpack.c.b16 %v319, %v318
      %336 = vmatprep.subr.bf16.mxu0 0
      %337 = vmatpush1.bf16.msra.mxu0 %v320
      %338 = vmatprep.subr.bf16.mxu0 0
      %339 = vmatpush1.bf16.msra.mxu0 %v321
      %340 = vmatprep.subr.bf16.mxu0 0
      %341 = vmatpush1.bf16.msra.mxu0 %v322
      %342 = vmatprep.subr.bf16.mxu0 0
      %343 = vmatpush1.bf16.msra.mxu0 %v323
      %344 = vmatprep.subr.bf16.mxu0 0
      %345 = vmatpush1.bf16.msra.mxu0 %v324
      %346 = vmatprep.subr.bf16.mxu0 0
      %347 = vmatpush1.bf16.msra.mxu0 %v325
      %348 = vmatprep.subr.bf16.mxu0 0
      %349 = vmatpush1.bf16.msra.mxu0 %v326
      %350 = vmatprep.subr.bf16.mxu0 0
      %351 = vmatpush1.bf16.msra.mxu0 %v327
      %352 = vmatprep.subr.bf16.mxu0 0
      %353 = vmatpush1.bf16.msra.mxu0 0
      %354 = vmatprep.subr.bf16.mxu0 0
      %355 = vmatpush1.bf16.msra.mxu0 0
      %356 = vmatprep.subr.bf16.mxu0 0
      %357 = vmatpush1.bf16.msra.mxu0 0
      %358 = vmatprep.subr.bf16.mxu0 0
      %359 = vmatpush1.bf16.msra.mxu0 0
      %360 = vmatprep.subr.bf16.mxu0 0
      %361 = vmatpush1.bf16.msra.mxu0 0
      %362 = vmatprep.subr.bf16.mxu0 0
      %363 = vmatpush1.bf16.msra.mxu0 0
      %364 = vmatprep.subr.bf16.mxu0 0
      %365 = vmatpush1.bf16.msra.mxu0 0
      %366 = vmatprep.subr.bf16.mxu0 0
      %367 = vmatpush1.bf16.msra.mxu0 0
      %368 = vmatprep.mubr.bf16.mxu0 0
      %369 = vmatmul.mubr.bf16.gmra.mrb[0].mxu0 %v282
      %v370 = vpop.f32.mrb[0].mxu0
      %v371 = vadd.f32 0.0, %v370
      %v372 = vpop.f32.mrb[0].mxu0
      %v373 = vpop.f32.mrb[0].mxu0
      %v374 = vadd.f32 0.0, %v373
      %v375 = vpop.f32.mrb[0].mxu0
      %376 = vmatprep.mubr.bf16.mxu0 0
      %377 = vmatmul.mubr.bf16.gmra.mrb[0].mxu0 %v285
      %v378 = vpop.f32.mrb[0].mxu0
      %v379 = vadd.f32 0.0, %v378
      %v380 = vpop.f32.mrb[0].mxu0
      %v381 = vpop.f32.mrb[0].mxu0
      %v382 = vpop.f32.mrb[0].mxu0
      %383 = vdwg.mxu0
      %v384 = vpack.c.b16 %v266, %v266
      %v403 = vunpack.c.l.b16 %v226
      %v404 = vunpack.c.l.b16 %v227
      %v405 = vunpack.c.l.b16 %v228
      %v406 = vunpack.c.l.b16 %v229
      %v407 = vunpack.c.l.b16 %v230
      %v408 = vunpack.c.l.b16 %v231
      %v409 = vunpack.c.l.b16 %v232
      %v410 = vunpack.c.l.b16 %v233
      %v411 = vunpack.c.l.b16 %v234
      %v412 = vunpack.c.l.b16 %v235
      %v413 = vunpack.c.l.b16 %v236
      %v414 = vunpack.c.l.b16 %v237
      %v415 = vunpack.c.l.b16 %v238
      %v416 = vunpack.c.l.b16 %v239
      %v417 = vunpack.c.l.b16 %v240
      %v418 = vunpack.c.l.b16 %v241
      %v419 = vpack.c.b16 %v404, %v403
      %v420 = vpack.c.b16 %v406, %v405
      %v421 = vpack.c.b16 %v408, %v407
      %v422 = vpack.c.b16 %v410, %v409
      %v423 = vpack.c.b16 %v412, %v411
      %v424 = vpack.c.b16 %v414, %v413
      %v425 = vpack.c.b16 %v416, %v415
      %v426 = vpack.c.b16 %v418, %v417
      %435 = vmatprep.subr.bf16.mxu0 0
      %436 = vmatpush1.bf16.msra.mxu0 %v419
      %437 = vmatprep.subr.bf16.mxu0 0
      %438 = vmatpush1.bf16.msra.mxu0 %v420
      %439 = vmatprep.subr.bf16.mxu0 0
      %440 = vmatpush1.bf16.msra.mxu0 %v421
      %441 = vmatprep.subr.bf16.mxu0 0
      %442 = vmatpush1.bf16.msra.mxu0 %v422
      %443 = vmatprep.subr.bf16.mxu0 0
      %444 = vmatpush1.bf16.msra.mxu0 %v423
      %445 = vmatprep.subr.bf16.mxu0 0
      %446 = vmatpush1.bf16.msra.mxu0 %v424
      %447 = vmatprep.subr.bf16.mxu0 0
      %448 = vmatpush1.bf16.msra.mxu0 %v425
      %449 = vmatprep.subr.bf16.mxu0 0
      %450 = vmatpush1.bf16.msra.mxu0 %v426
      %451 = vmatprep.subr.bf16.mxu0 0
      %452 = vmatpush1.bf16.msra.mxu0 0
      %453 = vmatprep.subr.bf16.mxu0 0
      %454 = vmatpush1.bf16.msra.mxu0 0
      %455 = vmatprep.subr.bf16.mxu0 0
      %456 = vmatpush1.bf16.msra.mxu0 0
      %457 = vmatprep.subr.bf16.mxu0 0
      %458 = vmatpush1.bf16.msra.mxu0 0
      %459 = vmatprep.subr.bf16.mxu0 0
      %460 = vmatpush1.bf16.msra.mxu0 0
      %461 = vmatprep.subr.bf16.mxu0 0
      %462 = vmatpush1.bf16.msra.mxu0 0
      %463 = vmatprep.subr.bf16.mxu0 0
      %464 = vmatpush1.bf16.msra.mxu0 0
      %465 = vmatprep.subr.bf16.mxu0 0
      %466 = vmatpush1.bf16.msra.mxu0 0
      %467 = vmatprep.mubr.bf16.mxu0 0
      %468 = vmatmul.mubr.bf16.gmra.mrb[0].mxu0 %v268
      %v469 = vpop.f32.mrb[0].mxu0
      %v470 = vadd.f32 %v371, %v469
      %v471 = vpop.f32.mrb[0].mxu0
      %v472 = vpop.f32.mrb[0].mxu0
      %v473 = vadd.f32 %v374, %v472
      %v474 = vpop.f32.mrb[0].mxu0
      %475 = vmatprep.mubr.bf16.mxu0 0
      %476 = vmatmul.mubr.bf16.gmra.mrb[0].mxu0 %v384
      %v477 = vpop.f32.mrb[0].mxu0
      %v478 = vadd.f32 %v379, %v477
      %v479 = vpop.f32.mrb[0].mxu0
      %v480 = vpop.f32.mrb[0].mxu0
      %v481 = vpop.f32.mrb[0].mxu0
      %482 = vdwg.mxu0
      %v483 = vld [vmem:[%s206] sm:$0xe]
      %s484 = scalar_lea.vmem %s210, 128
      %v485 = vld [vmem:[%s484] sm:$0xf]
      %v486 = vld [vmem:[%s484 + $0x4] sm:$0xf]
      %v487 = vld [vmem:[%s484 + $0x8] sm:$0xf]
      %v488 = vld [vmem:[%s484 + $0xc] sm:$0xf]
      %v489 = vld [vmem:[%s484 + $0x10] sm:$0xf]
      %v490 = vld [vmem:[%s484 + $0x14] sm:$0xf]
      %v491 = vld [vmem:[%s484 + $0x18] sm:$0xf]
      %v492 = vld [vmem:[%s484 + $0x1c] sm:$0xf]
      %v493 = vld [vmem:[%s484 + $0x20] sm:$0xf]
      %v494 = vld [vmem:[%s484 + $0x24] sm:$0xf]
      %v495 = vld [vmem:[%s484 + $0x28] sm:$0xf]
      %v496 = vld [vmem:[%s484 + $0x2c] sm:$0xf]
      %v497 = vld [vmem:[%s484 + $0x30] sm:$0xf]
      %v498 = vld [vmem:[%s484 + $0x34] sm:$0xf]
      %v499 = vld [vmem:[%s484 + $0x38] sm:$0xf]
      %v500 = vld [vmem:[%s484 + $0x3c] sm:$0xf]
      %v502 = vunpack.c.l.b16 %v483
      %v503 = vpack.c.b16 %v265, %v502
      %vm504 = vcmask 1046528
      %v505 = vrot.slane %v503, 1
      %v506 = vrot.slane %v269, 1
      %v507 = vsel %vm504, %v505, %v506
      %v526 = vunpack.c.l.b16 %v485
      %v527 = vunpack.c.l.b16 %v486
      %v528 = vunpack.c.l.b16 %v487
      %v529 = vunpack.c.l.b16 %v488
      %v530 = vunpack.c.l.b16 %v489
      %v531 = vunpack.c.l.b16 %v490
      %v532 = vunpack.c.l.b16 %v491
      %v533 = vunpack.c.l.b16 %v492
      %v534 = vunpack.c.l.b16 %v493
      %v535 = vunpack.c.l.b16 %v494
      %v536 = vunpack.c.l.b16 %v495
      %v537 = vunpack.c.l.b16 %v496
      %v538 = vunpack.c.l.b16 %v497
      %v539 = vunpack.c.l.b16 %v498
      %v540 = vunpack.c.l.b16 %v499
      %v541 = vunpack.c.l.b16 %v500
      %v542 = vpack.c.b16 %v527, %v526
      %v543 = vpack.c.b16 %v529, %v528
      %v544 = vpack.c.b16 %v531, %v530
      %v545 = vpack.c.b16 %v533, %v532
      %v546 = vpack.c.b16 %v535, %v534
      %v547 = vpack.c.b16 %v537, %v536
      %v548 = vpack.c.b16 %v539, %v538
      %v549 = vpack.c.b16 %v541, %v540
      %558 = vmatprep.subr.bf16.mxu0 0
      %559 = vmatpush1.bf16.msra.mxu0 %v542
      %560 = vmatprep.subr.bf16.mxu0 0
      %561 = vmatpush1.bf16.msra.mxu0 %v543
      %562 = vmatprep.subr.bf16.mxu0 0
      %563 = vmatpush1.bf16.msra.mxu0 %v544
      %564 = vmatprep.subr.bf16.mxu0 0
      %565 = vmatpush1.bf16.msra.mxu0 %v545
      %566 = vmatprep.subr.bf16.mxu0 0
      %567 = vmatpush1.bf16.msra.mxu0 %v546
      %568 = vmatprep.subr.bf16.mxu0 0
      %569 = vmatpush1.bf16.msra.mxu0 %v547
      %570 = vmatprep.subr.bf16.mxu0 0
      %571 = vmatpush1.bf16.msra.mxu0 %v548
      %572 = vmatprep.subr.bf16.mxu0 0
      %573 = vmatpush1.bf16.msra.mxu0 %v549
      %574 = vmatprep.subr.bf16.mxu0 0
      %575 = vmatpush1.bf16.msra.mxu0 0
      %576 = vmatprep.subr.bf16.mxu0 0
      %577 = vmatpush1.bf16.msra.mxu0 0
      %578 = vmatprep.subr.bf16.mxu0 0
      %579 = vmatpush1.bf16.msra.mxu0 0
      %580 = vmatprep.subr.bf16.mxu0 0
      %581 = vmatpush1.bf16.msra.mxu0 0
      %582 = vmatprep.subr.bf16.mxu0 0
      %583 = vmatpush1.bf16.msra.mxu0 0
      %584 = vmatprep.subr.bf16.mxu0 0
      %585 = vmatpush1.bf16.msra.mxu0 0
      %586 = vmatprep.subr.bf16.mxu0 0
      %587 = vmatpush1.bf16.msra.mxu0 0
      %588 = vmatprep.subr.bf16.mxu0 0
      %589 = vmatpush1.bf16.msra.mxu0 0
      %590 = vmatprep.mubr.bf16.mxu0 0
      %591 = vmatmul.mubr.bf16.gmra.mrb[0].mxu0 %v507
      %v592 = vpop.f32.mrb[0].mxu0
      %v593 = vadd.f32 0.0, %v592
      %v594 = vpop.f32.mrb[0].mxu0
      %v595 = vpop.f32.mrb[0].mxu0
      %v596 = vadd.f32 0.0, %v595
      %v597 = vpop.f32.mrb[0].mxu0
      %598 = vmatprep.mubr.bf16.mxu0 0
      %599 = vmatmul.mubr.bf16.gmra.mrb[0].mxu0 %v506
      %v600 = vpop.f32.mrb[0].mxu0
      %v601 = vadd.f32 0.0, %v600
      %v602 = vpop.f32.mrb[0].mxu0
      %v603 = vpop.f32.mrb[0].mxu0
      %v604 = vpop.f32.mrb[0].mxu0
      %605 = vdwg.mxu0
      %v606 = vadd.f32 %v470, %v593
      %v607 = vadd.f32 %v473, %v596
      %v608 = vadd.f32 %v478, %v601
      %v609 = vld [vmem:[%s206] sm:$0x8]
      %v610 = vld [vmem:[%s206 + $0xc] sm:$0x7]
      %s611 = scalar_lea.vmem %s210, 192
      %v612 = vld [vmem:[%s611] sm:$0xf]
      %v613 = vld [vmem:[%s611 + $0x4] sm:$0xf]
      %v614 = vld [vmem:[%s611 + $0x8] sm:$0xf]
      %v615 = vld [vmem:[%s611 + $0xc] sm:$0xf]
      %v616 = vld [vmem:[%s611 + $0x10] sm:$0xf]
      %v617 = vld [vmem:[%s611 + $0x14] sm:$0xf]
      %v618 = vld [vmem:[%s611 + $0x18] sm:$0xf]
      %v619 = vld [vmem:[%s611 + $0x1c] sm:$0xf]
      %v620 = vld [vmem:[%s611 + $0x20] sm:$0xf]
      %v621 = vld [vmem:[%s611 + $0x24] sm:$0xf]
      %v622 = vld [vmem:[%s611 + $0x28] sm:$0xf]
      %v623 = vld [vmem:[%s611 + $0x2c] sm:$0xf]
      %v624 = vld [vmem:[%s611 + $0x30] sm:$0xf]
      %v625 = vld [vmem:[%s611 + $0x34] sm:$0xf]
      %v626 = vld [vmem:[%s611 + $0x38] sm:$0xf]
      %v627 = vld [vmem:[%s611 + $0x3c] sm:$0xf]
      %v630 = vunpack.c.l.b16 %v609
      %v631 = vunpack.c.l.b16 %v610
      %v632 = vpack.c.b16 %v265, %v630
      %v633 = vpack.c.b16 %v631, %v266
      %vm634 = vcmask 1044480
      %v635 = vrot.slane %v632, 3
      %v636 = vrot.slane %v633, 3
      %v637 = vsel %vm634, %v635, %v636
      %v656 = vunpack.c.l.b16 %v612
      %v657 = vunpack.c.l.b16 %v613
      %v658 = vunpack.c.l.b16 %v614
      %v659 = vunpack.c.l.b16 %v615
      %v660 = vunpack.c.l.b16 %v616
      %v661 = vunpack.c.l.b16 %v617
      %v662 = vunpack.c.l.b16 %v618
      %v663 = vunpack.c.l.b16 %v619
      %v664 = vunpack.c.l.b16 %v620
      %v665 = vunpack.c.l.b16 %v621
      %v666 = vunpack.c.l.b16 %v622
      %v667 = vunpack.c.l.b16 %v623
      %v668 = vunpack.c.l.b16 %v624
      %v669 = vunpack.c.l.b16 %v625
      %v670 = vunpack.c.l.b16 %v626
      %v671 = vunpack.c.l.b16 %v627
      %v672 = vpack.c.b16 %v657, %v656
      %v673 = vpack.c.b16 %v659, %v658
      %v674 = vpack.c.b16 %v661, %v660
      %v675 = vpack.c.b16 %v663, %v662
      %v676 = vpack.c.b16 %v665, %v664
      %v677 = vpack.c.b16 %v667, %v666
      %v678 = vpack.c.b16 %v669, %v668
      %v679 = vpack.c.b16 %v671, %v670
      %688 = vmatprep.subr.bf16.mxu0 0
      %689 = vmatpush1.bf16.msra.mxu0 %v672
      %690 = vmatprep.subr.bf16.mxu0 0
      %691 = vmatpush1.bf16.msra.mxu0 %v673
      %692 = vmatprep.subr.bf16.mxu0 0
      %693 = vmatpush1.bf16.msra.mxu0 %v674
      %694 = vmatprep.subr.bf16.mxu0 0
      %695 = vmatpush1.bf16.msra.mxu0 %v675
      %696 = vmatprep.subr.bf16.mxu0 0
      %697 = vmatpush1.bf16.msra.mxu0 %v676
      %698 = vmatprep.subr.bf16.mxu0 0
      %699 = vmatpush1.bf16.msra.mxu0 %v677
      %700 = vmatprep.subr.bf16.mxu0 0
      %701 = vmatpush1.bf16.msra.mxu0 %v678
      %702 = vmatprep.subr.bf16.mxu0 0
      %703 = vmatpush1.bf16.msra.mxu0 %v679
      %704 = vmatprep.subr.bf16.mxu0 0
      %705 = vmatpush1.bf16.msra.mxu0 0
      %706 = vmatprep.subr.bf16.mxu0 0
      %707 = vmatpush1.bf16.msra.mxu0 0
      %708 = vmatprep.subr.bf16.mxu0 0
      %709 = vmatpush1.bf16.msra.mxu0 0
      %710 = vmatprep.subr.bf16.mxu0 0
      %711 = vmatpush1.bf16.msra.mxu0 0
      %712 = vmatprep.subr.bf16.mxu0 0
      %713 = vmatpush1.bf16.msra.mxu0 0
      %714 = vmatprep.subr.bf16.mxu0 0
      %715 = vmatpush1.bf16.msra.mxu0 0
      %716 = vmatprep.subr.bf16.mxu0 0
      %717 = vmatpush1.bf16.msra.mxu0 0
      %718 = vmatprep.subr.bf16.mxu0 0
      %719 = vmatpush1.bf16.msra.mxu0 0
      %720 = vmatprep.mubr.bf16.mxu0 0
      %721 = vmatmul.mubr.bf16.gmra.mrb[0].mxu0 %v637
      %v722 = vpop.f32.mrb[0].mxu0
      %v723 = vadd.f32 0.0, %v722
      %v724 = vpop.f32.mrb[0].mxu0
      %v725 = vpop.f32.mrb[0].mxu0
      %v726 = vadd.f32 0.0, %v725
      %v727 = vpop.f32.mrb[0].mxu0
      %728 = vmatprep.mubr.bf16.mxu0 0
      %729 = vmatmul.mubr.bf16.gmra.mrb[0].mxu0 %v636
      %v730 = vpop.f32.mrb[0].mxu0
      %v731 = vadd.f32 0.0, %v730
      %v732 = vpop.f32.mrb[0].mxu0
      %v733 = vpop.f32.mrb[0].mxu0
      %v734 = vpop.f32.mrb[0].mxu0
      %735 = vdwg.mxu0
      %v736 = vadd.f32 %v606, %v723
      %v737 = vadd.f32 %v607, %v726
      %v738 = vadd.f32 %v608, %v731
      %v739 = vld [vmem:[%s206 + $0xc] sm:$0xf]
      %s740 = scalar_lea.vmem %s210, 256
      %v741 = vld [vmem:[%s740] sm:$0xf]
      %v742 = vld [vmem:[%s740 + $0x4] sm:$0xf]
      %v743 = vld [vmem:[%s740 + $0x8] sm:$0xf]
      %v744 = vld [vmem:[%s740 + $0xc] sm:$0xf]
      %v745 = vld [vmem:[%s740 + $0x10] sm:$0xf]
      %v746 = vld [vmem:[%s740 + $0x14] sm:$0xf]
      %v747 = vld [vmem:[%s740 + $0x18] sm:$0xf]
      %v748 = vld [vmem:[%s740 + $0x1c] sm:$0xf]
      %v749 = vld [vmem:[%s740 + $0x20] sm:$0xf]
      %v750 = vld [vmem:[%s740 + $0x24] sm:$0xf]
      %v751 = vld [vmem:[%s740 + $0x28] sm:$0xf]
      %v752 = vld [vmem:[%s740 + $0x2c] sm:$0xf]
      %v753 = vld [vmem:[%s740 + $0x30] sm:$0xf]
      %v754 = vld [vmem:[%s740 + $0x34] sm:$0xf]
      %v755 = vld [vmem:[%s740 + $0x38] sm:$0xf]
      %v756 = vld [vmem:[%s740 + $0x3c] sm:$0xf]
      %v758 = vunpack.c.l.b16 %v739
      %v759 = vpack.c.b16 %v758, %v266
      %vm760 = vsmask.f32 4352
      %v762 = vshrl.u32 %v632, 16
      %v764 = vrot.slane %v762, 3
      %v765 = vshll.u32 %v632, 16
      %v767 = vrot.slane %v765, 4
      %v768 = vor.u32 %v764, %v767
      %v770 = vshrl.u32 %v759, 16
      %v772 = vrot.slane %v770, 3
      %v773 = vshll.u32 %v759, 16
      %v775 = vrot.slane %v773, 4
      %v776 = vor.u32 %v772, %v775
      %v777 = vsel %vm760, %v768, %v776
      %v796 = vunpack.c.l.b16 %v741
      %v797 = vunpack.c.l.b16 %v742
      %v798 = vunpack.c.l.b16 %v743
      %v799 = vunpack.c.l.b16 %v744
      %v800 = vunpack.c.l.b16 %v745
      %v801 = vunpack.c.l.b16 %v746
      %v802 = vunpack.c.l.b16 %v747
      %v803 = vunpack.c.l.b16 %v748
      %v804 = vunpack.c.l.b16 %v749
      %v805 = vunpack.c.l.b16 %v750
      %v806 = vunpack.c.l.b16 %v751
      %v807 = vunpack.c.l.b16 %v752
      %v808 = vunpack.c.l.b16 %v753
      %v809 = vunpack.c.l.b16 %v754
      %v810 = vunpack.c.l.b16 %v755
      %v811 = vunpack.c.l.b16 %v756
      %v812 = vpack.c.b16 %v797, %v796
      %v813 = vpack.c.b16 %v799, %v798
      %v814 = vpack.c.b16 %v801, %v800
      %v815 = vpack.c.b16 %v803, %v802
      %v816 = vpack.c.b16 %v805, %v804
      %v817 = vpack.c.b16 %v807, %v806
      %v818 = vpack.c.b16 %v809, %v808
      %v819 = vpack.c.b16 %v811, %v810
      %828 = vmatprep.subr.bf16.mxu0 0
      %829 = vmatpush1.bf16.msra.mxu0 %v812
      %830 = vmatprep.subr.bf16.mxu0 0
      %831 = vmatpush1.bf16.msra.mxu0 %v813
      %832 = vmatprep.subr.bf16.mxu0 0
      %833 = vmatpush1.bf16.msra.mxu0 %v814
      %834 = vmatprep.subr.bf16.mxu0 0
      %835 = vmatpush1.bf16.msra.mxu0 %v815
      %836 = vmatprep.subr.bf16.mxu0 0
      %837 = vmatpush1.bf16.msra.mxu0 %v816
      %838 = vmatprep.subr.bf16.mxu0 0
      %839 = vmatpush1.bf16.msra.mxu0 %v817
      %840 = vmatprep.subr.bf16.mxu0 0
      %841 = vmatpush1.bf16.msra.mxu0 %v818
      %842 = vmatprep.subr.bf16.mxu0 0
      %843 = vmatpush1.bf16.msra.mxu0 %v819
      %844 = vmatprep.subr.bf16.mxu0 0
      %845 = vmatpush1.bf16.msra.mxu0 0
      %846 = vmatprep.subr.bf16.mxu0 0
      %847 = vmatpush1.bf16.msra.mxu0 0
      %848 = vmatprep.subr.bf16.mxu0 0
      %849 = vmatpush1.bf16.msra.mxu0 0
      %850 = vmatprep.subr.bf16.mxu0 0
      %851 = vmatpush1.bf16.msra.mxu0 0
      %852 = vmatprep.subr.bf16.mxu0 0
      %853 = vmatpush1.bf16.msra.mxu0 0
      %854 = vmatprep.subr.bf16.mxu0 0
      %855 = vmatpush1.bf16.msra.mxu0 0
      %856 = vmatprep.subr.bf16.mxu0 0
      %857 = vmatpush1.bf16.msra.mxu0 0
      %858 = vmatprep.subr.bf16.mxu0 0
      %859 = vmatpush1.bf16.msra.mxu0 0
      %860 = vmatprep.mubr.bf16.mxu0 0
      %861 = vmatmul.mubr.bf16.gmra.mrb[0].mxu0 %v777
      %v862 = vpop.f32.mrb[0].mxu0
      %v863 = vadd.f32 0.0, %v862
      %v864 = vpop.f32.mrb[0].mxu0
      %v865 = vpop.f32.mrb[0].mxu0
      %v866 = vadd.f32 0.0, %v865
      %v867 = vpop.f32.mrb[0].mxu0
      %868 = vmatprep.mubr.bf16.mxu0 0
      %869 = vmatmul.mubr.bf16.gmra.mrb[0].mxu0 %v776
      %v870 = vpop.f32.mrb[0].mxu0
      %v871 = vadd.f32 0.0, %v870
      %v872 = vpop.f32.mrb[0].mxu0
      %v873 = vpop.f32.mrb[0].mxu0
      %v874 = vpop.f32.mrb[0].mxu0
      %875 = vdwg.mxu0
      %v876 = vadd.f32 %v736, %v863
      %v877 = vadd.f32 %v737, %v866
      %v878 = vadd.f32 %v738, %v871
      %s879 = scalar_lea.vmem %s210, 320
      %v880 = vld [vmem:[%s879] sm:$0xf]
      %v881 = vld [vmem:[%s879 + $0x4] sm:$0xf]
      %v882 = vld [vmem:[%s879 + $0x8] sm:$0xf]
      %v883 = vld [vmem:[%s879 + $0xc] sm:$0xf]
      %v884 = vld [vmem:[%s879 + $0x10] sm:$0xf]
      %v885 = vld [vmem:[%s879 + $0x14] sm:$0xf]
      %v886 = vld [vmem:[%s879 + $0x18] sm:$0xf]
      %v887 = vld [vmem:[%s879 + $0x1c] sm:$0xf]
      %v888 = vld [vmem:[%s879 + $0x20] sm:$0xf]
      %v889 = vld [vmem:[%s879 + $0x24] sm:$0xf]
      %v890 = vld [vmem:[%s879 + $0x28] sm:$0xf]
      %v891 = vld [vmem:[%s879 + $0x2c] sm:$0xf]
      %v892 = vld [vmem:[%s879 + $0x30] sm:$0xf]
      %v893 = vld [vmem:[%s879 + $0x34] sm:$0xf]
      %v894 = vld [vmem:[%s879 + $0x38] sm:$0xf]
      %v895 = vld [vmem:[%s879 + $0x3c] sm:$0xf]
      %v896 = vpack.c.b16 %v266, %v265
      %v897 = vpack.c.b16 %v758, %v758
      %v916 = vunpack.c.l.b16 %v880
      %v917 = vunpack.c.l.b16 %v881
      %v918 = vunpack.c.l.b16 %v882
      %v919 = vunpack.c.l.b16 %v883
      %v920 = vunpack.c.l.b16 %v884
      %v921 = vunpack.c.l.b16 %v885
      %v922 = vunpack.c.l.b16 %v886
      %v923 = vunpack.c.l.b16 %v887
      %v924 = vunpack.c.l.b16 %v888
      %v925 = vunpack.c.l.b16 %v889
      %v926 = vunpack.c.l.b16 %v890
      %v927 = vunpack.c.l.b16 %v891
      %v928 = vunpack.c.l.b16 %v892
      %v929 = vunpack.c.l.b16 %v893
      %v930 = vunpack.c.l.b16 %v894
      %v931 = vunpack.c.l.b16 %v895
      %v932 = vpack.c.b16 %v917, %v916
      %v933 = vpack.c.b16 %v919, %v918
      %v934 = vpack.c.b16 %v921, %v920
      %v935 = vpack.c.b16 %v923, %v922
      %v936 = vpack.c.b16 %v925, %v924
      %v937 = vpack.c.b16 %v927, %v926
      %v938 = vpack.c.b16 %v929, %v928
      %v939 = vpack.c.b16 %v931, %v930
      %948 = vmatprep.subr.bf16.mxu0 0
      %949 = vmatpush1.bf16.msra.mxu0 %v932
      %950 = vmatprep.subr.bf16.mxu0 0
      %951 = vmatpush1.bf16.msra.mxu0 %v933
      %952 = vmatprep.subr.bf16.mxu0 0
      %953 = vmatpush1.bf16.msra.mxu0 %v934
      %954 = vmatprep.subr.bf16.mxu0 0
      %955 = vmatpush1.bf16.msra.mxu0 %v935
      %956 = vmatprep.subr.bf16.mxu0 0
      %957 = vmatpush1.bf16.msra.mxu0 %v936
      %958 = vmatprep.subr.bf16.mxu0 0
      %959 = vmatpush1.bf16.msra.mxu0 %v937
      %960 = vmatprep.subr.bf16.mxu0 0
      %961 = vmatpush1.bf16.msra.mxu0 %v938
      %962 = vmatprep.subr.bf16.mxu0 0
      %963 = vmatpush1.bf16.msra.mxu0 %v939
      %964 = vmatprep.subr.bf16.mxu0 0
      %965 = vmatpush1.bf16.msra.mxu0 0
      %966 = vmatprep.subr.bf16.mxu0 0
      %967 = vmatpush1.bf16.msra.mxu0 0
      %968 = vmatprep.subr.bf16.mxu0 0
      %969 = vmatpush1.bf16.msra.mxu0 0
      %970 = vmatprep.subr.bf16.mxu0 0
      %971 = vmatpush1.bf16.msra.mxu0 0
      %972 = vmatprep.subr.bf16.mxu0 0
      %973 = vmatpush1.bf16.msra.mxu0 0
      %974 = vmatprep.subr.bf16.mxu0 0
      %975 = vmatpush1.bf16.msra.mxu0 0
      %976 = vmatprep.subr.bf16.mxu0 0
      %977 = vmatpush1.bf16.msra.mxu0 0
      %978 = vmatprep.subr.bf16.mxu0 0
      %979 = vmatpush1.bf16.msra.mxu0 0
      %980 = vmatprep.mubr.bf16.mxu0 0
      %981 = vmatmul.mubr.bf16.gmra.mrb[0].mxu0 %v896
      %v982 = vpop.f32.mrb[0].mxu0
      %v983 = vadd.f32 0.0, %v982
      %v984 = vpop.f32.mrb[0].mxu0
      %v985 = vpop.f32.mrb[0].mxu0
      %v986 = vadd.f32 0.0, %v985
      %v987 = vpop.f32.mrb[0].mxu0
      %988 = vmatprep.mubr.bf16.mxu0 0
      %989 = vmatmul.mubr.bf16.gmra.mrb[0].mxu0 %v897
      %v990 = vpop.f32.mrb[0].mxu0
      %v991 = vadd.f32 0.0, %v990
      %v992 = vpop.f32.mrb[0].mxu0
      %v993 = vpop.f32.mrb[0].mxu0
      %v994 = vpop.f32.mrb[0].mxu0
      %995 = vdwg.mxu0
      %v996 = vadd.f32 %v876, %v983
      %v997 = vadd.f32 %v877, %v986
      %v998 = vadd.f32 %v878, %v991
      %v999 = vld [vmem:[%s206 + $0x4] sm:$0xc]
      %v1000 = vld [vmem:[%s206 + $0x8] sm:$0xf]
      %v1001 = vld [vmem:[%s206 + $0xc] sm:$0xf]
      %v1002 = vld [vmem:[%s206 + $0x10] sm:$0x3]
      %s1003 = scalar_lea.vmem %s210, 384
      %v1004 = vld [vmem:[%s1003] sm:$0xf]
      %v1005 = vld [vmem:[%s1003 + $0x4] sm:$0xf]
      %v1006 = vld [vmem:[%s1003 + $0x8] sm:$0xf]
      %v1007 = vld [vmem:[%s1003 + $0xc] sm:$0xf]
      %v1008 = vld [vmem:[%s1003 + $0x10] sm:$0xf]
      %v1009 = vld [vmem:[%s1003 + $0x14] sm:$0xf]
      %v1010 = vld [vmem:[%s1003 + $0x18] sm:$0xf]
      %v1011 = vld [vmem:[%s1003 + $0x1c] sm:$0xf]
      %v1012 = vld [vmem:[%s1003 + $0x20] sm:$0xf]
      %v1013 = vld [vmem:[%s1003 + $0x24] sm:$0xf]
      %v1014 = vld [vmem:[%s1003 + $0x28] sm:$0xf]
      %v1015 = vld [vmem:[%s1003 + $0x2c] sm:$0xf]
      %v1016 = vld [vmem:[%s1003 + $0x30] sm:$0xf]
      %v1017 = vld [vmem:[%s1003 + $0x34] sm:$0xf]
      %v1018 = vld [vmem:[%s1003 + $0x38] sm:$0xf]
      %v1019 = vld [vmem:[%s1003 + $0x3c] sm:$0xf]
      %v1024 = vunpack.c.l.b16 %v999
      %v1025 = vunpack.c.l.b16 %v1000
      %v1026 = vunpack.c.l.b16 %v1001
      %v1027 = vunpack.c.l.b16 %v1002
      %v1028 = vpack.c.b16 %v1025, %v1024
      %v1029 = vpack.c.b16 %v1027, %v1026
      %vm1030 = vcmask 1045504
      %v1031 = vrot.slane %v1028, 2
      %v1032 = vrot.slane %v1029, 2
      %v1033 = vsel %vm1030, %v1031, %v1032
      %v1052 = vunpack.c.l.b16 %v1004
      %v1053 = vunpack.c.l.b16 %v1005
      %v1054 = vunpack.c.l.b16 %v1006
      %v1055 = vunpack.c.l.b16 %v1007
      %v1056 = vunpack.c.l.b16 %v1008
      %v1057 = vunpack.c.l.b16 %v1009
      %v1058 = vunpack.c.l.b16 %v1010
      %v1059 = vunpack.c.l.b16 %v1011
      %v1060 = vunpack.c.l.b16 %v1012
      %v1061 = vunpack.c.l.b16 %v1013
      %v1062 = vunpack.c.l.b16 %v1014
      %v1063 = vunpack.c.l.b16 %v1015
      %v1064 = vunpack.c.l.b16 %v1016
      %v1065 = vunpack.c.l.b16 %v1017
      %v1066 = vunpack.c.l.b16 %v1018
      %v1067 = vunpack.c.l.b16 %v1019
      %v1068 = vpack.c.b16 %v1053, %v1052
      %v1069 = vpack.c.b16 %v1055, %v1054
      %v1070 = vpack.c.b16 %v1057, %v1056
      %v1071 = vpack.c.b16 %v1059, %v1058
      %v1072 = vpack.c.b16 %v1061, %v1060
      %v1073 = vpack.c.b16 %v1063, %v1062
      %v1074 = vpack.c.b16 %v1065, %v1064
      %v1075 = vpack.c.b16 %v1067, %v1066
      %1084 = vmatprep.subr.bf16.mxu0 0
      %1085 = vmatpush1.bf16.msra.mxu0 %v1068
      %1086 = vmatprep.subr.bf16.mxu0 0
      %1087 = vmatpush1.bf16.msra.mxu0 %v1069
      %1088 = vmatprep.subr.bf16.mxu0 0
      %1089 = vmatpush1.bf16.msra.mxu0 %v1070
      %1090 = vmatprep.subr.bf16.mxu0 0
      %1091 = vmatpush1.bf16.msra.mxu0 %v1071
      %1092 = vmatprep.subr.bf16.mxu0 0
      %1093 = vmatpush1.bf16.msra.mxu0 %v1072
      %1094 = vmatprep.subr.bf16.mxu0 0
      %1095 = vmatpush1.bf16.msra.mxu0 %v1073
      %1096 = vmatprep.subr.bf16.mxu0 0
      %1097 = vmatpush1.bf16.msra.mxu0 %v1074
      %1098 = vmatprep.subr.bf16.mxu0 0
      %1099 = vmatpush1.bf16.msra.mxu0 %v1075
      %1100 = vmatprep.subr.bf16.mxu0 0
      %1101 = vmatpush1.bf16.msra.mxu0 0
      %1102 = vmatprep.subr.bf16.mxu0 0
      %1103 = vmatpush1.bf16.msra.mxu0 0
      %1104 = vmatprep.subr.bf16.mxu0 0
      %1105 = vmatpush1.bf16.msra.mxu0 0
      %1106 = vmatprep.subr.bf16.mxu0 0
      %1107 = vmatpush1.bf16.msra.mxu0 0
      %1108 = vmatprep.subr.bf16.mxu0 0
      %1109 = vmatpush1.bf16.msra.mxu0 0
      %1110 = vmatprep.subr.bf16.mxu0 0
      %1111 = vmatpush1.bf16.msra.mxu0 0
      %1112 = vmatprep.subr.bf16.mxu0 0
      %1113 = vmatpush1.bf16.msra.mxu0 0
      %1114 = vmatprep.subr.bf16.mxu0 0
      %1115 = vmatpush1.bf16.msra.mxu0 0
      %1116 = vmatprep.mubr.bf16.mxu0 0
      %1117 = vmatmul.mubr.bf16.gmra.mrb[0].mxu0 %v1033
      %v1118 = vpop.f32.mrb[0].mxu0
      %v1119 = vadd.f32 0.0, %v1118
      %v1120 = vpop.f32.mrb[0].mxu0
      %v1121 = vpop.f32.mrb[0].mxu0
      %v1122 = vadd.f32 0.0, %v1121
      %v1123 = vpop.f32.mrb[0].mxu0
      %1124 = vmatprep.mubr.bf16.mxu0 0
      %1125 = vmatmul.mubr.bf16.gmra.mrb[0].mxu0 %v1032
      %v1126 = vpop.f32.mrb[0].mxu0
      %v1127 = vadd.f32 0.0, %v1126
      %v1128 = vpop.f32.mrb[0].mxu0
      %v1129 = vpop.f32.mrb[0].mxu0
      %v1130 = vpop.f32.mrb[0].mxu0
      %1131 = vdwg.mxu0
      %v1132 = vadd.f32 %v996, %v1119
      %v1133 = vadd.f32 %v997, %v1122
      %v1134 = vadd.f32 %v998, %v1127
      %v1135 = vld [vmem:[%s206 + $0x10] sm:$0x7]
      %s1136 = scalar_lea.vmem %s210, 448
      %v1137 = vld [vmem:[%s1136] sm:$0xf]
      %v1138 = vld [vmem:[%s1136 + $0x4] sm:$0xf]
      %v1139 = vld [vmem:[%s1136 + $0x8] sm:$0xf]
      %v1140 = vld [vmem:[%s1136 + $0xc] sm:$0xf]
      %v1141 = vld [vmem:[%s1136 + $0x10] sm:$0xf]
      %v1142 = vld [vmem:[%s1136 + $0x14] sm:$0xf]
      %v1143 = vld [vmem:[%s1136 + $0x18] sm:$0xf]
      %v1144 = vld [vmem:[%s1136 + $0x1c] sm:$0xf]
      %v1145 = vld [vmem:[%s1136 + $0x20] sm:$0xf]
      %v1146 = vld [vmem:[%s1136 + $0x24] sm:$0xf]
      %v1147 = vld [vmem:[%s1136 + $0x28] sm:$0xf]
      %v1148 = vld [vmem:[%s1136 + $0x2c] sm:$0xf]
      %v1149 = vld [vmem:[%s1136 + $0x30] sm:$0xf]
      %v1150 = vld [vmem:[%s1136 + $0x34] sm:$0xf]
      %v1151 = vld [vmem:[%s1136 + $0x38] sm:$0xf]
      %v1152 = vld [vmem:[%s1136 + $0x3c] sm:$0xf]
      %v1154 = vunpack.c.l.b16 %v1135
      %v1155 = vpack.c.b16 %v1154, %v1026
      %vm1156 = vsmask.f32 5376
      %v1158 = vshrl.u32 %v1028, 16
      %v1160 = vrot.slane %v1158, 2
      %v1161 = vshll.u32 %v1028, 16
      %v1163 = vrot.slane %v1161, 3
      %v1164 = vor.u32 %v1160, %v1163
      %v1166 = vshrl.u32 %v1155, 16
      %v1168 = vrot.slane %v1166, 2
      %v1169 = vshll.u32 %v1155, 16
      %v1171 = vrot.slane %v1169, 3
      %v1172 = vor.u32 %v1168, %v1171
      %v1173 = vsel %vm1156, %v1164, %v1172
      %v1192 = vunpack.c.l.b16 %v1137
      %v1193 = vunpack.c.l.b16 %v1138
      %v1194 = vunpack.c.l.b16 %v1139
      %v1195 = vunpack.c.l.b16 %v1140
      %v1196 = vunpack.c.l.b16 %v1141
      %v1197 = vunpack.c.l.b16 %v1142
      %v1198 = vunpack.c.l.b16 %v1143
      %v1199 = vunpack.c.l.b16 %v1144
      %v1200 = vunpack.c.l.b16 %v1145
      %v1201 = vunpack.c.l.b16 %v1146
      %v1202 = vunpack.c.l.b16 %v1147
      %v1203 = vunpack.c.l.b16 %v1148
      %v1204 = vunpack.c.l.b16 %v1149
      %v1205 = vunpack.c.l.b16 %v1150
      %v1206 = vunpack.c.l.b16 %v1151
      %v1207 = vunpack.c.l.b16 %v1152
      %v1208 = vpack.c.b16 %v1193, %v1192
      %v1209 = vpack.c.b16 %v1195, %v1194
      %v1210 = vpack.c.b16 %v1197, %v1196
      %v1211 = vpack.c.b16 %v1199, %v1198
      %v1212 = vpack.c.b16 %v1201, %v1200
      %v1213 = vpack.c.b16 %v1203, %v1202
      %v1214 = vpack.c.b16 %v1205, %v1204
      %v1215 = vpack.c.b16 %v1207, %v1206
      %1224 = vmatprep.subr.bf16.mxu0 0
      %1225 = vmatpush1.bf16.msra.mxu0 %v1208
      %1226 = vmatprep.subr.bf16.mxu0 0
      %1227 = vmatpush1.bf16.msra.mxu0 %v1209
      %1228 = vmatprep.subr.bf16.mxu0 0
      %1229 = vmatpush1.bf16.msra.mxu0 %v1210
      %1230 = vmatprep.subr.bf16.mxu0 0
      %1231 = vmatpush1.bf16.msra.mxu0 %v1211
      %1232 = vmatprep.subr.bf16.mxu0 0
      %1233 = vmatpush1.bf16.msra.mxu0 %v1212
      %1234 = vmatprep.subr.bf16.mxu0 0
      %1235 = vmatpush1.bf16.msra.mxu0 %v1213
      %1236 = vmatprep.subr.bf16.mxu0 0
      %1237 = vmatpush1.bf16.msra.mxu0 %v1214
      %1238 = vmatprep.subr.bf16.mxu0 0
      %1239 = vmatpush1.bf16.msra.mxu0 %v1215
      %1240 = vmatprep.subr.bf16.mxu0 0
      %1241 = vmatpush1.bf16.msra.mxu0 0
      %1242 = vmatprep.subr.bf16.mxu0 0
      %1243 = vmatpush1.bf16.msra.mxu0 0
      %1244 = vmatprep.subr.bf16.mxu0 0
      %1245 = vmatpush1.bf16.msra.mxu0 0
      %1246 = vmatprep.subr.bf16.mxu0 0
      %1247 = vmatpush1.bf16.msra.mxu0 0
      %1248 = vmatprep.subr.bf16.mxu0 0
      %1249 = vmatpush1.bf16.msra.mxu0 0
      %1250 = vmatprep.subr.bf16.mxu0 0
      %1251 = vmatpush1.bf16.msra.mxu0 0
      %1252 = vmatprep.subr.bf16.mxu0 0
      %1253 = vmatpush1.bf16.msra.mxu0 0
      %1254 = vmatprep.subr.bf16.mxu0 0
      %1255 = vmatpush1.bf16.msra.mxu0 0
      %1256 = vmatprep.mubr.bf16.mxu0 0
      %1257 = vmatmul.mubr.bf16.gmra.mrb[0].mxu0 %v1173
      %v1258 = vpop.f32.mrb[0].mxu0
      %v1259 = vadd.f32 0.0, %v1258
      %v1260 = vpop.f32.mrb[0].mxu0
      %v1261 = vpop.f32.mrb[0].mxu0
      %v1262 = vadd.f32 0.0, %v1261
      %v1263 = vpop.f32.mrb[0].mxu0
      %1264 = vmatprep.mubr.bf16.mxu0 0
      %1265 = vmatmul.mubr.bf16.gmra.mrb[0].mxu0 %v1172
      %v1266 = vpop.f32.mrb[0].mxu0
      %v1267 = vadd.f32 0.0, %v1266
      %v1268 = vpop.f32.mrb[0].mxu0
      %v1269 = vpop.f32.mrb[0].mxu0
      %v1270 = vpop.f32.mrb[0].mxu0
      %1271 = vdwg.mxu0
      %v1272 = vadd.f32 %v1132, %v1259
      %v1273 = vadd.f32 %v1133, %v1262
      %v1274 = vadd.f32 %v1134, %v1267
      %v1275 = vld [vmem:[%s206 + $0x4] sm:$0x8]
      %s1276 = scalar_lea.vmem %s210, 512
      %v1277 = vld [vmem:[%s1276] sm:$0xf]
      %v1278 = vld [vmem:[%s1276 + $0x4] sm:$0xf]
      %v1279 = vld [vmem:[%s1276 + $0x8] sm:$0xf]
      %v1280 = vld [vmem:[%s1276 + $0xc] sm:$0xf]
      %v1281 = vld [vmem:[%s1276 + $0x10] sm:$0xf]
      %v1282 = vld [vmem:[%s1276 + $0x14] sm:$0xf]
      %v1283 = vld [vmem:[%s1276 + $0x18] sm:$0xf]
      %v1284 = vld [vmem:[%s1276 + $0x1c] sm:$0xf]
      %v1285 = vld [vmem:[%s1276 + $0x20] sm:$0xf]
      %v1286 = vld [vmem:[%s1276 + $0x24] sm:$0xf]
      %v1287 = vld [vmem:[%s1276 + $0x28] sm:$0xf]
      %v1288 = vld [vmem:[%s1276 + $0x2c] sm:$0xf]
      %v1289 = vld [vmem:[%s1276 + $0x30] sm:$0xf]
      %v1290 = vld [vmem:[%s1276 + $0x34] sm:$0xf]
      %v1291 = vld [vmem:[%s1276 + $0x38] sm:$0xf]
      %v1292 = vld [vmem:[%s1276 + $0x3c] sm:$0xf]
      %v1294 = vunpack.c.l.b16 %v1275
      %v1295 = vpack.c.b16 %v1025, %v1294
      %v1296 = vrot.slane %v1295, 3
      %v1297 = vrot.slane %v1155, 3
      %v1298 = vsel %vm634, %v1296, %v1297
      %v1317 = vunpack.c.l.b16 %v1277
      %v1318 = vunpack.c.l.b16 %v1278
      %v1319 = vunpack.c.l.b16 %v1279
      %v1320 = vunpack.c.l.b16 %v1280
      %v1321 = vunpack.c.l.b16 %v1281
      %v1322 = vunpack.c.l.b16 %v1282
      %v1323 = vunpack.c.l.b16 %v1283
      %v1324 = vunpack.c.l.b16 %v1284
      %v1325 = vunpack.c.l.b16 %v1285
      %v1326 = vunpack.c.l.b16 %v1286
      %v1327 = vunpack.c.l.b16 %v1287
      %v1328 = vunpack.c.l.b16 %v1288
      %v1329 = vunpack.c.l.b16 %v1289
      %v1330 = vunpack.c.l.b16 %v1290
      %v1331 = vunpack.c.l.b16 %v1291
      %v1332 = vunpack.c.l.b16 %v1292
      %v1333 = vpack.c.b16 %v1318, %v1317
      %v1334 = vpack.c.b16 %v1320, %v1319
      %v1335 = vpack.c.b16 %v1322, %v1321
      %v1336 = vpack.c.b16 %v1324, %v1323
      %v1337 = vpack.c.b16 %v1326, %v1325
      %v1338 = vpack.c.b16 %v1328, %v1327
      %v1339 = vpack.c.b16 %v1330, %v1329
      %v1340 = vpack.c.b16 %v1332, %v1331
      %1349 = vmatprep.subr.bf16.mxu0 0
      %1350 = vmatpush1.bf16.msra.mxu0 %v1333
      %1351 = vmatprep.subr.bf16.mxu0 0
      %1352 = vmatpush1.bf16.msra.mxu0 %v1334
      %1353 = vmatprep.subr.bf16.mxu0 0
      %1354 = vmatpush1.bf16.msra.mxu0 %v1335
      %1355 = vmatprep.subr.bf16.mxu0 0
      %1356 = vmatpush1.bf16.msra.mxu0 %v1336
      %1357 = vmatprep.subr.bf16.mxu0 0
      %1358 = vmatpush1.bf16.msra.mxu0 %v1337
      %1359 = vmatprep.subr.bf16.mxu0 0
      %1360 = vmatpush1.bf16.msra.mxu0 %v1338
      %1361 = vmatprep.subr.bf16.mxu0 0
      %1362 = vmatpush1.bf16.msra.mxu0 %v1339
      %1363 = vmatprep.subr.bf16.mxu0 0
      %1364 = vmatpush1.bf16.msra.mxu0 %v1340
      %1365 = vmatprep.subr.bf16.mxu0 0
      %1366 = vmatpush1.bf16.msra.mxu0 0
      %1367 = vmatprep.subr.bf16.mxu0 0
      %1368 = vmatpush1.bf16.msra.mxu0 0
      %1369 = vmatprep.subr.bf16.mxu0 0
      %1370 = vmatpush1.bf16.msra.mxu0 0
      %1371 = vmatprep.subr.bf16.mxu0 0
      %1372 = vmatpush1.bf16.msra.mxu0 0
      %1373 = vmatprep.subr.bf16.mxu0 0
      %1374 = vmatpush1.bf16.msra.mxu0 0
      %1375 = vmatprep.subr.bf16.mxu0 0
      %1376 = vmatpush1.bf16.msra.mxu0 0
      %1377 = vmatprep.subr.bf16.mxu0 0
      %1378 = vmatpush1.bf16.msra.mxu0 0
      %1379 = vmatprep.subr.bf16.mxu0 0
      %1380 = vmatpush1.bf16.msra.mxu0 0
      %1381 = vmatprep.mubr.bf16.mxu0 0
      %1382 = vmatmul.mubr.bf16.gmra.mrb[0].mxu0 %v1298
      %v1383 = vpop.f32.mrb[0].mxu0
      %v1384 = vadd.f32 0.0, %v1383
      %v1385 = vpop.f32.mrb[0].mxu0
      %v1386 = vpop.f32.mrb[0].mxu0
      %v1387 = vadd.f32 0.0, %v1386
      %v1388 = vpop.f32.mrb[0].mxu0
      %1389 = vmatprep.mubr.bf16.mxu0 0
      %1390 = vmatmul.mubr.bf16.gmra.mrb[0].mxu0 %v1297
      %v1391 = vpop.f32.mrb[0].mxu0
      %v1392 = vadd.f32 0.0, %v1391
      %v1393 = vpop.f32.mrb[0].mxu0
      %v1394 = vpop.f32.mrb[0].mxu0
      %v1395 = vpop.f32.mrb[0].mxu0
      %1396 = vdwg.mxu0
      %v1397 = vadd.f32 %v1272, %v1384
      %v1398 = vadd.f32 %v1273, %v1387
      %v1399 = vadd.f32 %v1274, %v1392
      %v1400 = vld [vmem:[%s213] sm:$0x1]
      %v1402 = vlaneseq
      %v1403 = vshrl.u32 %v1402, 7
      %v1404 = vsub.s32 0, %v1403
      %v1405 = vrot.slane %v1400, %v1404
      %v1407 = vadd.f32 %v1397, %v1405
      %v1408 = vadd.f32 %v1398, %v1405
      %v1409 = vadd.f32 %v1399, %v1405
      %v1410 = vmax.f32 %v1407, 0.0
      %v1411 = vmax.f32 %v1408, 0.0
      %v1412 = vmax.f32 %v1409, 0.0
      %v1413 = vpack.c.bf16 %v1411, %v1410
      %v1414 = vpack.c.bf16 %v1412, %v1412
      %v1417 = vunpack.c.l.b16 %v1413
      %v1418 = vunpack.c.h.b16 %v1413
      %v1419 = vunpack.c.l.b16 %v1414
      %v1420 = vpack.c.b16 %v1417, %v1417
      %v1421 = vpack.c.b16 %v1418, %v1418
      %v1422 = vpack.c.b16 %v1419, %v1419
      %1426 = vst [vmem:[%s221] sm:$0xf] %v1420
      %1427 = vst [vmem:[%s221 + $0x4] sm:$0xf] %v1421
      %1428 = vst [vmem:[%s221 + $0x8] sm:$0xf] %v1422
      %p1429 = scmp.lt.s32.totalorder %s18, 1
      %s1430 = scalar_select %p1429, %s18, 1
      %p1431 = scmp.lt.s32.totalorder %s19, 0
      %s1432 = scalar_select %p1431, %s19, 0
      %s1433 = smul.addr %s1430, 3
      %s1434 = sadd.s32 %s1432, %s1433
      %s1435 = smul.addr %s1434, 4
      %s1436 = scalar_lea.vmem %s3, %s1435
      // Predicated region
      $region33: #{blocks_forward.12} parent=31 // pred_check
        %p1437 = pneg %p124
      $region34: #{blocks_forward.12} parent=31 // pred_check_branch
        %1439 = sbr.rel (%p1437) target = $region36
      $region35: #{blocks_forward.12} parent=31 // pred_region
        _
      $region36: #{blocks_forward.12} parent=31 // pred_fallthru
        _
    $region32: #{blocks_forward.12} parent=5 // pred_fallthru
      _
    %p1440 = scmp.le.s32.totalorder 2, %s9
    // Predicated region
    $region37: #{blocks_forward.12} parent=5 // pred_check
      %p1441 = pneg %p1440
    $region38: #{blocks_forward.12} parent=5 // pred_check_branch
      %1443 = sbr.rel (%p1441) target = $region40
    $region39: #{blocks_forward.12} parent=5 // pred_region
      %s1444 = ssub.s32 %s9, 2
      // Predicated region
      $region41: #{blocks_forward.12} parent=39 // pred_check
        %p1445 = pneg %p130
      $region42: #{blocks_forward.12} parent=39 // pred_check_branch
        %1447 = sbr.rel (%p1445) target = $region44
      $region43: #{blocks_forward.12} parent=39 // pred_region
        %p1448 = scmp.lt.s32.totalorder %s20, 1
        %s1449 = scalar_select %p1448, %s20, 1
        %p1450 = scmp.lt.s32.totalorder %s21, 0
        %s1451 = scalar_select %p1450, %s21, 0
        %s1452 = smul.addr %s1449, 3
        %s1453 = sadd.s32 %s1451, %s1452
        %s1454 = smul.addr %s1453, 4
        %s1455 = scalar_lea.vmem %s3, %s1454
      $region44: #{blocks_forward.12} parent=39 // pred_fallthru
        _
    $region40: #{blocks_forward.12} parent=5 // pred_fallthru
      _
  $region6: #{blocks_forward.12} parent=0 // loop_footer
    %s13 = sadd.s32 1, %s9
  $region7: #{blocks_forward.12} parent=0 // loop_footer_branch
    %8 = sbr.rel target = $region3
  $region8: #{blocks_forward.12} parent=0 // loop_exit
    _

</llo_original>
